<compile_context>
chip_gen: v7x
topology: tpu7x:2x2x1
jax: 0.10.0
libtpu: 0.0.40
codegen_flags: <defaults>
</compile_context>

<pallas_src>
import math

import jax
import jax.numpy as jnp
import numpy as np
from jax.experimental import pallas as pl

HIDDEN = 32           # hidden
HEADS = 4             # attn_heads
DH = HIDDEN // HEADS  # per-head dim
FF = 64               # feed_forward_hidden
EPS = 1e-6
NEG_INF = -1e9


# --------------------------- in-kernel helpers --------------------------------
def _split_heads(t, seq):
    """(B*seq, H) -> (HEADS*B, seq, DH); folded batch dim is head-major (n = h*B + b)."""
    b = t.shape[0] // seq
    th = jnp.stack([t[:, h * DH:(h + 1) * DH] for h in range(HEADS)], axis=0)  # (HEADS, B*seq, DH)
    return th.reshape(HEADS * b, seq, DH)


def _merge_heads(ctx, n_rows):
    """(HEADS*B, seq, DH) -> (B*seq, H) with columns ordered [head, dim]."""
    c = ctx.reshape(HEADS, n_rows, DH)
    return jnp.concatenate([c[h] for h in range(HEADS)], axis=-1)


def _layer_norm(h, g, b):
    mu = jnp.mean(h, axis=-1, keepdims=True)
    var = jnp.mean((h - mu) ** 2, axis=-1, keepdims=True)
    return (h - mu) * jax.lax.rsqrt(var + EPS) * g + b


def _attention(q, k, v, bias, wo, bo, seq_q, seq_k):
    """q: (B*seq_q, H); k, v: (B*seq_k, H); bias: (B, seq_q, seq_k) additive (0 / -1e9)."""
    qh = _split_heads(q * (1.0 / math.sqrt(DH)), seq_q)     # (HEADS*B, seq_q, DH)
    kh = _split_heads(k, seq_k)
    vh = _split_heads(v, seq_k)
    # One batched contraction over all heads & batches.
    sc = jnp.einsum('nqd,nkd->nqk', qh, kh, preferred_element_type=jnp.float32)
    # Mask applied once for all heads (replicated along the leading head dim).
    sc = sc + jnp.concatenate([bias] * HEADS, axis=0)
    m = jnp.max(sc, axis=-1, keepdims=True)
    p = jnp.exp(sc - m)
    denom = jnp.sum(p, axis=-1, keepdims=True)
    p = p * pl.reciprocal(denom, approx=True)               # EUP, off the VALU slot
    ctx = jnp.einsum('nqk,nkd->nqd', p, vh, preferred_element_type=jnp.float32)
    ctx = _merge_heads(ctx, q.shape[0])                     # (B*seq_q, H)
    return jnp.dot(ctx, wo, preferred_element_type=jnp.float32) + bo


# ------------------------------ wrapper ---------------------------------------
def transformer_decoder_layer(x, mem, source_mask, target_mask, params):
    B, S_t, H = x.shape
    _, S_s, _ = mem.shape
    assert H == HIDDEN

    # ---- pack parameters once: fused QKV (self) / fused KV (cross), LN split ----
    aw, ab = params["attn_w"], params["attn_b"]
    w_qkv_s = jnp.concatenate([aw[0, 0], aw[0, 1], aw[0, 2]], axis=1)   # (H, 3H)
    b_qkv_s = jnp.concatenate([ab[0], ab[1], ab[2]])[None, :]           # (1, 3H)
    w_o_s, b_o_s = aw[0, 3], ab[3][None, :]
    w_q_c, b_q_c = aw[1, 0], ab[4][None, :]
    w_kv_c = jnp.concatenate([aw[1, 1], aw[1, 2]], axis=1)              # (H, 2H)
    b_kv_c = jnp.concatenate([ab[5], ab[6]])[None, :]                   # (1, 2H)
    w_o_c, b_o_c = aw[1, 3], ab[7][None, :]
    ln_g = params["ln"][0::2]                                            # (3, H)
    ln_b = params["ln"][1::2]                                            # (3, H)

    # ---- flatten batch into rows; masks -> additive biases (0 keep / -1e9 mask) ----
    x_rows = x.reshape(B * S_t, H)
    mem_rows = mem.reshape(B * S_s, H)
    t_bias = jnp.where(target_mask > 0.0, 0.0, NEG_INF).astype(jnp.float32)
    s_bias = jnp.where(source_mask > 0.0, 0.0, NEG_INF).astype(jnp.float32)

    def kernel(x_ref, mem_ref, sbias_ref, tbias_ref,
               wqkv_s_ref, bqkv_s_ref, wo_s_ref, bo_s_ref,
               wq_c_ref, bq_c_ref, wkv_c_ref, bkv_c_ref, wo_c_ref, bo_c_ref,
               lng_ref, lnb_ref, w1_ref, b1_ref, w2_ref, b2_ref, out_ref):
        xr = x_ref[...]          # (B*S_t, H)
        mr = mem_ref[...]        # (B*S_s, H)

        # --- self-attention sublayer: one fused QKV projection, target (causal) bias ---
        qkv = jnp.dot(xr, wqkv_s_ref[...], preferred_element_type=jnp.float32) + bqkv_s_ref[...]
        sa = _attention(qkv[:, :H], qkv[:, H:2 * H], qkv[:, 2 * H:],
                        tbias_ref[...], wo_s_ref[...], bo_s_ref[...], S_t, S_t)
        x1 = _layer_norm(xr + sa, lng_ref[0:1, :], lnb_ref[0:1, :])

        # --- source-target attention: Q from x1, fused KV projection of memory ---
        qc = jnp.dot(x1, wq_c_ref[...], preferred_element_type=jnp.float32) + bq_c_ref[...]
        kvc = jnp.dot(mr, wkv_c_ref[...], preferred_element_type=jnp.float32) + bkv_c_ref[...]
        ca = _attention(qc, kvc[:, :H], kvc[:, H:],
                        sbias_ref[...], wo_c_ref[...], bo_c_ref[...], S_t, S_s)
        x2 = _layer_norm(x1 + ca, lng_ref[1:2, :], lnb_ref[1:2, :])

        # --- position-wise FFN sublayer (ReLU) ---
        hdn = jnp.maximum(
            jnp.dot(x2, w1_ref[...], preferred_element_type=jnp.float32) + b1_ref[...], 0.0)
        ff = jnp.dot(hdn, w2_ref[...], preferred_element_type=jnp.float32) + b2_ref[...]
        out_ref[...] = _layer_norm(x2 + ff, lng_ref[2:3, :], lnb_ref[2:3, :]).astype(out_ref.dtype)

    # Single grid-less invocation: the whole problem lives in VMEM, no per-batch
    # pipeline steps, and every matmul sees M = B*S rows.
    out_rows = pl.pallas_call(
        kernel,
        out_shape=jax.ShapeDtypeStruct((B * S_t, H), x.dtype),
    )(x_rows, mem_rows, s_bias, t_bias,
      w_qkv_s, b_qkv_s, w_o_s, b_o_s,
      w_q_c, b_q_c, w_kv_c, b_kv_c, w_o_c, b_o_c,
      ln_g, ln_b, params["w1"], params["b1"], params["w2"], params["b2"])
    return out_rows.reshape(B, S_t, H)


# -------------------------- pure-JAX reference --------------------------------
def reference(x, mem, smask, tmask, p):
    hp = jax.lax.Precision.HIGHEST

    def ln(h, idx):
        g = p["ln"][2 * idx]
        b = p["ln"][2 * idx + 1]
        mu = h.mean(-1, keepdims=True)
        var = ((h - mu) ** 2).mean(-1, keepdims=True)
        return (h - mu) * jax.lax.rsqrt(var + EPS) * g + b

    def mha(q_in, kv_in, mask, li):
        wq, wk, wv, wo = (p["attn_w"][li, j] for j in range(4))
        bq, bk, bv, bo = (p["attn_b"][4 * li + j] for j in range(4))
        q = jnp.matmul(q_in, wq, precision=hp) + bq
        k = jnp.matmul(kv_in, wk, precision=hp) + bk
        v = jnp.matmul(kv_in, wv, precision=hp) + bv
        B, Sq, H = q.shape
        Sk = k.shape[1]
        qh = q.reshape(B, Sq, HEADS, DH).transpose(0, 2, 1, 3)
        kh = k.reshape(B, Sk, HEADS, DH).transpose(0, 2, 1, 3)
        vh = v.reshape(B, Sk, HEADS, DH).transpose(0, 2, 1, 3)
        sc = jnp.einsum("bhqd,bhkd->bhqk", qh, kh, precision=hp) / math.sqrt(DH)
        sc = jnp.where(mask[:, None] > 0.0, sc, NEG_INF)
        pr = jax.nn.softmax(sc, axis=-1)
        ctx = jnp.einsum("bhqk,bhkd->bhqd", pr, vh, precision=hp)
        ctx = ctx.transpose(0, 2, 1, 3).reshape(B, Sq, H)
        return jnp.matmul(ctx, wo, precision=hp) + bo

    x1 = ln(x + mha(x, x, tmask, 0), 0)
    x2 = ln(x1 + mha(x1, mem, smask, 1), 1)
    h = jnp.maximum(jnp.matmul(x2, p["w1"], precision=hp) + p["b1"][0], 0.0)
    return ln(x2 + jnp.matmul(h, p["w2"], precision=hp) + p["b2"][0], 2)


# ------------------------------ main ------------------------------------------
if __name__ == "__main__":
    key = jax.random.PRNGKey(0)
    keys = jax.random.split(key, 10)

    B, S_T, S_S = 2, 8, 8

    x = jax.random.normal(keys[0], (B, S_T, HIDDEN), jnp.float32)
    mem = jax.random.normal(keys[1], (B, S_S, HIDDEN), jnp.float32)

    # target mask: causal; source mask: batch 1 has last 2 source positions padded
    target_mask = jnp.broadcast_to(
        jnp.tril(jnp.ones((S_T, S_T), jnp.float32)), (B, S_T, S_T))
    src_valid = jnp.stack([jnp.ones((S_S,), jnp.float32),
                           jnp.concatenate([jnp.ones((S_S - 2,)),
                                            jnp.zeros((2,))]).astype(jnp.float32)])
    source_mask = jnp.broadcast_to(src_valid[:, None, :], (B, S_T, S_S))

    # deterministic synthetic params
    params = {
        "attn_w": 0.05 * jax.random.normal(keys[2], (2, 4, HIDDEN, HIDDEN), jnp.float32),
        "attn_b": 0.05 * jax.random.normal(keys[3], (8, HIDDEN), jnp.float32),
        "ln": jnp.concatenate(
            [jnp.stack([jnp.ones((HIDDEN,), jnp.float32),
                        jnp.zeros((HIDDEN,), jnp.float32)]) for _ in range(3)],
            axis=0),                                           # (6, H): [g,b]x3
        "w1": 0.05 * jax.random.normal(keys[4], (HIDDEN, FF), jnp.float32),
        "b1": 0.05 * jax.random.normal(keys[5], (1, FF), jnp.float32),
        "w2": 0.05 * jax.random.normal(keys[6], (FF, HIDDEN), jnp.float32),
        "b2": 0.05 * jax.random.normal(keys[7], (1, HIDDEN), jnp.float32),
    }

    out = transformer_decoder_layer(x, mem, source_mask, target_mask, params)
    out = jax.block_until_ready(out)

    ref = reference(x, mem, source_mask, target_mask, params)
    np.testing.assert_allclose(np.asarray(out), np.asarray(ref), rtol=1e-2, atol=1e-2)

    print("KERNEL_OK")
</pallas_src>

<mosaic_0001>
module attributes {stable_mosaic.version = 11 : i64} {
  func.func @kernel(%arg0: memref<16x32xf32, #tpu.memory_space<vmem>>, %arg1: memref<16x32xf32, #tpu.memory_space<vmem>>, %arg2: memref<2x8x8xf32, #tpu.memory_space<vmem>>, %arg3: memref<2x8x8xf32, #tpu.memory_space<vmem>>, %arg4: memref<32x96xf32, #tpu.memory_space<vmem>>, %arg5: memref<1x96xf32, #tpu.memory_space<vmem>>, %arg6: memref<32x32xf32, #tpu.memory_space<vmem>>, %arg7: memref<1x32xf32, #tpu.memory_space<vmem>>, %arg8: memref<32x32xf32, #tpu.memory_space<vmem>>, %arg9: memref<1x32xf32, #tpu.memory_space<vmem>>, %arg10: memref<32x64xf32, #tpu.memory_space<vmem>>, %arg11: memref<1x64xf32, #tpu.memory_space<vmem>>, %arg12: memref<32x32xf32, #tpu.memory_space<vmem>>, %arg13: memref<1x32xf32, #tpu.memory_space<vmem>>, %arg14: memref<3x32xf32, #tpu.memory_space<vmem>>, %arg15: memref<3x32xf32, #tpu.memory_space<vmem>>, %arg16: memref<32x64xf32, #tpu.memory_space<vmem>>, %arg17: memref<1x64xf32, #tpu.memory_space<vmem>>, %arg18: memref<64x32xf32, #tpu.memory_space<vmem>>, %arg19: memref<1x32xf32, #tpu.memory_space<vmem>>, %arg20: memref<16x32xf32, #tpu.memory_space<vmem>>) attributes {dimension_semantics = [], scalar_prefetch = 0 : i64, scratch_operands = 0 : i64, tpu.core_type = #tpu.core_type<tc>} {
    %c0 = arith.constant 0 : index
    %c0_0 = arith.constant 0 : index
    %0 = vector.load %arg0[%c0, %c0_0] : memref<16x32xf32, #tpu.memory_space<vmem>>, vector<16x32xf32>
    %c0_1 = arith.constant 0 : index
    %c0_2 = arith.constant 0 : index
    %1 = vector.load %arg1[%c0_1, %c0_2] : memref<16x32xf32, #tpu.memory_space<vmem>>, vector<16x32xf32>
    %c0_3 = arith.constant 0 : index
    %c0_4 = arith.constant 0 : index
    %2 = vector.load %arg4[%c0_3, %c0_4] : memref<32x96xf32, #tpu.memory_space<vmem>>, vector<32x96xf32>
    %cst = arith.constant dense<0.000000e+00> : vector<16x96xf32>
    %3 = tpu.matmul %0, %2, %cst {dimension_numbers = #tpu.dot_dimension_numbers<[1], [0], [0], [1], [0, 0, 1, 1], [], []>} : vector<16x32xf32>, vector<32x96xf32>, vector<16x96xf32> -> vector<16x96xf32>
    %c0_5 = arith.constant 0 : index
    %c0_6 = arith.constant 0 : index
    %4 = vector.load %arg5[%c0_5, %c0_6] : memref<1x96xf32, #tpu.memory_space<vmem>>, vector<1x96xf32>
    %5 = vector.broadcast %4 : vector<1x96xf32> to vector<16x96xf32>
    %6 = arith.addf %3, %5 : vector<16x96xf32>
    %7 = vector.extract_strided_slice %6 {offsets = [0, 0], sizes = [16, 32], strides = [1, 1]} : vector<16x96xf32> to vector<16x32xf32>
    %8 = vector.extract_strided_slice %6 {offsets = [0, 32], sizes = [16, 32], strides = [1, 1]} : vector<16x96xf32> to vector<16x32xf32>
    %9 = vector.extract_strided_slice %6 {offsets = [0, 64], sizes = [16, 32], strides = [1, 1]} : vector<16x96xf32> to vector<16x32xf32>
    %c0_7 = arith.constant 0 : index
    %c0_8 = arith.constant 0 : index
    %c0_9 = arith.constant 0 : index
    %10 = vector.load %arg3[%c0_7, %c0_8, %c0_9] : memref<2x8x8xf32, #tpu.memory_space<vmem>>, vector<2x8x8xf32>
    %c0_10 = arith.constant 0 : index
    %c0_11 = arith.constant 0 : index
    %11 = vector.load %arg6[%c0_10, %c0_11] : memref<32x32xf32, #tpu.memory_space<vmem>>, vector<32x32xf32>
    %c0_12 = arith.constant 0 : index
    %c0_13 = arith.constant 0 : index
    %12 = vector.load %arg7[%c0_12, %c0_13] : memref<1x32xf32, #tpu.memory_space<vmem>>, vector<1x32xf32>
    %cst_14 = arith.constant 0.353553385 : f32
    %13 = vector.broadcast %cst_14 : f32 to vector<16x32xf32>
    %14 = arith.mulf %7, %13 : vector<16x32xf32>
    %15 = vector.extract_strided_slice %14 {offsets = [0, 0], sizes = [16, 8], strides = [1, 1]} : vector<16x32xf32> to vector<16x8xf32>
    %16 = vector.extract_strided_slice %14 {offsets = [0, 8], sizes = [16, 8], strides = [1, 1]} : vector<16x32xf32> to vector<16x8xf32>
    %17 = vector.extract_strided_slice %14 {offsets = [0, 16], sizes = [16, 8], strides = [1, 1]} : vector<16x32xf32> to vector<16x8xf32>
    %18 = vector.extract_strided_slice %14 {offsets = [0, 24], sizes = [16, 8], strides = [1, 1]} : vector<16x32xf32> to vector<16x8xf32>
    %19 = vector.shape_cast %15 : vector<16x8xf32> to vector<1x16x8xf32>
    %20 = vector.shape_cast %16 : vector<16x8xf32> to vector<1x16x8xf32>
    %21 = vector.shape_cast %17 : vector<16x8xf32> to vector<1x16x8xf32>
    %22 = vector.shape_cast %18 : vector<16x8xf32> to vector<1x16x8xf32>
    %23 = tpu.concatenate %19, %20, %21, %22 in 0 : vector<1x16x8xf32>, vector<1x16x8xf32>, vector<1x16x8xf32>, vector<1x16x8xf32> -> vector<4x16x8xf32>
    %24 = vector.shape_cast %23 : vector<4x16x8xf32> to vector<8x8x8xf32>
    %25 = vector.extract_strided_slice %8 {offsets = [0, 0], sizes = [16, 8], strides = [1, 1]} : vector<16x32xf32> to vector<16x8xf32>
    %26 = vector.extract_strided_slice %8 {offsets = [0, 8], sizes = [16, 8], strides = [1, 1]} : vector<16x32xf32> to vector<16x8xf32>
    %27 = vector.extract_strided_slice %8 {offsets = [0, 16], sizes = [16, 8], strides = [1, 1]} : vector<16x32xf32> to vector<16x8xf32>
    %28 = vector.extract_strided_slice %8 {offsets = [0, 24], sizes = [16, 8], strides = [1, 1]} : vector<16x32xf32> to vector<16x8xf32>
    %29 = vector.shape_cast %25 : vector<16x8xf32> to vector<1x16x8xf32>
    %30 = vector.shape_cast %26 : vector<16x8xf32> to vector<1x16x8xf32>
    %31 = vector.shape_cast %27 : vector<16x8xf32> to vector<1x16x8xf32>
    %32 = vector.shape_cast %28 : vector<16x8xf32> to vector<1x16x8xf32>
    %33 = tpu.concatenate %29, %30, %31, %32 in 0 : vector<1x16x8xf32>, vector<1x16x8xf32>, vector<1x16x8xf32>, vector<1x16x8xf32> -> vector<4x16x8xf32>
    %34 = vector.shape_cast %33 : vector<4x16x8xf32> to vector<8x8x8xf32>
    %35 = vector.extract_strided_slice %9 {offsets = [0, 0], sizes = [16, 8], strides = [1, 1]} : vector<16x32xf32> to vector<16x8xf32>
    %36 = vector.extract_strided_slice %9 {offsets = [0, 8], sizes = [16, 8], strides = [1, 1]} : vector<16x32xf32> to vector<16x8xf32>
    %37 = vector.extract_strided_slice %9 {offsets = [0, 16], sizes = [16, 8], strides = [1, 1]} : vector<16x32xf32> to vector<16x8xf32>
    %38 = vector.extract_strided_slice %9 {offsets = [0, 24], sizes = [16, 8], strides = [1, 1]} : vector<16x32xf32> to vector<16x8xf32>
    %39 = vector.shape_cast %35 : vector<16x8xf32> to vector<1x16x8xf32>
    %40 = vector.shape_cast %36 : vector<16x8xf32> to vector<1x16x8xf32>
    %41 = vector.shape_cast %37 : vector<16x8xf32> to vector<1x16x8xf32>
    %42 = vector.shape_cast %38 : vector<16x8xf32> to vector<1x16x8xf32>
    %43 = tpu.concatenate %39, %40, %41, %42 in 0 : vector<1x16x8xf32>, vector<1x16x8xf32>, vector<1x16x8xf32>, vector<1x16x8xf32> -> vector<4x16x8xf32>
    %44 = vector.shape_cast %43 : vector<4x16x8xf32> to vector<8x8x8xf32>
    "tpu.trace_start"() <{level = 10 : i32, message = "nqd,nkd->nqk"}> : () -> ()
    %cst_15 = arith.constant dense<0.000000e+00> : vector<8x8x8xf32>
    %45 = tpu.matmul %24, %34, %cst_15 {dimension_numbers = #tpu.dot_dimension_numbers<[2], [2], [1], [1], [0, 0, 0, 1, 1, 1], [0], [0]>} : vector<8x8x8xf32>, vector<8x8x8xf32>, vector<8x8x8xf32> -> vector<8x8x8xf32>
    "tpu.trace_stop"() : () -> ()
    %46 = tpu.concatenate %10, %10, %10, %10 in 0 : vector<2x8x8xf32>, vector<2x8x8xf32>, vector<2x8x8xf32>, vector<2x8x8xf32> -> vector<8x8x8xf32>
    %47 = arith.addf %45, %46 : vector<8x8x8xf32>
    %cst_16 = arith.constant dense<0xFF800000> : vector<8x8xf32>
    %48 = vector.multi_reduction <maximumf>, %47, %cst_16 [2] : vector<8x8x8xf32> to vector<8x8xf32>
    %49 = vector.shape_cast %48 : vector<8x8xf32> to vector<8x8x1xf32>
    %50 = vector.broadcast %49 : vector<8x8x1xf32> to vector<8x8x8xf32>
    %51 = arith.subf %47, %50 : vector<8x8x8xf32>
    %52 = math.exp %51 : vector<8x8x8xf32>
    %cst_17 = arith.constant dense<0.000000e+00> : vector<8x8xf32>
    %53 = vector.multi_reduction <add>, %52, %cst_17 [2] : vector<8x8x8xf32> to vector<8x8xf32>
    %54 = vector.shape_cast %53 : vector<8x8xf32> to vector<8x8x1xf32>
    %55 = tpu.reciprocal %54 {approx = true} : vector<8x8x1xf32> -> vector<8x8x1xf32>
    %56 = vector.broadcast %55 : vector<8x8x1xf32> to vector<8x8x8xf32>
    %57 = arith.mulf %52, %56 : vector<8x8x8xf32>
    "tpu.trace_start"() <{level = 10 : i32, message = "nqk,nkd->nqd"}> : () -> ()
    %cst_18 = arith.constant dense<0.000000e+00> : vector<8x8x8xf32>
    %58 = tpu.matmul %57, %44, %cst_18 {dimension_numbers = #tpu.dot_dimension_numbers<[2], [1], [1], [2], [0, 0, 0, 1, 1, 2], [0], [0]>} : vector<8x8x8xf32>, vector<8x8x8xf32>, vector<8x8x8xf32> -> vector<8x8x8xf32>
    "tpu.trace_stop"() : () -> ()
    %59 = vector.shape_cast %58 : vector<8x8x8xf32> to vector<4x16x8xf32>
    %60 = vector.extract_strided_slice %59 {offsets = [0, 0, 0], sizes = [1, 16, 8], strides = [1, 1, 1]} : vector<4x16x8xf32> to vector<1x16x8xf32>
    %61 = vector.shape_cast %60 : vector<1x16x8xf32> to vector<16x8xf32>
    %62 = vector.extract_strided_slice %59 {offsets = [1, 0, 0], sizes = [1, 16, 8], strides = [1, 1, 1]} : vector<4x16x8xf32> to vector<1x16x8xf32>
    %63 = vector.shape_cast %62 : vector<1x16x8xf32> to vector<16x8xf32>
    %64 = vector.extract_strided_slice %59 {offsets = [2, 0, 0], sizes = [1, 16, 8], strides = [1, 1, 1]} : vector<4x16x8xf32> to vector<1x16x8xf32>
    %65 = vector.shape_cast %64 : vector<1x16x8xf32> to vector<16x8xf32>
    %66 = vector.extract_strided_slice %59 {offsets = [3, 0, 0], sizes = [1, 16, 8], strides = [1, 1, 1]} : vector<4x16x8xf32> to vector<1x16x8xf32>
    %67 = vector.shape_cast %66 : vector<1x16x8xf32> to vector<16x8xf32>
    %68 = tpu.concatenate %61, %63, %65, %67 in 1 : vector<16x8xf32>, vector<16x8xf32>, vector<16x8xf32>, vector<16x8xf32> -> vector<16x32xf32>
    %cst_19 = arith.constant dense<0.000000e+00> : vector<16x32xf32>
    %69 = tpu.matmul %68, %11, %cst_19 {dimension_numbers = #tpu.dot_dimension_numbers<[1], [0], [0], [1], [0, 0, 1, 1], [], []>} : vector<16x32xf32>, vector<32x32xf32>, vector<16x32xf32> -> vector<16x32xf32>
    %70 = vector.broadcast %12 : vector<1x32xf32> to vector<16x32xf32>
    %71 = arith.addf %69, %70 : vector<16x32xf32>
    %72 = arith.addf %0, %71 : vector<16x32xf32>
    %c0_20 = arith.constant 0 : index
    %c0_21 = arith.constant 0 : index
    %73 = vector.load %arg14[%c0_20, %c0_21] : memref<3x32xf32, #tpu.memory_space<vmem>>, vector<1x32xf32>
    %c0_22 = arith.constant 0 : index
    %c0_23 = arith.constant 0 : index
    %74 = vector.load %arg15[%c0_22, %c0_23] : memref<3x32xf32, #tpu.memory_space<vmem>>, vector<1x32xf32>
    %cst_24 = arith.constant dense<0.000000e+00> : vector<16xf32>
    %75 = vector.multi_reduction <add>, %72, %cst_24 [1] : vector<16x32xf32> to vector<16xf32>
    %76 = vector.shape_cast %75 : vector<16xf32> to vector<16x1xf32>
    %cst_25 = arith.constant 3.200000e+01 : f32
    %77 = vector.broadcast %cst_25 : f32 to vector<16x1xf32>
    %78 = arith.divf %76, %77 : vector<16x1xf32>
    %79 = vector.broadcast %78 : vector<16x1xf32> to vector<16x32xf32>
    %80 = arith.subf %72, %79 : vector<16x32xf32>
    %81 = arith.mulf %80, %80 : vector<16x32xf32>
    %cst_26 = arith.constant dense<0.000000e+00> : vector<16xf32>
    %82 = vector.multi_reduction <add>, %81, %cst_26 [1] : vector<16x32xf32> to vector<16xf32>
    %83 = vector.shape_cast %82 : vector<16xf32> to vector<16x1xf32>
    %cst_27 = arith.constant 3.200000e+01 : f32
    %84 = vector.broadcast %cst_27 : f32 to vector<16x1xf32>
    %85 = arith.divf %83, %84 : vector<16x1xf32>
    %86 = vector.broadcast %78 : vector<16x1xf32> to vector<16x32xf32>
    %87 = arith.subf %72, %86 : vector<16x32xf32>
    %cst_28 = arith.constant 9.99999997E-7 : f32
    %88 = vector.broadcast %cst_28 : f32 to vector<16x1xf32>
    %89 = arith.addf %85, %88 : vector<16x1xf32>
    %90 = math.rsqrt %89 : vector<16x1xf32>
    %91 = vector.broadcast %90 : vector<16x1xf32> to vector<16x32xf32>
    %92 = arith.mulf %87, %91 : vector<16x32xf32>
    %93 = vector.broadcast %73 : vector<1x32xf32> to vector<16x32xf32>
    %94 = arith.mulf %92, %93 : vector<16x32xf32>
    %95 = vector.broadcast %74 : vector<1x32xf32> to vector<16x32xf32>
    %96 = arith.addf %94, %95 : vector<16x32xf32>
    %c0_29 = arith.constant 0 : index
    %c0_30 = arith.constant 0 : index
    %97 = vector.load %arg8[%c0_29, %c0_30] : memref<32x32xf32, #tpu.memory_space<vmem>>, vector<32x32xf32>
    %cst_31 = arith.constant dense<0.000000e+00> : vector<16x32xf32>
    %98 = tpu.matmul %96, %97, %cst_31 {dimension_numbers = #tpu.dot_dimension_numbers<[1], [0], [0], [1], [0, 0, 1, 1], [], []>} : vector<16x32xf32>, vector<32x32xf32>, vector<16x32xf32> -> vector<16x32xf32>
    %c0_32 = arith.constant 0 : index
    %c0_33 = arith.constant 0 : index
    %99 = vector.load %arg9[%c0_32, %c0_33] : memref<1x32xf32, #tpu.memory_space<vmem>>, vector<1x32xf32>
    %100 = vector.broadcast %99 : vector<1x32xf32> to vector<16x32xf32>
    %101 = arith.addf %98, %100 : vector<16x32xf32>
    %c0_34 = arith.constant 0 : index
    %c0_35 = arith.constant 0 : index
    %102 = vector.load %arg10[%c0_34, %c0_35] : memref<32x64xf32, #tpu.memory_space<vmem>>, vector<32x64xf32>
    %cst_36 = arith.constant dense<0.000000e+00> : vector<16x64xf32>
    %103 = tpu.matmul %1, %102, %cst_36 {dimension_numbers = #tpu.dot_dimension_numbers<[1], [0], [0], [1], [0, 0, 1, 1], [], []>} : vector<16x32xf32>, vector<32x64xf32>, vector<16x64xf32> -> vector<16x64xf32>
    %c0_37 = arith.constant 0 : index
    %c0_38 = arith.constant 0 : index
    %104 = vector.load %arg11[%c0_37, %c0_38] : memref<1x64xf32, #tpu.memory_space<vmem>>, vector<1x64xf32>
    %105 = vector.broadcast %104 : vector<1x64xf32> to vector<16x64xf32>
    %106 = arith.addf %103, %105 : vector<16x64xf32>
    %107 = vector.extract_strided_slice %106 {offsets = [0, 0], sizes = [16, 32], strides = [1, 1]} : vector<16x64xf32> to vector<16x32xf32>
    %108 = vector.extract_strided_slice %106 {offsets = [0, 32], sizes = [16, 32], strides = [1, 1]} : vector<16x64xf32> to vector<16x32xf32>
    %c0_39 = arith.constant 0 : index
    %c0_40 = arith.constant 0 : index
    %c0_41 = arith.constant 0 : index
    %109 = vector.load %arg2[%c0_39, %c0_40, %c0_41] : memref<2x8x8xf32, #tpu.memory_space<vmem>>, vector<2x8x8xf32>
    %c0_42 = arith.constant 0 : index
    %c0_43 = arith.constant 0 : index
    %110 = vector.load %arg12[%c0_42, %c0_43] : memref<32x32xf32, #tpu.memory_space<vmem>>, vector<32x32xf32>
    %c0_44 = arith.constant 0 : index
    %c0_45 = arith.constant 0 : index
    %111 = vector.load %arg13[%c0_44, %c0_45] : memref<1x32xf32, #tpu.memory_space<vmem>>, vector<1x32xf32>
    %cst_46 = arith.constant 0.353553385 : f32
    %112 = vector.broadcast %cst_46 : f32 to vector<16x32xf32>
    %113 = arith.mulf %101, %112 : vector<16x32xf32>
    %114 = vector.extract_strided_slice %113 {offsets = [0, 0], sizes = [16, 8], strides = [1, 1]} : vector<16x32xf32> to vector<16x8xf32>
    %115 = vector.extract_strided_slice %113 {offsets = [0, 8], sizes = [16, 8], strides = [1, 1]} : vector<16x32xf32> to vector<16x8xf32>
    %116 = vector.extract_strided_slice %113 {offsets = [0, 16], sizes = [16, 8], strides = [1, 1]} : vector<16x32xf32> to vector<16x8xf32>
    %117 = vector.extract_strided_slice %113 {offsets = [0, 24], sizes = [16, 8], strides = [1, 1]} : vector<16x32xf32> to vector<16x8xf32>
    %118 = vector.shape_cast %114 : vector<16x8xf32> to vector<1x16x8xf32>
    %119 = vector.shape_cast %115 : vector<16x8xf32> to vector<1x16x8xf32>
    %120 = vector.shape_cast %116 : vector<16x8xf32> to vector<1x16x8xf32>
    %121 = vector.shape_cast %117 : vector<16x8xf32> to vector<1x16x8xf32>
    %122 = tpu.concatenate %118, %119, %120, %121 in 0 : vector<1x16x8xf32>, vector<1x16x8xf32>, vector<1x16x8xf32>, vector<1x16x8xf32> -> vector<4x16x8xf32>
    %123 = vector.shape_cast %122 : vector<4x16x8xf32> to vector<8x8x8xf32>
    %124 = vector.extract_strided_slice %107 {offsets = [0, 0], sizes = [16, 8], strides = [1, 1]} : vector<16x32xf32> to vector<16x8xf32>
    %125 = vector.extract_strided_slice %107 {offsets = [0, 8], sizes = [16, 8], strides = [1, 1]} : vector<16x32xf32> to vector<16x8xf32>
    %126 = vector.extract_strided_slice %107 {offsets = [0, 16], sizes = [16, 8], strides = [1, 1]} : vector<16x32xf32> to vector<16x8xf32>
    %127 = vector.extract_strided_slice %107 {offsets = [0, 24], sizes = [16, 8], strides = [1, 1]} : vector<16x32xf32> to vector<16x8xf32>
    %128 = vector.shape_cast %124 : vector<16x8xf32> to vector<1x16x8xf32>
    %129 = vector.shape_cast %125 : vector<16x8xf32> to vector<1x16x8xf32>
    %130 = vector.shape_cast %126 : vector<16x8xf32> to vector<1x16x8xf32>
    %131 = vector.shape_cast %127 : vector<16x8xf32> to vector<1x16x8xf32>
    %132 = tpu.concatenate %128, %129, %130, %131 in 0 : vector<1x16x8xf32>, vector<1x16x8xf32>, vector<1x16x8xf32>, vector<1x16x8xf32> -> vector<4x16x8xf32>
    %133 = vector.shape_cast %132 : vector<4x16x8xf32> to vector<8x8x8xf32>
    %134 = vector.extract_strided_slice %108 {offsets = [0, 0], sizes = [16, 8], strides = [1, 1]} : vector<16x32xf32> to vector<16x8xf32>
    %135 = vector.extract_strided_slice %108 {offsets = [0, 8], sizes = [16, 8], strides = [1, 1]} : vector<16x32xf32> to vector<16x8xf32>
    %136 = vector.extract_strided_slice %108 {offsets = [0, 16], sizes = [16, 8], strides = [1, 1]} : vector<16x32xf32> to vector<16x8xf32>
    %137 = vector.extract_strided_slice %108 {offsets = [0, 24], sizes = [16, 8], strides = [1, 1]} : vector<16x32xf32> to vector<16x8xf32>
    %138 = vector.shape_cast %134 : vector<16x8xf32> to vector<1x16x8xf32>
    %139 = vector.shape_cast %135 : vector<16x8xf32> to vector<1x16x8xf32>
    %140 = vector.shape_cast %136 : vector<16x8xf32> to vector<1x16x8xf32>
    %141 = vector.shape_cast %137 : vector<16x8xf32> to vector<1x16x8xf32>
    %142 = tpu.concatenate %138, %139, %140, %141 in 0 : vector<1x16x8xf32>, vector<1x16x8xf32>, vector<1x16x8xf32>, vector<1x16x8xf32> -> vector<4x16x8xf32>
    %143 = vector.shape_cast %142 : vector<4x16x8xf32> to vector<8x8x8xf32>
    "tpu.trace_start"() <{level = 10 : i32, message = "nqd,nkd->nqk"}> : () -> ()
    %cst_47 = arith.constant dense<0.000000e+00> : vector<8x8x8xf32>
    %144 = tpu.matmul %123, %133, %cst_47 {dimension_numbers = #tpu.dot_dimension_numbers<[2], [2], [1], [1], [0, 0, 0, 1, 1, 1], [0], [0]>} : vector<8x8x8xf32>, vector<8x8x8xf32>, vector<8x8x8xf32> -> vector<8x8x8xf32>
    "tpu.trace_stop"() : () -> ()
    %145 = tpu.concatenate %109, %109, %109, %109 in 0 : vector<2x8x8xf32>, vector<2x8x8xf32>, vector<2x8x8xf32>, vector<2x8x8xf32> -> vector<8x8x8xf32>
    %146 = arith.addf %144, %145 : vector<8x8x8xf32>
    %cst_48 = arith.constant dense<0xFF800000> : vector<8x8xf32>
    %147 = vector.multi_reduction <maximumf>, %146, %cst_48 [2] : vector<8x8x8xf32> to vector<8x8xf32>
    %148 = vector.shape_cast %147 : vector<8x8xf32> to vector<8x8x1xf32>
    %149 = vector.broadcast %148 : vector<8x8x1xf32> to vector<8x8x8xf32>
    %150 = arith.subf %146, %149 : vector<8x8x8xf32>
    %151 = math.exp %150 : vector<8x8x8xf32>
    %cst_49 = arith.constant dense<0.000000e+00> : vector<8x8xf32>
    %152 = vector.multi_reduction <add>, %151, %cst_49 [2] : vector<8x8x8xf32> to vector<8x8xf32>
    %153 = vector.shape_cast %152 : vector<8x8xf32> to vector<8x8x1xf32>
    %154 = tpu.reciprocal %153 {approx = true} : vector<8x8x1xf32> -> vector<8x8x1xf32>
    %155 = vector.broadcast %154 : vector<8x8x1xf32> to vector<8x8x8xf32>
    %156 = arith.mulf %151, %155 : vector<8x8x8xf32>
    "tpu.trace_start"() <{level = 10 : i32, message = "nqk,nkd->nqd"}> : () -> ()
    %cst_50 = arith.constant dense<0.000000e+00> : vector<8x8x8xf32>
    %157 = tpu.matmul %156, %143, %cst_50 {dimension_numbers = #tpu.dot_dimension_numbers<[2], [1], [1], [2], [0, 0, 0, 1, 1, 2], [0], [0]>} : vector<8x8x8xf32>, vector<8x8x8xf32>, vector<8x8x8xf32> -> vector<8x8x8xf32>
    "tpu.trace_stop"() : () -> ()
    %158 = vector.shape_cast %157 : vector<8x8x8xf32> to vector<4x16x8xf32>
    %159 = vector.extract_strided_slice %158 {offsets = [0, 0, 0], sizes = [1, 16, 8], strides = [1, 1, 1]} : vector<4x16x8xf32> to vector<1x16x8xf32>
    %160 = vector.shape_cast %159 : vector<1x16x8xf32> to vector<16x8xf32>
    %161 = vector.extract_strided_slice %158 {offsets = [1, 0, 0], sizes = [1, 16, 8], strides = [1, 1, 1]} : vector<4x16x8xf32> to vector<1x16x8xf32>
    %162 = vector.shape_cast %161 : vector<1x16x8xf32> to vector<16x8xf32>
    %163 = vector.extract_strided_slice %158 {offsets = [2, 0, 0], sizes = [1, 16, 8], strides = [1, 1, 1]} : vector<4x16x8xf32> to vector<1x16x8xf32>
    %164 = vector.shape_cast %163 : vector<1x16x8xf32> to vector<16x8xf32>
    %165 = vector.extract_strided_slice %158 {offsets = [3, 0, 0], sizes = [1, 16, 8], strides = [1, 1, 1]} : vector<4x16x8xf32> to vector<1x16x8xf32>
    %166 = vector.shape_cast %165 : vector<1x16x8xf32> to vector<16x8xf32>
    %167 = tpu.concatenate %160, %162, %164, %166 in 1 : vector<16x8xf32>, vector<16x8xf32>, vector<16x8xf32>, vector<16x8xf32> -> vector<16x32xf32>
    %cst_51 = arith.constant dense<0.000000e+00> : vector<16x32xf32>
    %168 = tpu.matmul %167, %110, %cst_51 {dimension_numbers = #tpu.dot_dimension_numbers<[1], [0], [0], [1], [0, 0, 1, 1], [], []>} : vector<16x32xf32>, vector<32x32xf32>, vector<16x32xf32> -> vector<16x32xf32>
    %169 = vector.broadcast %111 : vector<1x32xf32> to vector<16x32xf32>
    %170 = arith.addf %168, %169 : vector<16x32xf32>
    %171 = arith.addf %96, %170 : vector<16x32xf32>
    %c1 = arith.constant 1 : index
    %c0_52 = arith.constant 0 : index
    %172 = vector.load %arg14[%c1, %c0_52] : memref<3x32xf32, #tpu.memory_space<vmem>>, vector<1x32xf32>
    %c1_53 = arith.constant 1 : index
    %c0_54 = arith.constant 0 : index
    %173 = vector.load %arg15[%c1_53, %c0_54] : memref<3x32xf32, #tpu.memory_space<vmem>>, vector<1x32xf32>
    %cst_55 = arith.constant dense<0.000000e+00> : vector<16xf32>
    %174 = vector.multi_reduction <add>, %171, %cst_55 [1] : vector<16x32xf32> to vector<16xf32>
    %175 = vector.shape_cast %174 : vector<16xf32> to vector<16x1xf32>
    %cst_56 = arith.constant 3.200000e+01 : f32
    %176 = vector.broadcast %cst_56 : f32 to vector<16x1xf32>
    %177 = arith.divf %175, %176 : vector<16x1xf32>
    %178 = vector.broadcast %177 : vector<16x1xf32> to vector<16x32xf32>
    %179 = arith.subf %171, %178 : vector<16x32xf32>
    %180 = arith.mulf %179, %179 : vector<16x32xf32>
    %cst_57 = arith.constant dense<0.000000e+00> : vector<16xf32>
    %181 = vector.multi_reduction <add>, %180, %cst_57 [1] : vector<16x32xf32> to vector<16xf32>
    %182 = vector.shape_cast %181 : vector<16xf32> to vector<16x1xf32>
    %cst_58 = arith.constant 3.200000e+01 : f32
    %183 = vector.broadcast %cst_58 : f32 to vector<16x1xf32>
    %184 = arith.divf %182, %183 : vector<16x1xf32>
    %185 = vector.broadcast %177 : vector<16x1xf32> to vector<16x32xf32>
    %186 = arith.subf %171, %185 : vector<16x32xf32>
    %cst_59 = arith.constant 9.99999997E-7 : f32
    %187 = vector.broadcast %cst_59 : f32 to vector<16x1xf32>
    %188 = arith.addf %184, %187 : vector<16x1xf32>
    %189 = math.rsqrt %188 : vector<16x1xf32>
    %190 = vector.broadcast %189 : vector<16x1xf32> to vector<16x32xf32>
    %191 = arith.mulf %186, %190 : vector<16x32xf32>
    %192 = vector.broadcast %172 : vector<1x32xf32> to vector<16x32xf32>
    %193 = arith.mulf %191, %192 : vector<16x32xf32>
    %194 = vector.broadcast %173 : vector<1x32xf32> to vector<16x32xf32>
    %195 = arith.addf %193, %194 : vector<16x32xf32>
    %c0_60 = arith.constant 0 : index
    %c0_61 = arith.constant 0 : index
    %196 = vector.load %arg16[%c0_60, %c0_61] : memref<32x64xf32, #tpu.memory_space<vmem>>, vector<32x64xf32>
    %cst_62 = arith.constant dense<0.000000e+00> : vector<16x64xf32>
    %197 = tpu.matmul %195, %196, %cst_62 {dimension_numbers = #tpu.dot_dimension_numbers<[1], [0], [0], [1], [0, 0, 1, 1], [], []>} : vector<16x32xf32>, vector<32x64xf32>, vector<16x64xf32> -> vector<16x64xf32>
    %c0_63 = arith.constant 0 : index
    %c0_64 = arith.constant 0 : index
    %198 = vector.load %arg17[%c0_63, %c0_64] : memref<1x64xf32, #tpu.memory_space<vmem>>, vector<1x64xf32>
    %199 = vector.broadcast %198 : vector<1x64xf32> to vector<16x64xf32>
    %200 = arith.addf %197, %199 : vector<16x64xf32>
    %cst_65 = arith.constant 0.000000e+00 : f32
    %201 = vector.broadcast %cst_65 : f32 to vector<16x64xf32>
    %202 = arith.maximumf %200, %201 : vector<16x64xf32>
    %c0_66 = arith.constant 0 : index
    %c0_67 = arith.constant 0 : index
    %203 = vector.load %arg18[%c0_66, %c0_67] : memref<64x32xf32, #tpu.memory_space<vmem>>, vector<64x32xf32>
    %cst_68 = arith.constant dense<0.000000e+00> : vector<16x32xf32>
    %204 = tpu.matmul %202, %203, %cst_68 {dimension_numbers = #tpu.dot_dimension_numbers<[1], [0], [0], [1], [0, 0, 1, 1], [], []>} : vector<16x64xf32>, vector<64x32xf32>, vector<16x32xf32> -> vector<16x32xf32>
    %c0_69 = arith.constant 0 : index
    %c0_70 = arith.constant 0 : index
    %205 = vector.load %arg19[%c0_69, %c0_70] : memref<1x32xf32, #tpu.memory_space<vmem>>, vector<1x32xf32>
    %206 = vector.broadcast %205 : vector<1x32xf32> to vector<16x32xf32>
    %207 = arith.addf %204, %206 : vector<16x32xf32>
    %208 = arith.addf %195, %207 : vector<16x32xf32>
    %c2 = arith.constant 2 : index
    %c0_71 = arith.constant 0 : index
    %209 = vector.load %arg14[%c2, %c0_71] : memref<3x32xf32, #tpu.memory_space<vmem>>, vector<1x32xf32>
    %c2_72 = arith.constant 2 : index
    %c0_73 = arith.constant 0 : index
    %210 = vector.load %arg15[%c2_72, %c0_73] : memref<3x32xf32, #tpu.memory_space<vmem>>, vector<1x32xf32>
    %cst_74 = arith.constant dense<0.000000e+00> : vector<16xf32>
    %211 = vector.multi_reduction <add>, %208, %cst_74 [1] : vector<16x32xf32> to vector<16xf32>
    %212 = vector.shape_cast %211 : vector<16xf32> to vector<16x1xf32>
    %cst_75 = arith.constant 3.200000e+01 : f32
    %213 = vector.broadcast %cst_75 : f32 to vector<16x1xf32>
    %214 = arith.divf %212, %213 : vector<16x1xf32>
    %215 = vector.broadcast %214 : vector<16x1xf32> to vector<16x32xf32>
    %216 = arith.subf %208, %215 : vector<16x32xf32>
    %217 = arith.mulf %216, %216 : vector<16x32xf32>
    %cst_76 = arith.constant dense<0.000000e+00> : vector<16xf32>
    %218 = vector.multi_reduction <add>, %217, %cst_76 [1] : vector<16x32xf32> to vector<16xf32>
    %219 = vector.shape_cast %218 : vector<16xf32> to vector<16x1xf32>
    %cst_77 = arith.constant 3.200000e+01 : f32
    %220 = vector.broadcast %cst_77 : f32 to vector<16x1xf32>
    %221 = arith.divf %219, %220 : vector<16x1xf32>
    %222 = vector.broadcast %214 : vector<16x1xf32> to vector<16x32xf32>
    %223 = arith.subf %208, %222 : vector<16x32xf32>
    %cst_78 = arith.constant 9.99999997E-7 : f32
    %224 = vector.broadcast %cst_78 : f32 to vector<16x1xf32>
    %225 = arith.addf %221, %224 : vector<16x1xf32>
    %226 = math.rsqrt %225 : vector<16x1xf32>
    %227 = vector.broadcast %226 : vector<16x1xf32> to vector<16x32xf32>
    %228 = arith.mulf %223, %227 : vector<16x32xf32>
    %229 = vector.broadcast %209 : vector<1x32xf32> to vector<16x32xf32>
    %230 = arith.mulf %228, %229 : vector<16x32xf32>
    %231 = vector.broadcast %210 : vector<1x32xf32> to vector<16x32xf32>
    %232 = arith.addf %230, %231 : vector<16x32xf32>
    %c0_79 = arith.constant 0 : index
    %c0_80 = arith.constant 0 : index
    %233 = vector.load %arg20[%c0_79, %c0_80] : memref<16x32xf32, #tpu.memory_space<vmem>>, vector<16x32xf32>
    tpu.vector_store %arg20[%c0_79, %c0_80], %232 {strides = array<i32>} : memref<16x32xf32, #tpu.memory_space<vmem>>, vector<16x32xf32>,
    return
  }
}

</mosaic_0001>

<llo_original>
// kernel: tpu_custom_call.1
$region0: #{tpu_custom_call.1}
  #allocation0 [shape = 'u32[]', space=smem, size = 0x4, offset = 0x4, fixed_abs, tag = 'smem constant byte address 0x4 - core index']
  #allocation1 [shape = 'u32[144,128]{1,0:T(1,128)}', space=vmem, size = 0x12000, scoped, tag = 'internal scratch']
  %s0 = inlined_call_operand.hbm [shape: f32[16,32], index: 0, kind: input, shape index: {}]
  %s1 = inlined_call_operand.hbm [shape: f32[16,32], index: 1, kind: input, shape index: {}]
  %s2 = inlined_call_operand.hbm [shape: f32[2,8,8], index: 2, kind: input, shape index: {}]
  %s3 = inlined_call_operand.hbm [shape: f32[2,8,8], index: 3, kind: input, shape index: {}]
  %s4 = inlined_call_operand.vmem [shape: f32[32,96], index: 4, kind: input, shape index: {}]
  %s5 = inlined_call_operand.hbm [shape: f32[1,96], index: 5, kind: input, shape index: {}]
  %s6 = inlined_call_operand.vmem [shape: f32[32,32], index: 6, kind: input, shape index: {}]
  %s7 = inlined_call_operand.hbm [shape: f32[1,32], index: 7, kind: input, shape index: {}]
  %s8 = inlined_call_operand.vmem [shape: f32[32,32], index: 8, kind: input, shape index: {}]
  %s9 = inlined_call_operand.hbm [shape: f32[1,32], index: 9, kind: input, shape index: {}]
  %s10 = inlined_call_operand.vmem [shape: f32[32,64], index: 10, kind: input, shape index: {}]
  %s11 = inlined_call_operand.hbm [shape: f32[1,64], index: 11, kind: input, shape index: {}]
  %s12 = inlined_call_operand.hbm [shape: f32[32,32], index: 12, kind: input, shape index: {}]
  %s13 = inlined_call_operand.hbm [shape: f32[1,32], index: 13, kind: input, shape index: {}]
  %s14 = inlined_call_operand.hbm [shape: f32[3,32], index: 14, kind: input, shape index: {}]
  %s15 = inlined_call_operand.hbm [shape: f32[3,32], index: 15, kind: input, shape index: {}]
  %s16 = inlined_call_operand.hbm [shape: f32[32,64], index: 16, kind: input, shape index: {}]
  %s17 = inlined_call_operand.hbm [shape: f32[1,64], index: 17, kind: input, shape index: {}]
  %s18 = inlined_call_operand.vmem [shape: f32[64,32], index: 18, kind: input, shape index: {}]
  %s19 = inlined_call_operand.vmem [shape: f32[1,32], index: 19, kind: input, shape index: {}]
  %s20 = inlined_call_operand.hbm [shape: f32[16,32], index: 20, kind: output, shape index: {}]
  %s21 = sld [smem:[#allocation0]]
  $region146: #{tpu_custom_call.1} parent=0
    _
  %s23 = ssub.s32 1, %s21
  %s24 = scalar_select 0, %s23, %s21
  $region1: #{tpu_custom_call.1} parent=0
    #allocation2 [shape = 'u8[8192]{0}', space=vmem, size = 0x2000, scoped, tag = 'input window, operand 0, single buffered']
    #allocation3 [shape = 's32[1]{0}', space=sflag, size = 0x4, scoped, tag = 'scoped memory for tpu_custom_call.1']
    #allocation4 [shape = 's32[1]{0}', space=sflag, size = 0x4, scoped, tag = 'scoped memory for tpu_custom_call.1']
    #allocation5 [shape = 'u8[8192]{0}', space=vmem, size = 0x2000, scoped, tag = 'input window, operand 1, single buffered']
    #allocation6 [shape = 's32[1]{0}', space=sflag, size = 0x4, scoped, tag = 'scoped memory for tpu_custom_call.1']
    #allocation7 [shape = 'u8[8192]{0}', space=vmem, size = 0x2000, scoped, tag = 'input window, operand 2, single buffered']
    #allocation8 [shape = 'u8[8192]{0}', space=vmem, size = 0x2000, scoped, tag = 'input window, operand 3, single buffered']
    #allocation9 [shape = 's32[1]{0}', space=sflag, size = 0x4, scoped, tag = 'scoped memory for tpu_custom_call.1']
    #allocation10 [shape = 'u8[512]{0}', space=vmem, size = 0x400, scoped, tag = 'input window, operand 5, single buffered']
    #allocation11 [shape = 'u8[512]{0}', space=vmem, size = 0x400, scoped, tag = 'input window, operand 7, single buffered']
    #allocation12 [shape = 's32[1]{0}', space=sflag, size = 0x4, scoped, tag = 'scoped memory for tpu_custom_call.1']
    #allocation13 [shape = 'u8[512]{0}', space=vmem, size = 0x400, scoped, tag = 'input window, operand 9, single buffered']
    #allocation14 [shape = 'u8[512]{0}', space=vmem, size = 0x400, scoped, tag = 'input window, operand 11, single buffered']
    #allocation15 [shape = 's32[1]{0}', space=sflag, size = 0x4, scoped, tag = 'scoped memory for tpu_custom_call.1']
    #allocation16 [shape = 'u8[16384]{0}', space=vmem, size = 0x4000, scoped, tag = 'input window, operand 12, single buffered']
    #allocation17 [shape = 'u8[512]{0}', space=vmem, size = 0x400, scoped, tag = 'input window, operand 13, single buffered']
    #allocation18 [shape = 's32[1]{0}', space=sflag, size = 0x4, scoped, tag = 'scoped memory for tpu_custom_call.1']
    #allocation19 [shape = 'u8[2048]{0}', space=vmem, size = 0x800, scoped, tag = 'input window, operand 14, single buffered']
    #allocation20 [shape = 'u8[2048]{0}', space=vmem, size = 0x800, scoped, tag = 'input window, operand 15, single buffered']
    #allocation21 [shape = 's32[1]{0}', space=sflag, size = 0x4, scoped, tag = 'scoped memory for tpu_custom_call.1']
    #allocation22 [shape = 'u8[16384]{0}', space=vmem, size = 0x4000, scoped, tag = 'input window, operand 16, single buffered']
    #allocation23 [shape = 'u8[512]{0}', space=vmem, size = 0x400, scoped, tag = 'input window, operand 17, single buffered']
    #allocation24 [shape = 's32[1]{0}', space=sflag, size = 0x4, scoped, tag = 'scoped memory for tpu_custom_call.1']
    #allocation25 [shape = 'u8[8192]{0}', space=vmem, size = 0x2000, scoped, tag = 'output window, operand 0, single buffered']
    %25 = vsyncpa [#allocation3], 0
    %26 = vsyncpa [#allocation6], 0
    %27 = vsyncpa [#allocation9], 0
    %28 = vsyncpa [#allocation12], 0
    %29 = vsyncpa [#allocation15], 0
    %30 = vsyncpa [#allocation18], 0
    %31 = vsyncpa [#allocation21], 0
    %32 = vsyncpa [#allocation24], 0
    %33 = vsyncpa [#allocation4], 0
    // Predicated region
    $region2: #{tpu_custom_call.1} parent=1 // pred_check
      _
    $region3: #{tpu_custom_call.1} parent=1 // pred_check_branch
      %35 = sbr.rel (0) target = $region5
    $region4: #{tpu_custom_call.1} parent=1 // pred_region
      %s37 = ssub.s32 256, 256
      %38 = vsyncadd [#allocation3], %s37
      %s39 = sshll.u32 [#allocation2], 4
      %s40 = int_to_ptr.vmem [resolvable:$true] %s39
      %45 = dma.hbm_to_vmem [thread:$0]  %s0, 256, %s40, [#allocation3], 128, 128, 8
    $region5: #{tpu_custom_call.1} parent=1 // pred_fallthru
      _
    // Predicated region
    $region6: #{tpu_custom_call.1} parent=1 // pred_check
      _
    $region7: #{tpu_custom_call.1} parent=1 // pred_check_branch
      %47 = sbr.rel (0) target = $region9
    $region8: #{tpu_custom_call.1} parent=1 // pred_region
      %s49 = ssub.s32 256, 256
      %50 = vsyncadd [#allocation6], %s49
      %s51 = sshll.u32 [#allocation5], 4
      %s52 = int_to_ptr.vmem [resolvable:$true] %s51
      %57 = dma.hbm_to_vmem [thread:$0]  %s1, 256, %s52, [#allocation6], 128, 128, 8
    $region9: #{tpu_custom_call.1} parent=1 // pred_fallthru
      _
    // Predicated region
    $region10: #{tpu_custom_call.1} parent=1 // pred_check
      _
    $region11: #{tpu_custom_call.1} parent=1 // pred_check_branch
      %59 = sbr.rel (0) target = $region13
    $region12: #{tpu_custom_call.1} parent=1 // pred_region
      %s61 = ssub.s32 256, 256
      %62 = vsyncadd [#allocation6], %s61
      %s63 = sshll.u32 [#allocation7], 4
      %s64 = int_to_ptr.vmem [resolvable:$true] %s63
      %69 = dma.hbm_to_vmem [thread:$0]  %s2, 256, %s64, [#allocation6], 128, 128, 8
    $region13: #{tpu_custom_call.1} parent=1 // pred_fallthru
      _
    // Predicated region
    $region14: #{tpu_custom_call.1} parent=1 // pred_check
      _
    $region15: #{tpu_custom_call.1} parent=1 // pred_check_branch
      %71 = sbr.rel (0) target = $region17
    $region16: #{tpu_custom_call.1} parent=1 // pred_region
      %s73 = ssub.s32 256, 256
      %74 = vsyncadd [#allocation9], %s73
      %s75 = sshll.u32 [#allocation8], 4
      %s76 = int_to_ptr.vmem [resolvable:$true] %s75
      %81 = dma.hbm_to_vmem [thread:$0]  %s3, 256, %s76, [#allocation9], 128, 128, 8
    $region17: #{tpu_custom_call.1} parent=1 // pred_fallthru
      _
    // Predicated region
    $region18: #{tpu_custom_call.1} parent=1 // pred_check
      _
    $region19: #{tpu_custom_call.1} parent=1 // pred_check_branch
      %83 = sbr.rel (0) target = $region21
    $region20: #{tpu_custom_call.1} parent=1 // pred_region
      _
    $region21: #{tpu_custom_call.1} parent=1 // pred_fallthru
      _
    // Predicated region
    $region22: #{tpu_custom_call.1} parent=1 // pred_check
      _
    $region23: #{tpu_custom_call.1} parent=1 // pred_check_branch
      %85 = sbr.rel (0) target = $region25
    $region24: #{tpu_custom_call.1} parent=1 // pred_region
      %s87 = ssub.s32 16, 16
      %88 = vsyncadd [#allocation9], %s87
      %s90 = sshll.u32 [#allocation10], 4
      %s91 = int_to_ptr.vmem [resolvable:$true] %s90
      %93 = dma.hbm_to_vmem [thread:$0]  %s5, 16, %s91, [#allocation9]
    $region25: #{tpu_custom_call.1} parent=1 // pred_fallthru
      _
    // Predicated region
    $region26: #{tpu_custom_call.1} parent=1 // pred_check
      _
    $region27: #{tpu_custom_call.1} parent=1 // pred_check_branch
      %95 = sbr.rel (0) target = $region29
    $region28: #{tpu_custom_call.1} parent=1 // pred_region
      _
    $region29: #{tpu_custom_call.1} parent=1 // pred_fallthru
      _
    // Predicated region
    $region30: #{tpu_custom_call.1} parent=1 // pred_check
      _
    $region31: #{tpu_custom_call.1} parent=1 // pred_check_branch
      %97 = sbr.rel (0) target = $region33
    $region32: #{tpu_custom_call.1} parent=1 // pred_region
      %s99 = ssub.s32 16, 16
      %100 = vsyncadd [#allocation12], %s99
      %s102 = sshll.u32 [#allocation11], 4
      %s103 = int_to_ptr.vmem [resolvable:$true] %s102
      %105 = dma.hbm_to_vmem [thread:$0]  %s7, 16, %s103, [#allocation12]
    $region33: #{tpu_custom_call.1} parent=1 // pred_fallthru
      _
    // Predicated region
    $region34: #{tpu_custom_call.1} parent=1 // pred_check
      _
    $region35: #{tpu_custom_call.1} parent=1 // pred_check_branch
      %107 = sbr.rel (0) target = $region37
    $region36: #{tpu_custom_call.1} parent=1 // pred_region
      _
    $region37: #{tpu_custom_call.1} parent=1 // pred_fallthru
      _
    // Predicated region
    $region38: #{tpu_custom_call.1} parent=1 // pred_check
      _
    $region39: #{tpu_custom_call.1} parent=1 // pred_check_branch
      %109 = sbr.rel (0) target = $region41
    $region40: #{tpu_custom_call.1} parent=1 // pred_region
      %s111 = ssub.s32 16, 16
      %112 = vsyncadd [#allocation12], %s111
      %s114 = sshll.u32 [#allocation13], 4
      %s115 = int_to_ptr.vmem [resolvable:$true] %s114
      %117 = dma.hbm_to_vmem [thread:$0]  %s9, 16, %s115, [#allocation12]
    $region41: #{tpu_custom_call.1} parent=1 // pred_fallthru
      _
    // Predicated region
    $region42: #{tpu_custom_call.1} parent=1 // pred_check
      _
    $region43: #{tpu_custom_call.1} parent=1 // pred_check_branch
      %119 = sbr.rel (0) target = $region45
    $region44: #{tpu_custom_call.1} parent=1 // pred_region
      _
    $region45: #{tpu_custom_call.1} parent=1 // pred_fallthru
      _
    // Predicated region
    $region46: #{tpu_custom_call.1} parent=1 // pred_check
      _
    $region47: #{tpu_custom_call.1} parent=1 // pred_check_branch
      %121 = sbr.rel (0) target = $region49
    $region48: #{tpu_custom_call.1} parent=1 // pred_region
      %s123 = ssub.s32 16, 16
      %124 = vsyncadd [#allocation15], %s123
      %s126 = sshll.u32 [#allocation14], 4
      %s127 = int_to_ptr.vmem [resolvable:$true] %s126
      %129 = dma.hbm_to_vmem [thread:$0]  %s11, 16, %s127, [#allocation15]
    $region49: #{tpu_custom_call.1} parent=1 // pred_fallthru
      _
    // Predicated region
    $region50: #{tpu_custom_call.1} parent=1 // pred_check
      _
    $region51: #{tpu_custom_call.1} parent=1 // pred_check_branch
      %131 = sbr.rel (0) target = $region53
    $region52: #{tpu_custom_call.1} parent=1 // pred_region
      %s133 = ssub.s32 512, 512
      %134 = vsyncadd [#allocation15], %s133
      %s135 = sshll.u32 [#allocation16], 4
      %s136 = int_to_ptr.vmem [resolvable:$true] %s135
      %141 = dma.hbm_to_vmem [thread:$0]  %s12, 512, %s136, [#allocation15], 128, 128, 8
    $region53: #{tpu_custom_call.1} parent=1 // pred_fallthru
      _
    // Predicated region
    $region54: #{tpu_custom_call.1} parent=1 // pred_check
      _
    $region55: #{tpu_custom_call.1} parent=1 // pred_check_branch
      %143 = sbr.rel (0) target = $region57
    $region56: #{tpu_custom_call.1} parent=1 // pred_region
      %s145 = ssub.s32 16, 16
      %146 = vsyncadd [#allocation18], %s145
      %s148 = sshll.u32 [#allocation17], 4
      %s149 = int_to_ptr.vmem [resolvable:$true] %s148
      %151 = dma.hbm_to_vmem [thread:$0]  %s13, 16, %s149, [#allocation18]
    $region57: #{tpu_custom_call.1} parent=1 // pred_fallthru
      _
    // Predicated region
    $region58: #{tpu_custom_call.1} parent=1 // pred_check
      _
    $region59: #{tpu_custom_call.1} parent=1 // pred_check_branch
      %153 = sbr.rel (0) target = $region61
    $region60: #{tpu_custom_call.1} parent=1 // pred_region
      %s155 = ssub.s32 64, 64
      %156 = vsyncadd [#allocation18], %s155
      %s158 = sshll.u32 [#allocation19], 4
      %s159 = int_to_ptr.vmem [resolvable:$true] %s158
      %161 = dma.hbm_to_vmem [thread:$0]  %s14, 64, %s159, [#allocation18]
    $region61: #{tpu_custom_call.1} parent=1 // pred_fallthru
      _
    // Predicated region
    $region62: #{tpu_custom_call.1} parent=1 // pred_check
      _
    $region63: #{tpu_custom_call.1} parent=1 // pred_check_branch
      %163 = sbr.rel (0) target = $region65
    $region64: #{tpu_custom_call.1} parent=1 // pred_region
      %s165 = ssub.s32 64, 64
      %166 = vsyncadd [#allocation21], %s165
      %s168 = sshll.u32 [#allocation20], 4
      %s169 = int_to_ptr.vmem [resolvable:$true] %s168
      %171 = dma.hbm_to_vmem [thread:$0]  %s15, 64, %s169, [#allocation21]
    $region65: #{tpu_custom_call.1} parent=1 // pred_fallthru
      _
    // Predicated region
    $region66: #{tpu_custom_call.1} parent=1 // pred_check
      _
    $region67: #{tpu_custom_call.1} parent=1 // pred_check_branch
      %173 = sbr.rel (0) target = $region69
    $region68: #{tpu_custom_call.1} parent=1 // pred_region
      %s175 = ssub.s32 512, 512
      %176 = vsyncadd [#allocation21], %s175
      %s177 = sshll.u32 [#allocation22], 4
      %s178 = int_to_ptr.vmem [resolvable:$true] %s177
      %183 = dma.hbm_to_vmem [thread:$0]  %s16, 512, %s178, [#allocation21], 128, 128, 8
    $region69: #{tpu_custom_call.1} parent=1 // pred_fallthru
      _
    // Predicated region
    $region70: #{tpu_custom_call.1} parent=1 // pred_check
      _
    $region71: #{tpu_custom_call.1} parent=1 // pred_check_branch
      %185 = sbr.rel (0) target = $region73
    $region72: #{tpu_custom_call.1} parent=1 // pred_region
      %s187 = ssub.s32 16, 16
      %188 = vsyncadd [#allocation24], %s187
      %s190 = sshll.u32 [#allocation23], 4
      %s191 = int_to_ptr.vmem [resolvable:$true] %s190
      %193 = dma.hbm_to_vmem [thread:$0]  %s17, 16, %s191, [#allocation24]
    $region73: #{tpu_custom_call.1} parent=1 // pred_fallthru
      _
    // Predicated region
    $region74: #{tpu_custom_call.1} parent=1 // pred_check
      _
    $region75: #{tpu_custom_call.1} parent=1 // pred_check_branch
      %195 = sbr.rel (0) target = $region77
    $region76: #{tpu_custom_call.1} parent=1 // pred_region
      _
    $region77: #{tpu_custom_call.1} parent=1 // pred_fallthru
      _
    // Predicated region
    $region78: #{tpu_custom_call.1} parent=1 // pred_check
      _
    $region79: #{tpu_custom_call.1} parent=1 // pred_check_branch
      %197 = sbr.rel (0) target = $region81
    $region80: #{tpu_custom_call.1} parent=1 // pred_region
      _
    $region81: #{tpu_custom_call.1} parent=1 // pred_fallthru
      _
    // Predicated region
    $region82: #{tpu_custom_call.1} parent=1 // pred_check
      _
    $region83: #{tpu_custom_call.1} parent=1 // pred_check_branch
      %199 = sbr.rel (0) target = $region85
    $region84: #{tpu_custom_call.1} parent=1 // pred_region
      %200 = dma.done [#allocation3], 256
    $region85: #{tpu_custom_call.1} parent=1 // pred_fallthru
      _
    // Predicated region
    $region86: #{tpu_custom_call.1} parent=1 // pred_check
      _
    $region87: #{tpu_custom_call.1} parent=1 // pred_check_branch
      %202 = sbr.rel (0) target = $region89
    $region88: #{tpu_custom_call.1} parent=1 // pred_region
      %203 = dma.done [#allocation6], 256
    $region89: #{tpu_custom_call.1} parent=1 // pred_fallthru
      _
    // Predicated region
    $region90: #{tpu_custom_call.1} parent=1 // pred_check
      _
    $region91: #{tpu_custom_call.1} parent=1 // pred_check_branch
      %205 = sbr.rel (0) target = $region93
    $region92: #{tpu_custom_call.1} parent=1 // pred_region
      %206 = dma.done [#allocation6], 256
    $region93: #{tpu_custom_call.1} parent=1 // pred_fallthru
      _
    // Predicated region
    $region94: #{tpu_custom_call.1} parent=1 // pred_check
      _
    $region95: #{tpu_custom_call.1} parent=1 // pred_check_branch
      %208 = sbr.rel (0) target = $region97
    $region96: #{tpu_custom_call.1} parent=1 // pred_region
      %209 = dma.done [#allocation9], 256
    $region97: #{tpu_custom_call.1} parent=1 // pred_fallthru
      _
    // Predicated region
    $region98: #{tpu_custom_call.1} parent=1 // pred_check
      _
    $region99: #{tpu_custom_call.1} parent=1 // pred_check_branch
      %211 = sbr.rel (0) target = $region101
    $region100: #{tpu_custom_call.1} parent=1 // pred_region
      %212 = dma.done [#allocation9], 16
    $region101: #{tpu_custom_call.1} parent=1 // pred_fallthru
      _
    // Predicated region
    $region102: #{tpu_custom_call.1} parent=1 // pred_check
      _
    $region103: #{tpu_custom_call.1} parent=1 // pred_check_branch
      %214 = sbr.rel (0) target = $region105
    $region104: #{tpu_custom_call.1} parent=1 // pred_region
      %215 = dma.done [#allocation12], 16
    $region105: #{tpu_custom_call.1} parent=1 // pred_fallthru
      _
    // Predicated region
    $region106: #{tpu_custom_call.1} parent=1 // pred_check
      _
    $region107: #{tpu_custom_call.1} parent=1 // pred_check_branch
      %217 = sbr.rel (0) target = $region109
    $region108: #{tpu_custom_call.1} parent=1 // pred_region
      %218 = dma.done [#allocation12], 16
    $region109: #{tpu_custom_call.1} parent=1 // pred_fallthru
      _
    // Predicated region
    $region110: #{tpu_custom_call.1} parent=1 // pred_check
      _
    $region111: #{tpu_custom_call.1} parent=1 // pred_check_branch
      %220 = sbr.rel (0) target = $region113
    $region112: #{tpu_custom_call.1} parent=1 // pred_region
      %221 = dma.done [#allocation15], 16
    $region113: #{tpu_custom_call.1} parent=1 // pred_fallthru
      _
    // Predicated region
    $region114: #{tpu_custom_call.1} parent=1 // pred_check
      _
    $region115: #{tpu_custom_call.1} parent=1 // pred_check_branch
      %223 = sbr.rel (0) target = $region117
    $region116: #{tpu_custom_call.1} parent=1 // pred_region
      %224 = dma.done [#allocation15], 512
    $region117: #{tpu_custom_call.1} parent=1 // pred_fallthru
      _
    // Predicated region
    $region118: #{tpu_custom_call.1} parent=1 // pred_check
      _
    $region119: #{tpu_custom_call.1} parent=1 // pred_check_branch
      %226 = sbr.rel (0) target = $region121
    $region120: #{tpu_custom_call.1} parent=1 // pred_region
      %227 = dma.done [#allocation18], 16
    $region121: #{tpu_custom_call.1} parent=1 // pred_fallthru
      _
    // Predicated region
    $region122: #{tpu_custom_call.1} parent=1 // pred_check
      _
    $region123: #{tpu_custom_call.1} parent=1 // pred_check_branch
      %229 = sbr.rel (0) target = $region125
    $region124: #{tpu_custom_call.1} parent=1 // pred_region
      %230 = dma.done [#allocation18], 64
    $region125: #{tpu_custom_call.1} parent=1 // pred_fallthru
      _
    // Predicated region
    $region126: #{tpu_custom_call.1} parent=1 // pred_check
      _
    $region127: #{tpu_custom_call.1} parent=1 // pred_check_branch
      %232 = sbr.rel (0) target = $region129
    $region128: #{tpu_custom_call.1} parent=1 // pred_region
      %233 = dma.done [#allocation21], 64
    $region129: #{tpu_custom_call.1} parent=1 // pred_fallthru
      _
    // Predicated region
    $region130: #{tpu_custom_call.1} parent=1 // pred_check
      _
    $region131: #{tpu_custom_call.1} parent=1 // pred_check_branch
      %235 = sbr.rel (0) target = $region133
    $region132: #{tpu_custom_call.1} parent=1 // pred_region
      %236 = dma.done [#allocation21], 512
    $region133: #{tpu_custom_call.1} parent=1 // pred_fallthru
      _
    // Predicated region
    $region134: #{tpu_custom_call.1} parent=1 // pred_check
      _
    $region135: #{tpu_custom_call.1} parent=1 // pred_check_branch
      %238 = sbr.rel (0) target = $region137
    $region136: #{tpu_custom_call.1} parent=1 // pred_region
      %239 = dma.done [#allocation24], 16
    $region137: #{tpu_custom_call.1} parent=1 // pred_fallthru
      _
    %v240 = vld [vmem:[#allocation2] sm:$0xff]
    %v241 = vld [vmem:[#allocation2 + $0x8] sm:$0xff]
    %v242 = vld [vmem:[#allocation5] sm:$0xff]
    %v243 = vld [vmem:[#allocation5 + $0x8] sm:$0xff]
    %v244 = vld [vmem:[%s4] sm:$0xff]
    %v245 = vld [vmem:[%s4 + $0x8] sm:$0xff]
    %v246 = vld [vmem:[%s4 + $0x10] sm:$0xff]
    %v247 = vld [vmem:[%s4 + $0x18] sm:$0xff]
    %v248 = vld [vmem:[#allocation10] sm:$0x1]
    %v250 = vlaneseq
    %v251 = vshrl.u32 %v250, 7
    %v252 = vsub.s32 0, %v251
    %v253 = vrot.slane %v248, %v252
    %vm255 = vcmask 261120
    %v257 = vsel %vm255, %v240, 0
    %v260 = vsel %vm255, %v241, 0
    %262 = vmatprep.subr.mxu0 0.0
    %263 = vmatpush1.msra.mxu0 %v244
    %264 = vmatprep.subr.mxu0 0.0
    %265 = vmatpush1.msra.mxu0 %v245
    %266 = vmatprep.subr.mxu0 0.0
    %267 = vmatpush1.msra.mxu0 %v246
    %268 = vmatprep.subr.mxu0 0.0
    %269 = vmatpush1.msra.mxu0 %v247
    %270 = vmatprep.subr.mxu0 0.0
    %271 = vmatpush1.msra.mxu0 0.0
    %272 = vmatprep.subr.mxu0 0.0
    %273 = vmatpush1.msra.mxu0 0.0
    %274 = vmatprep.subr.mxu0 0.0
    %275 = vmatpush1.msra.mxu0 0.0
    %276 = vmatprep.subr.mxu0 0.0
    %277 = vmatpush1.msra.mxu0 0.0
    %278 = vmatprep.subr.mxu0 0.0
    %279 = vmatpush1.msra.mxu0 0.0
    %280 = vmatprep.subr.mxu0 0.0
    %281 = vmatpush1.msra.mxu0 0.0
    %282 = vmatprep.subr.mxu0 0.0
    %283 = vmatpush1.msra.mxu0 0.0
    %284 = vmatprep.subr.mxu0 0.0
    %285 = vmatpush1.msra.mxu0 0.0
    %286 = vmatprep.subr.mxu0 0.0
    %287 = vmatpush1.msra.mxu0 0.0
    %288 = vmatprep.subr.mxu0 0.0
    %289 = vmatpush1.msra.mxu0 0.0
    %290 = vmatprep.subr.mxu0 0.0
    %291 = vmatpush1.msra.mxu0 0.0
    %292 = vmatprep.subr.mxu0 0.0
    %293 = vmatpush1.msra.mxu0 0.0
    %294 = vmatprep.subr.mxu0 0.0
    %295 = vmatpush1.msra.mxu0 0.0
    %296 = vmatprep.subr.mxu0 0.0
    %297 = vmatpush1.msra.mxu0 0.0
    %298 = vmatprep.subr.mxu0 0.0
    %299 = vmatpush1.msra.mxu0 0.0
    %300 = vmatprep.subr.mxu0 0.0
    %301 = vmatpush1.msra.mxu0 0.0
    %302 = vmatprep.subr.mxu0 0.0
    %303 = vmatpush1.msra.mxu0 0.0
    %304 = vmatprep.subr.mxu0 0.0
    %305 = vmatpush1.msra.mxu0 0.0
    %306 = vmatprep.subr.mxu0 0.0
    %307 = vmatpush1.msra.mxu0 0.0
    %308 = vmatprep.subr.mxu0 0.0
    %309 = vmatpush1.msra.mxu0 0.0
    %310 = vmatprep.subr.mxu0 0.0
    %311 = vmatpush1.msra.mxu0 0.0
    %312 = vmatprep.subr.mxu0 0.0
    %313 = vmatpush1.msra.mxu0 0.0
    %314 = vmatprep.subr.mxu0 0.0
    %315 = vmatpush1.msra.mxu0 0.0
    %316 = vmatprep.subr.mxu0 0.0
    %317 = vmatpush1.msra.mxu0 0.0
    %318 = vmatprep.subr.mxu0 0.0
    %319 = vmatpush1.msra.mxu0 0.0
    %320 = vmatprep.subr.mxu0 0.0
    %321 = vmatpush1.msra.mxu0 0.0
    %322 = vmatprep.subr.mxu0 0.0
    %323 = vmatpush1.msra.mxu0 0.0
    %324 = vmatprep.subr.mxu0 0.0
    %325 = vmatpush1.msra.mxu0 0.0
    %326 = vmatprep.mubr.f32.mxu0 0.0
    %327 = vmatmul.mubr.f32.gmra.mrb[0].mxu0 %v257
    %v328 = vpop.f32.mrb[0].mxu0
    %v329 = vadd.f32 %v253, %v328
    %v330 = vpop.f32.mrb[0].mxu0
    %331 = vmatprep.mubr.f32.mxu0 0.0
    %332 = vmatmul.mubr.f32.gmra.mrb[0].mxu0 %v260
    %v333 = vpop.f32.mrb[0].mxu0
    %v334 = vadd.f32 %v253, %v333
    %v335 = vpop.f32.mrb[0].mxu0
    %336 = vdwg.mxu0
    %v337 = vld [vmem:[#allocation8] sm:$0xff]
    %v338 = vld [vmem:[#allocation8 + $0x8] sm:$0xff]
    %v339 = vld [vmem:[%s6] sm:$0xff]
    %v340 = vld [vmem:[%s6 + $0x8] sm:$0xff]
    %v341 = vld [vmem:[%s6 + $0x10] sm:$0xff]
    %v342 = vld [vmem:[%s6 + $0x18] sm:$0xff]
    %v343 = vld [vmem:[#allocation11] sm:$0x1]
    %v344 = vmul.f32 %v329, 0.35355338
    %v345 = vmul.f32 %v334, 0.35355338
    %348 = vrot.lane.b32.xlu0 %v344, 120
    %v349 = vpop.permute.xlu0 %348
    %350 = vrot.lane.b32.xlu0 %v345, 120
    %v351 = vpop.permute.xlu0 %350
    %352 = vrot.lane.b32.xlu0 %v344, 112
    %v353 = vpop.permute.xlu0 %352
    %354 = vrot.lane.b32.xlu0 %v345, 112
    %v355 = vpop.permute.xlu0 %354
    %356 = vrot.lane.b32.xlu0 %v344, 104
    %v357 = vpop.permute.xlu0 %356
    %358 = vrot.lane.b32.xlu0 %v345, 104
    %v359 = vpop.permute.xlu0 %358
    %362 = vrot.lane.b32.xlu0 %v329, 120
    %v363 = vpop.permute.xlu0 %362
    %364 = vrot.lane.b32.xlu0 %v334, 120
    %v365 = vpop.permute.xlu0 %364
    %366 = vrot.lane.b32.xlu0 %v329, 112
    %v367 = vpop.permute.xlu0 %366
    %368 = vrot.lane.b32.xlu0 %v334, 112
    %v369 = vpop.permute.xlu0 %368
    %370 = vrot.lane.b32.xlu0 %v329, 104
    %v371 = vpop.permute.xlu0 %370
    %372 = vrot.lane.b32.xlu0 %v334, 104
    %v373 = vpop.permute.xlu0 %372
    %374 = vrot.lane.b32.xlu0 %v329, 96
    %v375 = vpop.permute.xlu0 %374
    %vm376 = vcmask 64512
    %v377 = vsel %vm376, %v344, 0
    %v379 = vsel %vm376, %v375, 0
    %381 = vmatprep.subr.mxu0 0.0
    %382 = vmatpush1.xpose.msra.mxu0 %v379
    %383 = vmatprep.subr.mxu0 0.0
    %384 = vmatpush1.xpose.msra.mxu0 0.0
    %385 = vmatprep.subr.mxu0 0.0
    %386 = vmatpush1.xpose.msra.mxu0 0.0
    %387 = vmatprep.subr.mxu0 0.0
    %388 = vmatpush1.xpose.msra.mxu0 0.0
    %389 = vmatprep.subr.mxu0 0.0
    %390 = vmatpush1.xpose.msra.mxu0 0.0
    %391 = vmatprep.subr.mxu0 0.0
    %392 = vmatpush1.xpose.msra.mxu0 0.0
    %393 = vmatprep.subr.mxu0 0.0
    %394 = vmatpush1.xpose.msra.mxu0 0.0
    %395 = vmatprep.subr.mxu0 0.0
    %396 = vmatpush1.xpose.msra.mxu0 0.0
    %397 = vmatprep.subr.mxu0 0.0
    %398 = vmatpush1.xpose.msra.mxu0 0.0
    %399 = vmatprep.subr.mxu0 0.0
    %400 = vmatpush1.xpose.msra.mxu0 0.0
    %401 = vmatprep.subr.mxu0 0.0
    %402 = vmatpush1.xpose.msra.mxu0 0.0
    %403 = vmatprep.subr.mxu0 0.0
    %404 = vmatpush1.xpose.msra.mxu0 0.0
    %405 = vmatprep.subr.mxu0 0.0
    %406 = vmatpush1.xpose.msra.mxu0 0.0
    %407 = vmatprep.subr.mxu0 0.0
    %408 = vmatpush1.xpose.msra.mxu0 0.0
    %409 = vmatprep.subr.mxu0 0.0
    %410 = vmatpush1.xpose.msra.mxu0 0.0
    %411 = vmatprep.subr.mxu0 0.0
    %412 = vmatpush1.xpose.msra.mxu0 0.0
    %413 = vmatprep.subr.mxu0 0.0
    %414 = vmatpush1.xpose.msra.mxu0 0.0
    %415 = vmatprep.subr.mxu0 0.0
    %416 = vmatpush1.xpose.msra.mxu0 0.0
    %417 = vmatprep.subr.mxu0 0.0
    %418 = vmatpush1.xpose.msra.mxu0 0.0
    %419 = vmatprep.subr.mxu0 0.0
    %420 = vmatpush1.xpose.msra.mxu0 0.0
    %421 = vmatprep.subr.mxu0 0.0
    %422 = vmatpush1.xpose.msra.mxu0 0.0
    %423 = vmatprep.subr.mxu0 0.0
    %424 = vmatpush1.xpose.msra.mxu0 0.0
    %425 = vmatprep.subr.mxu0 0.0
    %426 = vmatpush1.xpose.msra.mxu0 0.0
    %427 = vmatprep.subr.mxu0 0.0
    %428 = vmatpush1.xpose.msra.mxu0 0.0
    %429 = vmatprep.subr.mxu0 0.0
    %430 = vmatpush1.xpose.msra.mxu0 0.0
    %431 = vmatprep.subr.mxu0 0.0
    %432 = vmatpush1.xpose.msra.mxu0 0.0
    %433 = vmatprep.subr.mxu0 0.0
    %434 = vmatpush1.xpose.msra.mxu0 0.0
    %435 = vmatprep.subr.mxu0 0.0
    %436 = vmatpush1.xpose.msra.mxu0 0.0
    %437 = vmatprep.subr.mxu0 0.0
    %438 = vmatpush1.xpose.msra.mxu0 0.0
    %439 = vmatprep.subr.mxu0 0.0
    %440 = vmatpush1.xpose.msra.mxu0 0.0
    %441 = vmatprep.subr.mxu0 0.0
    %442 = vmatpush1.xpose.msra.mxu0 0.0
    %443 = vmatprep.subr.mxu0 0.0
    %444 = vmatpush1.xpose.msra.mxu0 0.0
    %445 = vmatprep.mubr.f32.mxu0 0.0
    %446 = vmatmul.mubr.f32.gmra.mrb[0].mxu0 %v377
    %v447 = vpop.f32.mrb[0].mxu0
    %v448 = vadd.f32 %v337, %v447
    %v449 = vpop.f32.mrb[0].mxu0
    %450 = vdwg.mxu0
    %451 = vrot.lane.b32.xlu0 %v334, 96
    %v452 = vpop.permute.xlu0 %451
    %v453 = vsel %vm376, %v345, 0
    %v455 = vsel %vm376, %v452, 0
    %457 = vmatprep.subr.mxu0 0.0
    %458 = vmatpush1.xpose.msra.mxu0 %v455
    %459 = vmatprep.subr.mxu0 0.0
    %460 = vmatpush1.xpose.msra.mxu0 0.0
    %461 = vmatprep.subr.mxu0 0.0
    %462 = vmatpush1.xpose.msra.mxu0 0.0
    %463 = vmatprep.subr.mxu0 0.0
    %464 = vmatpush1.xpose.msra.mxu0 0.0
    %465 = vmatprep.subr.mxu0 0.0
    %466 = vmatpush1.xpose.msra.mxu0 0.0
    %467 = vmatprep.subr.mxu0 0.0
    %468 = vmatpush1.xpose.msra.mxu0 0.0
    %469 = vmatprep.subr.mxu0 0.0
    %470 = vmatpush1.xpose.msra.mxu0 0.0
    %471 = vmatprep.subr.mxu0 0.0
    %472 = vmatpush1.xpose.msra.mxu0 0.0
    %473 = vmatprep.subr.mxu0 0.0
    %474 = vmatpush1.xpose.msra.mxu0 0.0
    %475 = vmatprep.subr.mxu0 0.0
    %476 = vmatpush1.xpose.msra.mxu0 0.0
    %477 = vmatprep.subr.mxu0 0.0
    %478 = vmatpush1.xpose.msra.mxu0 0.0
    %479 = vmatprep.subr.mxu0 0.0
    %480 = vmatpush1.xpose.msra.mxu0 0.0
    %481 = vmatprep.subr.mxu0 0.0
    %482 = vmatpush1.xpose.msra.mxu0 0.0
    %483 = vmatprep.subr.mxu0 0.0
    %484 = vmatpush1.xpose.msra.mxu0 0.0
    %485 = vmatprep.subr.mxu0 0.0
    %486 = vmatpush1.xpose.msra.mxu0 0.0
    %487 = vmatprep.subr.mxu0 0.0
    %488 = vmatpush1.xpose.msra.mxu0 0.0
    %489 = vmatprep.subr.mxu0 0.0
    %490 = vmatpush1.xpose.msra.mxu0 0.0
    %491 = vmatprep.subr.mxu0 0.0
    %492 = vmatpush1.xpose.msra.mxu0 0.0
    %493 = vmatprep.subr.mxu0 0.0
    %494 = vmatpush1.xpose.msra.mxu0 0.0
    %495 = vmatprep.subr.mxu0 0.0
    %496 = vmatpush1.xpose.msra.mxu0 0.0
    %497 = vmatprep.subr.mxu0 0.0
    %498 = vmatpush1.xpose.msra.mxu0 0.0
    %499 = vmatprep.subr.mxu0 0.0
    %500 = vmatpush1.xpose.msra.mxu0 0.0
    %501 = vmatprep.subr.mxu0 0.0
    %502 = vmatpush1.xpose.msra.mxu0 0.0
    %503 = vmatprep.subr.mxu0 0.0
    %504 = vmatpush1.xpose.msra.mxu0 0.0
    %505 = vmatprep.subr.mxu0 0.0
    %506 = vmatpush1.xpose.msra.mxu0 0.0
    %507 = vmatprep.subr.mxu0 0.0
    %508 = vmatpush1.xpose.msra.mxu0 0.0
    %509 = vmatprep.subr.mxu0 0.0
    %510 = vmatpush1.xpose.msra.mxu0 0.0
    %511 = vmatprep.subr.mxu0 0.0
    %512 = vmatpush1.xpose.msra.mxu0 0.0
    %513 = vmatprep.subr.mxu0 0.0
    %514 = vmatpush1.xpose.msra.mxu0 0.0
    %515 = vmatprep.subr.mxu0 0.0
    %516 = vmatpush1.xpose.msra.mxu0 0.0
    %517 = vmatprep.subr.mxu0 0.0
    %518 = vmatpush1.xpose.msra.mxu0 0.0
    %519 = vmatprep.subr.mxu0 0.0
    %520 = vmatpush1.xpose.msra.mxu0 0.0
    %521 = vmatprep.mubr.f32.mxu0 0.0
    %522 = vmatmul.mubr.f32.gmra.mrb[0].mxu0 %v453
    %v523 = vpop.f32.mrb[0].mxu0
    %v524 = vadd.f32 %v338, %v523
    %v525 = vpop.f32.mrb[0].mxu0
    %526 = vdwg.mxu0
    %527 = vrot.lane.b32.xlu0 %v363, 96
    %v528 = vpop.permute.xlu0 %527
    %v529 = vsel %vm376, %v349, 0
    %v531 = vsel %vm376, %v528, 0
    %533 = vmatprep.subr.mxu0 0.0
    %534 = vmatpush1.xpose.msra.mxu0 %v531
    %535 = vmatprep.subr.mxu0 0.0
    %536 = vmatpush1.xpose.msra.mxu0 0.0
    %537 = vmatprep.subr.mxu0 0.0
    %538 = vmatpush1.xpose.msra.mxu0 0.0
    %539 = vmatprep.subr.mxu0 0.0
    %540 = vmatpush1.xpose.msra.mxu0 0.0
    %541 = vmatprep.subr.mxu0 0.0
    %542 = vmatpush1.xpose.msra.mxu0 0.0
    %543 = vmatprep.subr.mxu0 0.0
    %544 = vmatpush1.xpose.msra.mxu0 0.0
    %545 = vmatprep.subr.mxu0 0.0
    %546 = vmatpush1.xpose.msra.mxu0 0.0
    %547 = vmatprep.subr.mxu0 0.0
    %548 = vmatpush1.xpose.msra.mxu0 0.0
    %549 = vmatprep.subr.mxu0 0.0
    %550 = vmatpush1.xpose.msra.mxu0 0.0
    %551 = vmatprep.subr.mxu0 0.0
    %552 = vmatpush1.xpose.msra.mxu0 0.0
    %553 = vmatprep.subr.mxu0 0.0
    %554 = vmatpush1.xpose.msra.mxu0 0.0
    %555 = vmatprep.subr.mxu0 0.0
    %556 = vmatpush1.xpose.msra.mxu0 0.0
    %557 = vmatprep.subr.mxu0 0.0
    %558 = vmatpush1.xpose.msra.mxu0 0.0
    %559 = vmatprep.subr.mxu0 0.0
    %560 = vmatpush1.xpose.msra.mxu0 0.0
    %561 = vmatprep.subr.mxu0 0.0
    %562 = vmatpush1.xpose.msra.mxu0 0.0
    %563 = vmatprep.subr.mxu0 0.0
    %564 = vmatpush1.xpose.msra.mxu0 0.0
    %565 = vmatprep.subr.mxu0 0.0
    %566 = vmatpush1.xpose.msra.mxu0 0.0
    %567 = vmatprep.subr.mxu0 0.0
    %568 = vmatpush1.xpose.msra.mxu0 0.0
    %569 = vmatprep.subr.mxu0 0.0
    %570 = vmatpush1.xpose.msra.mxu0 0.0
    %571 = vmatprep.subr.mxu0 0.0
    %572 = vmatpush1.xpose.msra.mxu0 0.0
    %573 = vmatprep.subr.mxu0 0.0
    %574 = vmatpush1.xpose.msra.mxu0 0.0
    %575 = vmatprep.subr.mxu0 0.0
    %576 = vmatpush1.xpose.msra.mxu0 0.0
    %577 = vmatprep.subr.mxu0 0.0
    %578 = vmatpush1.xpose.msra.mxu0 0.0
    %579 = vmatprep.subr.mxu0 0.0
    %580 = vmatpush1.xpose.msra.mxu0 0.0
    %581 = vmatprep.subr.mxu0 0.0
    %582 = vmatpush1.xpose.msra.mxu0 0.0
    %583 = vmatprep.subr.mxu0 0.0
    %584 = vmatpush1.xpose.msra.mxu0 0.0
    %585 = vmatprep.subr.mxu0 0.0
    %586 = vmatpush1.xpose.msra.mxu0 0.0
    %587 = vmatprep.subr.mxu0 0.0
    %588 = vmatpush1.xpose.msra.mxu0 0.0
    %589 = vmatprep.subr.mxu0 0.0
    %590 = vmatpush1.xpose.msra.mxu0 0.0
    %591 = vmatprep.subr.mxu0 0.0
    %592 = vmatpush1.xpose.msra.mxu0 0.0
    %593 = vmatprep.subr.mxu0 0.0
    %594 = vmatpush1.xpose.msra.mxu0 0.0
    %595 = vmatprep.subr.mxu0 0.0
    %596 = vmatpush1.xpose.msra.mxu0 0.0
    %597 = vmatprep.mubr.f32.mxu0 0.0
    %598 = vmatmul.mubr.f32.gmra.mrb[0].mxu0 %v529
    %v599 = vpop.f32.mrb[0].mxu0
    %v600 = vadd.f32 %v337, %v599
    %v601 = vpop.f32.mrb[0].mxu0
    %602 = vdwg.mxu0
    %603 = vrot.lane.b32.xlu0 %v365, 96
    %v604 = vpop.permute.xlu0 %603
    %v605 = vsel %vm376, %v351, 0
    %v607 = vsel %vm376, %v604, 0
    %609 = vmatprep.subr.mxu0 0.0
    %610 = vmatpush1.xpose.msra.mxu0 %v607
    %611 = vmatprep.subr.mxu0 0.0
    %612 = vmatpush1.xpose.msra.mxu0 0.0
    %613 = vmatprep.subr.mxu0 0.0
    %614 = vmatpush1.xpose.msra.mxu0 0.0
    %615 = vmatprep.subr.mxu0 0.0
    %616 = vmatpush1.xpose.msra.mxu0 0.0
    %617 = vmatprep.subr.mxu0 0.0
    %618 = vmatpush1.xpose.msra.mxu0 0.0
    %619 = vmatprep.subr.mxu0 0.0
    %620 = vmatpush1.xpose.msra.mxu0 0.0
    %621 = vmatprep.subr.mxu0 0.0
    %622 = vmatpush1.xpose.msra.mxu0 0.0
    %623 = vmatprep.subr.mxu0 0.0
    %624 = vmatpush1.xpose.msra.mxu0 0.0
    %625 = vmatprep.subr.mxu0 0.0
    %626 = vmatpush1.xpose.msra.mxu0 0.0
    %627 = vmatprep.subr.mxu0 0.0
    %628 = vmatpush1.xpose.msra.mxu0 0.0
    %629 = vmatprep.subr.mxu0 0.0
    %630 = vmatpush1.xpose.msra.mxu0 0.0
    %631 = vmatprep.subr.mxu0 0.0
    %632 = vmatpush1.xpose.msra.mxu0 0.0
    %633 = vmatprep.subr.mxu0 0.0
    %634 = vmatpush1.xpose.msra.mxu0 0.0
    %635 = vmatprep.subr.mxu0 0.0
    %636 = vmatpush1.xpose.msra.mxu0 0.0
    %637 = vmatprep.subr.mxu0 0.0
    %638 = vmatpush1.xpose.msra.mxu0 0.0
    %639 = vmatprep.subr.mxu0 0.0
    %640 = vmatpush1.xpose.msra.mxu0 0.0
    %641 = vmatprep.subr.mxu0 0.0
    %642 = vmatpush1.xpose.msra.mxu0 0.0
    %643 = vmatprep.subr.mxu0 0.0
    %644 = vmatpush1.xpose.msra.mxu0 0.0
    %645 = vmatprep.subr.mxu0 0.0
    %646 = vmatpush1.xpose.msra.mxu0 0.0
    %647 = vmatprep.subr.mxu0 0.0
    %648 = vmatpush1.xpose.msra.mxu0 0.0
    %649 = vmatprep.subr.mxu0 0.0
    %650 = vmatpush1.xpose.msra.mxu0 0.0
    %651 = vmatprep.subr.mxu0 0.0
    %652 = vmatpush1.xpose.msra.mxu0 0.0
    %653 = vmatprep.subr.mxu0 0.0
    %654 = vmatpush1.xpose.msra.mxu0 0.0
    %655 = vmatprep.subr.mxu0 0.0
    %656 = vmatpush1.xpose.msra.mxu0 0.0
    %657 = vmatprep.subr.mxu0 0.0
    %658 = vmatpush1.xpose.msra.mxu0 0.0
    %659 = vmatprep.subr.mxu0 0.0
    %660 = vmatpush1.xpose.msra.mxu0 0.0
    %661 = vmatprep.subr.mxu0 0.0
    %662 = vmatpush1.xpose.msra.mxu0 0.0
    %663 = vmatprep.subr.mxu0 0.0
    %664 = vmatpush1.xpose.msra.mxu0 0.0
    %665 = vmatprep.subr.mxu0 0.0
    %666 = vmatpush1.xpose.msra.mxu0 0.0
    %667 = vmatprep.subr.mxu0 0.0
    %668 = vmatpush1.xpose.msra.mxu0 0.0
    %669 = vmatprep.subr.mxu0 0.0
    %670 = vmatpush1.xpose.msra.mxu0 0.0
    %671 = vmatprep.subr.mxu0 0.0
    %672 = vmatpush1.xpose.msra.mxu0 0.0
    %673 = vmatprep.mubr.f32.mxu0 0.0
    %674 = vmatmul.mubr.f32.gmra.mrb[0].mxu0 %v605
    %v675 = vpop.f32.mrb[0].mxu0
    %v676 = vadd.f32 %v338, %v675
    %v677 = vpop.f32.mrb[0].mxu0
    %678 = vdwg.mxu0
    %679 = vrot.lane.b32.xlu0 %v367, 96
    %v680 = vpop.permute.xlu0 %679
    %v681 = vsel %vm376, %v353, 0
    %v683 = vsel %vm376, %v680, 0
    %685 = vmatprep.subr.mxu0 0.0
    %686 = vmatpush1.xpose.msra.mxu0 %v683
    %687 = vmatprep.subr.mxu0 0.0
    %688 = vmatpush1.xpose.msra.mxu0 0.0
    %689 = vmatprep.subr.mxu0 0.0
    %690 = vmatpush1.xpose.msra.mxu0 0.0
    %691 = vmatprep.subr.mxu0 0.0
    %692 = vmatpush1.xpose.msra.mxu0 0.0
    %693 = vmatprep.subr.mxu0 0.0
    %694 = vmatpush1.xpose.msra.mxu0 0.0
    %695 = vmatprep.subr.mxu0 0.0
    %696 = vmatpush1.xpose.msra.mxu0 0.0
    %697 = vmatprep.subr.mxu0 0.0
    %698 = vmatpush1.xpose.msra.mxu0 0.0
    %699 = vmatprep.subr.mxu0 0.0
    %700 = vmatpush1.xpose.msra.mxu0 0.0
    %701 = vmatprep.subr.mxu0 0.0
    %702 = vmatpush1.xpose.msra.mxu0 0.0
    %703 = vmatprep.subr.mxu0 0.0
    %704 = vmatpush1.xpose.msra.mxu0 0.0
    %705 = vmatprep.subr.mxu0 0.0
    %706 = vmatpush1.xpose.msra.mxu0 0.0
    %707 = vmatprep.subr.mxu0 0.0
    %708 = vmatpush1.xpose.msra.mxu0 0.0
    %709 = vmatprep.subr.mxu0 0.0
    %710 = vmatpush1.xpose.msra.mxu0 0.0
    %711 = vmatprep.subr.mxu0 0.0
    %712 = vmatpush1.xpose.msra.mxu0 0.0
    %713 = vmatprep.subr.mxu0 0.0
    %714 = vmatpush1.xpose.msra.mxu0 0.0
    %715 = vmatprep.subr.mxu0 0.0
    %716 = vmatpush1.xpose.msra.mxu0 0.0
    %717 = vmatprep.subr.mxu0 0.0
    %718 = vmatpush1.xpose.msra.mxu0 0.0
    %719 = vmatprep.subr.mxu0 0.0
    %720 = vmatpush1.xpose.msra.mxu0 0.0
    %721 = vmatprep.subr.mxu0 0.0
    %722 = vmatpush1.xpose.msra.mxu0 0.0
    %723 = vmatprep.subr.mxu0 0.0
    %724 = vmatpush1.xpose.msra.mxu0 0.0
    %725 = vmatprep.subr.mxu0 0.0
    %726 = vmatpush1.xpose.msra.mxu0 0.0
    %727 = vmatprep.subr.mxu0 0.0
    %728 = vmatpush1.xpose.msra.mxu0 0.0
    %729 = vmatprep.subr.mxu0 0.0
    %730 = vmatpush1.xpose.msra.mxu0 0.0
    %731 = vmatprep.subr.mxu0 0.0
    %732 = vmatpush1.xpose.msra.mxu0 0.0
    %733 = vmatprep.subr.mxu0 0.0
    %734 = vmatpush1.xpose.msra.mxu0 0.0
    %735 = vmatprep.subr.mxu0 0.0
    %736 = vmatpush1.xpose.msra.mxu0 0.0
    %737 = vmatprep.subr.mxu0 0.0
    %738 = vmatpush1.xpose.msra.mxu0 0.0
    %739 = vmatprep.subr.mxu0 0.0
    %740 = vmatpush1.xpose.msra.mxu0 0.0
    %741 = vmatprep.subr.mxu0 0.0
    %742 = vmatpush1.xpose.msra.mxu0 0.0
    %743 = vmatprep.subr.mxu0 0.0
    %744 = vmatpush1.xpose.msra.mxu0 0.0
    %745 = vmatprep.subr.mxu0 0.0
    %746 = vmatpush1.xpose.msra.mxu0 0.0
    %747 = vmatprep.subr.mxu0 0.0
    %748 = vmatpush1.xpose.msra.mxu0 0.0
    %749 = vmatprep.mubr.f32.mxu0 0.0
    %750 = vmatmul.mubr.f32.gmra.mrb[0].mxu0 %v681
    %v751 = vpop.f32.mrb[0].mxu0
    %v752 = vadd.f32 %v337, %v751
    %v753 = vpop.f32.mrb[0].mxu0
    %754 = vdwg.mxu0
    %755 = vrot.lane.b32.xlu0 %v369, 96
    %v756 = vpop.permute.xlu0 %755
    %v757 = vsel %vm376, %v355, 0
    %v759 = vsel %vm376, %v756, 0
    %761 = vmatprep.subr.mxu0 0.0
    %762 = vmatpush1.xpose.msra.mxu0 %v759
    %763 = vmatprep.subr.mxu0 0.0
    %764 = vmatpush1.xpose.msra.mxu0 0.0
    %765 = vmatprep.subr.mxu0 0.0
    %766 = vmatpush1.xpose.msra.mxu0 0.0
    %767 = vmatprep.subr.mxu0 0.0
    %768 = vmatpush1.xpose.msra.mxu0 0.0
    %769 = vmatprep.subr.mxu0 0.0
    %770 = vmatpush1.xpose.msra.mxu0 0.0
    %771 = vmatprep.subr.mxu0 0.0
    %772 = vmatpush1.xpose.msra.mxu0 0.0
    %773 = vmatprep.subr.mxu0 0.0
    %774 = vmatpush1.xpose.msra.mxu0 0.0
    %775 = vmatprep.subr.mxu0 0.0
    %776 = vmatpush1.xpose.msra.mxu0 0.0
    %777 = vmatprep.subr.mxu0 0.0
    %778 = vmatpush1.xpose.msra.mxu0 0.0
    %779 = vmatprep.subr.mxu0 0.0
    %780 = vmatpush1.xpose.msra.mxu0 0.0
    %781 = vmatprep.subr.mxu0 0.0
    %782 = vmatpush1.xpose.msra.mxu0 0.0
    %783 = vmatprep.subr.mxu0 0.0
    %784 = vmatpush1.xpose.msra.mxu0 0.0
    %785 = vmatprep.subr.mxu0 0.0
    %786 = vmatpush1.xpose.msra.mxu0 0.0
    %787 = vmatprep.subr.mxu0 0.0
    %788 = vmatpush1.xpose.msra.mxu0 0.0
    %789 = vmatprep.subr.mxu0 0.0
    %790 = vmatpush1.xpose.msra.mxu0 0.0
    %791 = vmatprep.subr.mxu0 0.0
    %792 = vmatpush1.xpose.msra.mxu0 0.0
    %793 = vmatprep.subr.mxu0 0.0
    %794 = vmatpush1.xpose.msra.mxu0 0.0
    %795 = vmatprep.subr.mxu0 0.0
    %796 = vmatpush1.xpose.msra.mxu0 0.0
    %797 = vmatprep.subr.mxu0 0.0
    %798 = vmatpush1.xpose.msra.mxu0 0.0
    %799 = vmatprep.subr.mxu0 0.0
    %800 = vmatpush1.xpose.msra.mxu0 0.0
    %801 = vmatprep.subr.mxu0 0.0
    %802 = vmatpush1.xpose.msra.mxu0 0.0
    %803 = vmatprep.subr.mxu0 0.0
    %804 = vmatpush1.xpose.msra.mxu0 0.0
    %805 = vmatprep.subr.mxu0 0.0
    %806 = vmatpush1.xpose.msra.mxu0 0.0
    %807 = vmatprep.subr.mxu0 0.0
    %808 = vmatpush1.xpose.msra.mxu0 0.0
    %809 = vmatprep.subr.mxu0 0.0
    %810 = vmatpush1.xpose.msra.mxu0 0.0
    %811 = vmatprep.subr.mxu0 0.0
    %812 = vmatpush1.xpose.msra.mxu0 0.0
    %813 = vmatprep.subr.mxu0 0.0
    %814 = vmatpush1.xpose.msra.mxu0 0.0
    %815 = vmatprep.subr.mxu0 0.0
    %816 = vmatpush1.xpose.msra.mxu0 0.0
    %817 = vmatprep.subr.mxu0 0.0
    %818 = vmatpush1.xpose.msra.mxu0 0.0
    %819 = vmatprep.subr.mxu0 0.0
    %820 = vmatpush1.xpose.msra.mxu0 0.0
    %821 = vmatprep.subr.mxu0 0.0
    %822 = vmatpush1.xpose.msra.mxu0 0.0
    %823 = vmatprep.subr.mxu0 0.0
    %824 = vmatpush1.xpose.msra.mxu0 0.0
    %825 = vmatprep.mubr.f32.mxu0 0.0
    %826 = vmatmul.mubr.f32.gmra.mrb[0].mxu0 %v757
    %v827 = vpop.f32.mrb[0].mxu0
    %v828 = vadd.f32 %v338, %v827
    %v829 = vpop.f32.mrb[0].mxu0
    %830 = vdwg.mxu0
    %831 = vrot.lane.b32.xlu0 %v371, 96
    %v832 = vpop.permute.xlu0 %831
    %v833 = vsel %vm376, %v357, 0
    %v835 = vsel %vm376, %v832, 0
    %837 = vmatprep.subr.mxu0 0.0
    %838 = vmatpush1.xpose.msra.mxu0 %v835
    %839 = vmatprep.subr.mxu0 0.0
    %840 = vmatpush1.xpose.msra.mxu0 0.0
    %841 = vmatprep.subr.mxu0 0.0
    %842 = vmatpush1.xpose.msra.mxu0 0.0
    %843 = vmatprep.subr.mxu0 0.0
    %844 = vmatpush1.xpose.msra.mxu0 0.0
    %845 = vmatprep.subr.mxu0 0.0
    %846 = vmatpush1.xpose.msra.mxu0 0.0
    %847 = vmatprep.subr.mxu0 0.0
    %848 = vmatpush1.xpose.msra.mxu0 0.0
    %849 = vmatprep.subr.mxu0 0.0
    %850 = vmatpush1.xpose.msra.mxu0 0.0
    %851 = vmatprep.subr.mxu0 0.0
    %852 = vmatpush1.xpose.msra.mxu0 0.0
    %853 = vmatprep.subr.mxu0 0.0
    %854 = vmatpush1.xpose.msra.mxu0 0.0
    %855 = vmatprep.subr.mxu0 0.0
    %856 = vmatpush1.xpose.msra.mxu0 0.0
    %857 = vmatprep.subr.mxu0 0.0
    %858 = vmatpush1.xpose.msra.mxu0 0.0
    %859 = vmatprep.subr.mxu0 0.0
    %860 = vmatpush1.xpose.msra.mxu0 0.0
    %861 = vmatprep.subr.mxu0 0.0
    %862 = vmatpush1.xpose.msra.mxu0 0.0
    %863 = vmatprep.subr.mxu0 0.0
    %864 = vmatpush1.xpose.msra.mxu0 0.0
    %865 = vmatprep.subr.mxu0 0.0
    %866 = vmatpush1.xpose.msra.mxu0 0.0
    %867 = vmatprep.subr.mxu0 0.0
    %868 = vmatpush1.xpose.msra.mxu0 0.0
    %869 = vmatprep.subr.mxu0 0.0
    %870 = vmatpush1.xpose.msra.mxu0 0.0
    %871 = vmatprep.subr.mxu0 0.0
    %872 = vmatpush1.xpose.msra.mxu0 0.0
    %873 = vmatprep.subr.mxu0 0.0
    %874 = vmatpush1.xpose.msra.mxu0 0.0
    %875 = vmatprep.subr.mxu0 0.0
    %876 = vmatpush1.xpose.msra.mxu0 0.0
    %877 = vmatprep.subr.mxu0 0.0
    %878 = vmatpush1.xpose.msra.mxu0 0.0
    %879 = vmatprep.subr.mxu0 0.0
    %880 = vmatpush1.xpose.msra.mxu0 0.0
    %881 = vmatprep.subr.mxu0 0.0
    %882 = vmatpush1.xpose.msra.mxu0 0.0
    %883 = vmatprep.subr.mxu0 0.0
    %884 = vmatpush1.xpose.msra.mxu0 0.0
    %885 = vmatprep.subr.mxu0 0.0
    %886 = vmatpush1.xpose.msra.mxu0 0.0
    %887 = vmatprep.subr.mxu0 0.0
    %888 = vmatpush1.xpose.msra.mxu0 0.0
    %889 = vmatprep.subr.mxu0 0.0
    %890 = vmatpush1.xpose.msra.mxu0 0.0
    %891 = vmatprep.subr.mxu0 0.0
    %892 = vmatpush1.xpose.msra.mxu0 0.0
    %893 = vmatprep.subr.mxu0 0.0
    %894 = vmatpush1.xpose.msra.mxu0 0.0
    %895 = vmatprep.subr.mxu0 0.0
    %896 = vmatpush1.xpose.msra.mxu0 0.0
    %897 = vmatprep.subr.mxu0 0.0
    %898 = vmatpush1.xpose.msra.mxu0 0.0
    %899 = vmatprep.subr.mxu0 0.0
    %900 = vmatpush1.xpose.msra.mxu0 0.0
    %901 = vmatprep.mubr.f32.mxu0 0.0
    %902 = vmatmul.mubr.f32.gmra.mrb[0].mxu0 %v833
    %v903 = vpop.f32.mrb[0].mxu0
    %v904 = vadd.f32 %v337, %v903
    %v905 = vpop.f32.mrb[0].mxu0
    %906 = vdwg.mxu0
    %907 = vrot.lane.b32.xlu0 %v373, 96
    %v908 = vpop.permute.xlu0 %907
    %v909 = vsel %vm376, %v359, 0
    %v911 = vsel %vm376, %v908, 0
    %913 = vmatprep.subr.mxu0 0.0
    %914 = vmatpush1.xpose.msra.mxu0 %v911
    %915 = vmatprep.subr.mxu0 0.0
    %916 = vmatpush1.xpose.msra.mxu0 0.0
    %917 = vmatprep.subr.mxu0 0.0
    %918 = vmatpush1.xpose.msra.mxu0 0.0
    %919 = vmatprep.subr.mxu0 0.0
    %920 = vmatpush1.xpose.msra.mxu0 0.0
    %921 = vmatprep.subr.mxu0 0.0
    %922 = vmatpush1.xpose.msra.mxu0 0.0
    %923 = vmatprep.subr.mxu0 0.0
    %924 = vmatpush1.xpose.msra.mxu0 0.0
    %925 = vmatprep.subr.mxu0 0.0
    %926 = vmatpush1.xpose.msra.mxu0 0.0
    %927 = vmatprep.subr.mxu0 0.0
    %928 = vmatpush1.xpose.msra.mxu0 0.0
    %929 = vmatprep.subr.mxu0 0.0
    %930 = vmatpush1.xpose.msra.mxu0 0.0
    %931 = vmatprep.subr.mxu0 0.0
    %932 = vmatpush1.xpose.msra.mxu0 0.0
    %933 = vmatprep.subr.mxu0 0.0
    %934 = vmatpush1.xpose.msra.mxu0 0.0
    %935 = vmatprep.subr.mxu0 0.0
    %936 = vmatpush1.xpose.msra.mxu0 0.0
    %937 = vmatprep.subr.mxu0 0.0
    %938 = vmatpush1.xpose.msra.mxu0 0.0
    %939 = vmatprep.subr.mxu0 0.0
    %940 = vmatpush1.xpose.msra.mxu0 0.0
    %941 = vmatprep.subr.mxu0 0.0
    %942 = vmatpush1.xpose.msra.mxu0 0.0
    %943 = vmatprep.subr.mxu0 0.0
    %944 = vmatpush1.xpose.msra.mxu0 0.0
    %945 = vmatprep.subr.mxu0 0.0
    %946 = vmatpush1.xpose.msra.mxu0 0.0
    %947 = vmatprep.subr.mxu0 0.0
    %948 = vmatpush1.xpose.msra.mxu0 0.0
    %949 = vmatprep.subr.mxu0 0.0
    %950 = vmatpush1.xpose.msra.mxu0 0.0
    %951 = vmatprep.subr.mxu0 0.0
    %952 = vmatpush1.xpose.msra.mxu0 0.0
    %953 = vmatprep.subr.mxu0 0.0
    %954 = vmatpush1.xpose.msra.mxu0 0.0
    %955 = vmatprep.subr.mxu0 0.0
    %956 = vmatpush1.xpose.msra.mxu0 0.0
    %957 = vmatprep.subr.mxu0 0.0
    %958 = vmatpush1.xpose.msra.mxu0 0.0
    %959 = vmatprep.subr.mxu0 0.0
    %960 = vmatpush1.xpose.msra.mxu0 0.0
    %961 = vmatprep.subr.mxu0 0.0
    %962 = vmatpush1.xpose.msra.mxu0 0.0
    %963 = vmatprep.subr.mxu0 0.0
    %964 = vmatpush1.xpose.msra.mxu0 0.0
    %965 = vmatprep.subr.mxu0 0.0
    %966 = vmatpush1.xpose.msra.mxu0 0.0
    %967 = vmatprep.subr.mxu0 0.0
    %968 = vmatpush1.xpose.msra.mxu0 0.0
    %969 = vmatprep.subr.mxu0 0.0
    %970 = vmatpush1.xpose.msra.mxu0 0.0
    %971 = vmatprep.subr.mxu0 0.0
    %972 = vmatpush1.xpose.msra.mxu0 0.0
    %973 = vmatprep.subr.mxu0 0.0
    %974 = vmatpush1.xpose.msra.mxu0 0.0
    %975 = vmatprep.subr.mxu0 0.0
    %976 = vmatpush1.xpose.msra.mxu0 0.0
    %977 = vmatprep.mubr.f32.mxu0 0.0
    %978 = vmatmul.mubr.f32.gmra.mrb[0].mxu0 %v909
    %v979 = vpop.f32.mrb[0].mxu0
    %v980 = vadd.f32 %v338, %v979
    %v981 = vpop.f32.mrb[0].mxu0
    %982 = vdwg.mxu0
    %v983 = vsel %vm376, %v448, -inf
    %984 = vmax.xlane.f32.xlu0 %v983
    %v985 = vpop.xlane.xlu0 %984
    %v986 = vsel %vm376, %v524, -inf
    %987 = vmax.xlane.f32.xlu0 %v986
    %v988 = vpop.xlane.xlu0 %987
    %v989 = vsel %vm376, %v600, -inf
    %990 = vmax.xlane.f32.xlu0 %v989
    %v991 = vpop.xlane.xlu0 %990
    %v992 = vsel %vm376, %v676, -inf
    %993 = vmax.xlane.f32.xlu0 %v992
    %v994 = vpop.xlane.xlu0 %993
    %v995 = vsel %vm376, %v752, -inf
    %996 = vmax.xlane.f32.xlu0 %v995
    %v997 = vpop.xlane.xlu0 %996
    %v998 = vsel %vm376, %v828, -inf
    %999 = vmax.xlane.f32.xlu0 %v998
    %v1000 = vpop.xlane.xlu0 %999
    %v1001 = vsel %vm376, %v904, -inf
    %1002 = vmax.xlane.f32.xlu0 %v1001
    %v1003 = vpop.xlane.xlu0 %1002
    %v1004 = vsel %vm376, %v980, -inf
    %1005 = vmax.xlane.f32.xlu0 %v1004
    %v1006 = vpop.xlane.xlu0 %1005
    %v1007 = vsub.f32 %v448, %v985
    %v1008 = vsub.f32 %v524, %v988
    %v1009 = vsub.f32 %v600, %v991
    %v1010 = vsub.f32 %v676, %v994
    %v1011 = vsub.f32 %v752, %v997
    %v1012 = vsub.f32 %v828, %v1000
    %v1013 = vsub.f32 %v904, %v1003
    %v1014 = vsub.f32 %v980, %v1006
    %v1015 = vmul.f32 %v1007, 1.442695
    %v1016 = vpow.pop %v1015
    %v1017 = vmul.f32 %v1008, 1.442695
    %v1018 = vpow.pop %v1017
    %v1019 = vmul.f32 %v1009, 1.442695
    %v1020 = vpow.pop %v1019
    %v1021 = vmul.f32 %v1010, 1.442695
    %v1022 = vpow.pop %v1021
    %v1023 = vmul.f32 %v1011, 1.442695
    %v1024 = vpow.pop %v1023
    %v1025 = vmul.f32 %v1012, 1.442695
    %v1026 = vpow.pop %v1025
    %v1027 = vmul.f32 %v1013, 1.442695
    %v1028 = vpow.pop %v1027
    %v1029 = vmul.f32 %v1014, 1.442695
    %v1030 = vpow.pop %v1029
    %v1031 = vsel %vm376, %v1016, 0.0
    %1032 = vadd.xlane.f32.xlu0 %v1031
    %v1033 = vpop.xlane.xlu0 %1032
    %v1034 = vsel %vm376, %v1018, 0.0
    %1035 = vadd.xlane.f32.xlu0 %v1034
    %v1036 = vpop.xlane.xlu0 %1035
    %v1037 = vsel %vm376, %v1020, 0.0
    %1038 = vadd.xlane.f32.xlu0 %v1037
    %v1039 = vpop.xlane.xlu0 %1038
    %v1040 = vsel %vm376, %v1022, 0.0
    %1041 = vadd.xlane.f32.xlu0 %v1040
    %v1042 = vpop.xlane.xlu0 %1041
    %v1043 = vsel %vm376, %v1024, 0.0
    %1044 = vadd.xlane.f32.xlu0 %v1043
    %v1045 = vpop.xlane.xlu0 %1044
    %v1046 = vsel %vm376, %v1026, 0.0
    %1047 = vadd.xlane.f32.xlu0 %v1046
    %v1048 = vpop.xlane.xlu0 %1047
    %v1049 = vsel %vm376, %v1028, 0.0
    %1050 = vadd.xlane.f32.xlu0 %v1049
    %v1051 = vpop.xlane.xlu0 %1050
    %v1052 = vsel %vm376, %v1030, 0.0
    %1053 = vadd.xlane.f32.xlu0 %v1052
    %v1054 = vpop.xlane.xlu0 %1053
    %v1055 = vrcp.pop %v1033
    %v1056 = vrcp.pop %v1036
    %v1057 = vrcp.pop %v1039
    %v1058 = vrcp.pop %v1042
    %v1059 = vrcp.pop %v1045
    %v1060 = vrcp.pop %v1048
    %v1061 = vrcp.pop %v1051
    %v1062 = vrcp.pop %v1054
    %v1063 = vmul.f32 %v1016, %v1055
    %v1064 = vmul.f32 %v1018, %v1056
    %v1065 = vmul.f32 %v1020, %v1057
    %v1066 = vmul.f32 %v1022, %v1058
    %v1067 = vmul.f32 %v1024, %v1059
    %v1068 = vmul.f32 %v1026, %v1060
    %v1069 = vmul.f32 %v1028, %v1061
    %v1070 = vmul.f32 %v1030, %v1062
    %1071 = vrot.lane.b32.xlu0 %v329, 64
    %v1072 = vpop.permute.xlu0 %1071
    %v1075 = vsel %vm376, %v1063, 0
    %1077 = vmatprep.subr.mxu0 0.0
    %1078 = vmatpush1.msra.mxu0 %v1072
    %1079 = vmatprep.subr.mxu0 0.0
    %1080 = vmatpush1.msra.mxu0 0.0
    %1081 = vmatprep.subr.mxu0 0.0
    %1082 = vmatpush1.msra.mxu0 0.0
    %1083 = vmatprep.subr.mxu0 0.0
    %1084 = vmatpush1.msra.mxu0 0.0
    %1085 = vmatprep.subr.mxu0 0.0
    %1086 = vmatpush1.msra.mxu0 0.0
    %1087 = vmatprep.subr.mxu0 0.0
    %1088 = vmatpush1.msra.mxu0 0.0
    %1089 = vmatprep.subr.mxu0 0.0
    %1090 = vmatpush1.msra.mxu0 0.0
    %1091 = vmatprep.subr.mxu0 0.0
    %1092 = vmatpush1.msra.mxu0 0.0
    %1093 = vmatprep.subr.mxu0 0.0
    %1094 = vmatpush1.msra.mxu0 0.0
    %1095 = vmatprep.subr.mxu0 0.0
    %1096 = vmatpush1.msra.mxu0 0.0
    %1097 = vmatprep.subr.mxu0 0.0
    %1098 = vmatpush1.msra.mxu0 0.0
    %1099 = vmatprep.subr.mxu0 0.0
    %1100 = vmatpush1.msra.mxu0 0.0
    %1101 = vmatprep.subr.mxu0 0.0
    %1102 = vmatpush1.msra.mxu0 0.0
    %1103 = vmatprep.subr.mxu0 0.0
    %1104 = vmatpush1.msra.mxu0 0.0
    %1105 = vmatprep.subr.mxu0 0.0
    %1106 = vmatpush1.msra.mxu0 0.0
    %1107 = vmatprep.subr.mxu0 0.0
    %1108 = vmatpush1.msra.mxu0 0.0
    %1109 = vmatprep.subr.mxu0 0.0
    %1110 = vmatpush1.msra.mxu0 0.0
    %1111 = vmatprep.subr.mxu0 0.0
    %1112 = vmatpush1.msra.mxu0 0.0
    %1113 = vmatprep.subr.mxu0 0.0
    %1114 = vmatpush1.msra.mxu0 0.0
    %1115 = vmatprep.subr.mxu0 0.0
    %1116 = vmatpush1.msra.mxu0 0.0
    %1117 = vmatprep.subr.mxu0 0.0
    %1118 = vmatpush1.msra.mxu0 0.0
    %1119 = vmatprep.subr.mxu0 0.0
    %1120 = vmatpush1.msra.mxu0 0.0
    %1121 = vmatprep.subr.mxu0 0.0
    %1122 = vmatpush1.msra.mxu0 0.0
    %1123 = vmatprep.subr.mxu0 0.0
    %1124 = vmatpush1.msra.mxu0 0.0
    %1125 = vmatprep.subr.mxu0 0.0
    %1126 = vmatpush1.msra.mxu0 0.0
    %1127 = vmatprep.subr.mxu0 0.0
    %1128 = vmatpush1.msra.mxu0 0.0
    %1129 = vmatprep.subr.mxu0 0.0
    %1130 = vmatpush1.msra.mxu0 0.0
    %1131 = vmatprep.subr.mxu0 0.0
    %1132 = vmatpush1.msra.mxu0 0.0
    %1133 = vmatprep.subr.mxu0 0.0
    %1134 = vmatpush1.msra.mxu0 0.0
    %1135 = vmatprep.subr.mxu0 0.0
    %1136 = vmatpush1.msra.mxu0 0.0
    %1137 = vmatprep.subr.mxu0 0.0
    %1138 = vmatpush1.msra.mxu0 0.0
    %1139 = vmatprep.subr.mxu0 0.0
    %1140 = vmatpush1.msra.mxu0 0.0
    %1141 = vmatprep.mubr.f32.mxu0 0.0
    %1142 = vmatmul.mubr.f32.gmra.mrb[0].mxu0 %v1075
    %v1143 = vpop.f32.mrb[0].mxu0
    %v1144 = vadd.f32 0.0, %v1143
    %v1145 = vpop.f32.mrb[0].mxu0
    %1146 = vdwg.mxu0
    %1147 = vrot.lane.b32.xlu0 %v334, 64
    %v1148 = vpop.permute.xlu0 %1147
    %v1151 = vsel %vm376, %v1064, 0
    %1153 = vmatprep.subr.mxu0 0.0
    %1154 = vmatpush1.msra.mxu0 %v1148
    %1155 = vmatprep.subr.mxu0 0.0
    %1156 = vmatpush1.msra.mxu0 0.0
    %1157 = vmatprep.subr.mxu0 0.0
    %1158 = vmatpush1.msra.mxu0 0.0
    %1159 = vmatprep.subr.mxu0 0.0
    %1160 = vmatpush1.msra.mxu0 0.0
    %1161 = vmatprep.subr.mxu0 0.0
    %1162 = vmatpush1.msra.mxu0 0.0
    %1163 = vmatprep.subr.mxu0 0.0
    %1164 = vmatpush1.msra.mxu0 0.0
    %1165 = vmatprep.subr.mxu0 0.0
    %1166 = vmatpush1.msra.mxu0 0.0
    %1167 = vmatprep.subr.mxu0 0.0
    %1168 = vmatpush1.msra.mxu0 0.0
    %1169 = vmatprep.subr.mxu0 0.0
    %1170 = vmatpush1.msra.mxu0 0.0
    %1171 = vmatprep.subr.mxu0 0.0
    %1172 = vmatpush1.msra.mxu0 0.0
    %1173 = vmatprep.subr.mxu0 0.0
    %1174 = vmatpush1.msra.mxu0 0.0
    %1175 = vmatprep.subr.mxu0 0.0
    %1176 = vmatpush1.msra.mxu0 0.0
    %1177 = vmatprep.subr.mxu0 0.0
    %1178 = vmatpush1.msra.mxu0 0.0
    %1179 = vmatprep.subr.mxu0 0.0
    %1180 = vmatpush1.msra.mxu0 0.0
    %1181 = vmatprep.subr.mxu0 0.0
    %1182 = vmatpush1.msra.mxu0 0.0
    %1183 = vmatprep.subr.mxu0 0.0
    %1184 = vmatpush1.msra.mxu0 0.0
    %1185 = vmatprep.subr.mxu0 0.0
    %1186 = vmatpush1.msra.mxu0 0.0
    %1187 = vmatprep.subr.mxu0 0.0
    %1188 = vmatpush1.msra.mxu0 0.0
    %1189 = vmatprep.subr.mxu0 0.0
    %1190 = vmatpush1.msra.mxu0 0.0
    %1191 = vmatprep.subr.mxu0 0.0
    %1192 = vmatpush1.msra.mxu0 0.0
    %1193 = vmatprep.subr.mxu0 0.0
    %1194 = vmatpush1.msra.mxu0 0.0
    %1195 = vmatprep.subr.mxu0 0.0
    %1196 = vmatpush1.msra.mxu0 0.0
    %1197 = vmatprep.subr.mxu0 0.0
    %1198 = vmatpush1.msra.mxu0 0.0
    %1199 = vmatprep.subr.mxu0 0.0
    %1200 = vmatpush1.msra.mxu0 0.0
    %1201 = vmatprep.subr.mxu0 0.0
    %1202 = vmatpush1.msra.mxu0 0.0
    %1203 = vmatprep.subr.mxu0 0.0
    %1204 = vmatpush1.msra.mxu0 0.0
    %1205 = vmatprep.subr.mxu0 0.0
    %1206 = vmatpush1.msra.mxu0 0.0
    %1207 = vmatprep.subr.mxu0 0.0
    %1208 = vmatpush1.msra.mxu0 0.0
    %1209 = vmatprep.subr.mxu0 0.0
    %1210 = vmatpush1.msra.mxu0 0.0
    %1211 = vmatprep.subr.mxu0 0.0
    %1212 = vmatpush1.msra.mxu0 0.0
    %1213 = vmatprep.subr.mxu0 0.0
    %1214 = vmatpush1.msra.mxu0 0.0
    %1215 = vmatprep.subr.mxu0 0.0
    %1216 = vmatpush1.msra.mxu0 0.0
    %1217 = vmatprep.mubr.f32.mxu0 0.0
    %1218 = vmatmul.mubr.f32.gmra.mrb[0].mxu0 %v1151
    %v1219 = vpop.f32.mrb[0].mxu0
    %v1220 = vadd.f32 0.0, %v1219
    %v1221 = vpop.f32.mrb[0].mxu0
    %1222 = vdwg.mxu0
    %1223 = vrot.lane.b32.xlu0 %v363, 64
    %v1224 = vpop.permute.xlu0 %1223
    %v1227 = vsel %vm376, %v1065, 0
    %1229 = vmatprep.subr.mxu0 0.0
    %1230 = vmatpush1.msra.mxu0 %v1224
    %1231 = vmatprep.subr.mxu0 0.0
    %1232 = vmatpush1.msra.mxu0 0.0
    %1233 = vmatprep.subr.mxu0 0.0
    %1234 = vmatpush1.msra.mxu0 0.0
    %1235 = vmatprep.subr.mxu0 0.0
    %1236 = vmatpush1.msra.mxu0 0.0
    %1237 = vmatprep.subr.mxu0 0.0
    %1238 = vmatpush1.msra.mxu0 0.0
    %1239 = vmatprep.subr.mxu0 0.0
    %1240 = vmatpush1.msra.mxu0 0.0
    %1241 = vmatprep.subr.mxu0 0.0
    %1242 = vmatpush1.msra.mxu0 0.0
    %1243 = vmatprep.subr.mxu0 0.0
    %1244 = vmatpush1.msra.mxu0 0.0
    %1245 = vmatprep.subr.mxu0 0.0
    %1246 = vmatpush1.msra.mxu0 0.0
    %1247 = vmatprep.subr.mxu0 0.0
    %1248 = vmatpush1.msra.mxu0 0.0
    %1249 = vmatprep.subr.mxu0 0.0
    %1250 = vmatpush1.msra.mxu0 0.0
    %1251 = vmatprep.subr.mxu0 0.0
    %1252 = vmatpush1.msra.mxu0 0.0
    %1253 = vmatprep.subr.mxu0 0.0
    %1254 = vmatpush1.msra.mxu0 0.0
    %1255 = vmatprep.subr.mxu0 0.0
    %1256 = vmatpush1.msra.mxu0 0.0
    %1257 = vmatprep.subr.mxu0 0.0
    %1258 = vmatpush1.msra.mxu0 0.0
    %1259 = vmatprep.subr.mxu0 0.0
    %1260 = vmatpush1.msra.mxu0 0.0
    %1261 = vmatprep.subr.mxu0 0.0
    %1262 = vmatpush1.msra.mxu0 0.0
    %1263 = vmatprep.subr.mxu0 0.0
    %1264 = vmatpush1.msra.mxu0 0.0
    %1265 = vmatprep.subr.mxu0 0.0
    %1266 = vmatpush1.msra.mxu0 0.0
    %1267 = vmatprep.subr.mxu0 0.0
    %1268 = vmatpush1.msra.mxu0 0.0
    %1269 = vmatprep.subr.mxu0 0.0
    %1270 = vmatpush1.msra.mxu0 0.0
    %1271 = vmatprep.subr.mxu0 0.0
    %1272 = vmatpush1.msra.mxu0 0.0
    %1273 = vmatprep.subr.mxu0 0.0
    %1274 = vmatpush1.msra.mxu0 0.0
    %1275 = vmatprep.subr.mxu0 0.0
    %1276 = vmatpush1.msra.mxu0 0.0
    %1277 = vmatprep.subr.mxu0 0.0
    %1278 = vmatpush1.msra.mxu0 0.0
    %1279 = vmatprep.subr.mxu0 0.0
    %1280 = vmatpush1.msra.mxu0 0.0
    %1281 = vmatprep.subr.mxu0 0.0
    %1282 = vmatpush1.msra.mxu0 0.0
    %1283 = vmatprep.subr.mxu0 0.0
    %1284 = vmatpush1.msra.mxu0 0.0
    %1285 = vmatprep.subr.mxu0 0.0
    %1286 = vmatpush1.msra.mxu0 0.0
    %1287 = vmatprep.subr.mxu0 0.0
    %1288 = vmatpush1.msra.mxu0 0.0
    %1289 = vmatprep.subr.mxu0 0.0
    %1290 = vmatpush1.msra.mxu0 0.0
    %1291 = vmatprep.subr.mxu0 0.0
    %1292 = vmatpush1.msra.mxu0 0.0
    %1293 = vmatprep.mubr.f32.mxu0 0.0
    %1294 = vmatmul.mubr.f32.gmra.mrb[0].mxu0 %v1227
    %v1295 = vpop.f32.mrb[0].mxu0
    %v1296 = vadd.f32 0.0, %v1295
    %v1297 = vpop.f32.mrb[0].mxu0
    %1298 = vdwg.mxu0
    %1299 = vrot.lane.b32.xlu0 %v365, 64
    %v1300 = vpop.permute.xlu0 %1299
    %v1303 = vsel %vm376, %v1066, 0
    %1305 = vmatprep.subr.mxu0 0.0
    %1306 = vmatpush1.msra.mxu0 %v1300
    %1307 = vmatprep.subr.mxu0 0.0
    %1308 = vmatpush1.msra.mxu0 0.0
    %1309 = vmatprep.subr.mxu0 0.0
    %1310 = vmatpush1.msra.mxu0 0.0
    %1311 = vmatprep.subr.mxu0 0.0
    %1312 = vmatpush1.msra.mxu0 0.0
    %1313 = vmatprep.subr.mxu0 0.0
    %1314 = vmatpush1.msra.mxu0 0.0
    %1315 = vmatprep.subr.mxu0 0.0
    %1316 = vmatpush1.msra.mxu0 0.0
    %1317 = vmatprep.subr.mxu0 0.0
    %1318 = vmatpush1.msra.mxu0 0.0
    %1319 = vmatprep.subr.mxu0 0.0
    %1320 = vmatpush1.msra.mxu0 0.0
    %1321 = vmatprep.subr.mxu0 0.0
    %1322 = vmatpush1.msra.mxu0 0.0
    %1323 = vmatprep.subr.mxu0 0.0
    %1324 = vmatpush1.msra.mxu0 0.0
    %1325 = vmatprep.subr.mxu0 0.0
    %1326 = vmatpush1.msra.mxu0 0.0
    %1327 = vmatprep.subr.mxu0 0.0
    %1328 = vmatpush1.msra.mxu0 0.0
    %1329 = vmatprep.subr.mxu0 0.0
    %1330 = vmatpush1.msra.mxu0 0.0
    %1331 = vmatprep.subr.mxu0 0.0
    %1332 = vmatpush1.msra.mxu0 0.0
    %1333 = vmatprep.subr.mxu0 0.0
    %1334 = vmatpush1.msra.mxu0 0.0
    %1335 = vmatprep.subr.mxu0 0.0
    %1336 = vmatpush1.msra.mxu0 0.0
    %1337 = vmatprep.subr.mxu0 0.0
    %1338 = vmatpush1.msra.mxu0 0.0
    %1339 = vmatprep.subr.mxu0 0.0
    %1340 = vmatpush1.msra.mxu0 0.0
    %1341 = vmatprep.subr.mxu0 0.0
    %1342 = vmatpush1.msra.mxu0 0.0
    %1343 = vmatprep.subr.mxu0 0.0
    %1344 = vmatpush1.msra.mxu0 0.0
    %1345 = vmatprep.subr.mxu0 0.0
    %1346 = vmatpush1.msra.mxu0 0.0
    %1347 = vmatprep.subr.mxu0 0.0
    %1348 = vmatpush1.msra.mxu0 0.0
    %1349 = vmatprep.subr.mxu0 0.0
    %1350 = vmatpush1.msra.mxu0 0.0
    %1351 = vmatprep.subr.mxu0 0.0
    %1352 = vmatpush1.msra.mxu0 0.0
    %1353 = vmatprep.subr.mxu0 0.0
    %1354 = vmatpush1.msra.mxu0 0.0
    %1355 = vmatprep.subr.mxu0 0.0
    %1356 = vmatpush1.msra.mxu0 0.0
    %1357 = vmatprep.subr.mxu0 0.0
    %1358 = vmatpush1.msra.mxu0 0.0
    %1359 = vmatprep.subr.mxu0 0.0
    %1360 = vmatpush1.msra.mxu0 0.0
    %1361 = vmatprep.subr.mxu0 0.0
    %1362 = vmatpush1.msra.mxu0 0.0
    %1363 = vmatprep.subr.mxu0 0.0
    %1364 = vmatpush1.msra.mxu0 0.0
    %1365 = vmatprep.subr.mxu0 0.0
    %1366 = vmatpush1.msra.mxu0 0.0
    %1367 = vmatprep.subr.mxu0 0.0
    %1368 = vmatpush1.msra.mxu0 0.0
    %1369 = vmatprep.mubr.f32.mxu0 0.0
    %1370 = vmatmul.mubr.f32.gmra.mrb[0].mxu0 %v1303
    %v1371 = vpop.f32.mrb[0].mxu0
    %v1372 = vadd.f32 0.0, %v1371
    %v1373 = vpop.f32.mrb[0].mxu0
    %1374 = vdwg.mxu0
    %1375 = vrot.lane.b32.xlu0 %v367, 64
    %v1376 = vpop.permute.xlu0 %1375
    %v1379 = vsel %vm376, %v1067, 0
    %1381 = vmatprep.subr.mxu0 0.0
    %1382 = vmatpush1.msra.mxu0 %v1376
    %1383 = vmatprep.subr.mxu0 0.0
    %1384 = vmatpush1.msra.mxu0 0.0
    %1385 = vmatprep.subr.mxu0 0.0
    %1386 = vmatpush1.msra.mxu0 0.0
    %1387 = vmatprep.subr.mxu0 0.0
    %1388 = vmatpush1.msra.mxu0 0.0
    %1389 = vmatprep.subr.mxu0 0.0
    %1390 = vmatpush1.msra.mxu0 0.0
    %1391 = vmatprep.subr.mxu0 0.0
    %1392 = vmatpush1.msra.mxu0 0.0
    %1393 = vmatprep.subr.mxu0 0.0
    %1394 = vmatpush1.msra.mxu0 0.0
    %1395 = vmatprep.subr.mxu0 0.0
    %1396 = vmatpush1.msra.mxu0 0.0
    %1397 = vmatprep.subr.mxu0 0.0
    %1398 = vmatpush1.msra.mxu0 0.0
    %1399 = vmatprep.subr.mxu0 0.0
    %1400 = vmatpush1.msra.mxu0 0.0
    %1401 = vmatprep.subr.mxu0 0.0
    %1402 = vmatpush1.msra.mxu0 0.0
    %1403 = vmatprep.subr.mxu0 0.0
    %1404 = vmatpush1.msra.mxu0 0.0
    %1405 = vmatprep.subr.mxu0 0.0
    %1406 = vmatpush1.msra.mxu0 0.0
    %1407 = vmatprep.subr.mxu0 0.0
    %1408 = vmatpush1.msra.mxu0 0.0
    %1409 = vmatprep.subr.mxu0 0.0
    %1410 = vmatpush1.msra.mxu0 0.0
    %1411 = vmatprep.subr.mxu0 0.0
    %1412 = vmatpush1.msra.mxu0 0.0
    %1413 = vmatprep.subr.mxu0 0.0
    %1414 = vmatpush1.msra.mxu0 0.0
    %1415 = vmatprep.subr.mxu0 0.0
    %1416 = vmatpush1.msra.mxu0 0.0
    %1417 = vmatprep.subr.mxu0 0.0
    %1418 = vmatpush1.msra.mxu0 0.0
    %1419 = vmatprep.subr.mxu0 0.0
    %1420 = vmatpush1.msra.mxu0 0.0
    %1421 = vmatprep.subr.mxu0 0.0
    %1422 = vmatpush1.msra.mxu0 0.0
    %1423 = vmatprep.subr.mxu0 0.0
    %1424 = vmatpush1.msra.mxu0 0.0
    %1425 = vmatprep.subr.mxu0 0.0
    %1426 = vmatpush1.msra.mxu0 0.0
    %1427 = vmatprep.subr.mxu0 0.0
    %1428 = vmatpush1.msra.mxu0 0.0
    %1429 = vmatprep.subr.mxu0 0.0
    %1430 = vmatpush1.msra.mxu0 0.0
    %1431 = vmatprep.subr.mxu0 0.0
    %1432 = vmatpush1.msra.mxu0 0.0
    %1433 = vmatprep.subr.mxu0 0.0
    %1434 = vmatpush1.msra.mxu0 0.0
    %1435 = vmatprep.subr.mxu0 0.0
    %1436 = vmatpush1.msra.mxu0 0.0
    %1437 = vmatprep.subr.mxu0 0.0
    %1438 = vmatpush1.msra.mxu0 0.0
    %1439 = vmatprep.subr.mxu0 0.0
    %1440 = vmatpush1.msra.mxu0 0.0
    %1441 = vmatprep.subr.mxu0 0.0
    %1442 = vmatpush1.msra.mxu0 0.0
    %1443 = vmatprep.subr.mxu0 0.0
    %1444 = vmatpush1.msra.mxu0 0.0
    %1445 = vmatprep.mubr.f32.mxu0 0.0
    %1446 = vmatmul.mubr.f32.gmra.mrb[0].mxu0 %v1379
    %v1447 = vpop.f32.mrb[0].mxu0
    %v1448 = vadd.f32 0.0, %v1447
    %v1449 = vpop.f32.mrb[0].mxu0
    %1450 = vdwg.mxu0
    %1451 = vrot.lane.b32.xlu0 %v369, 64
    %v1452 = vpop.permute.xlu0 %1451
    %v1455 = vsel %vm376, %v1068, 0
    %1457 = vmatprep.subr.mxu0 0.0
    %1458 = vmatpush1.msra.mxu0 %v1452
    %1459 = vmatprep.subr.mxu0 0.0
    %1460 = vmatpush1.msra.mxu0 0.0
    %1461 = vmatprep.subr.mxu0 0.0
    %1462 = vmatpush1.msra.mxu0 0.0
    %1463 = vmatprep.subr.mxu0 0.0
    %1464 = vmatpush1.msra.mxu0 0.0
    %1465 = vmatprep.subr.mxu0 0.0
    %1466 = vmatpush1.msra.mxu0 0.0
    %1467 = vmatprep.subr.mxu0 0.0
    %1468 = vmatpush1.msra.mxu0 0.0
    %1469 = vmatprep.subr.mxu0 0.0
    %1470 = vmatpush1.msra.mxu0 0.0
    %1471 = vmatprep.subr.mxu0 0.0
    %1472 = vmatpush1.msra.mxu0 0.0
    %1473 = vmatprep.subr.mxu0 0.0
    %1474 = vmatpush1.msra.mxu0 0.0
    %1475 = vmatprep.subr.mxu0 0.0
    %1476 = vmatpush1.msra.mxu0 0.0
    %1477 = vmatprep.subr.mxu0 0.0
    %1478 = vmatpush1.msra.mxu0 0.0
    %1479 = vmatprep.subr.mxu0 0.0
    %1480 = vmatpush1.msra.mxu0 0.0
    %1481 = vmatprep.subr.mxu0 0.0
    %1482 = vmatpush1.msra.mxu0 0.0
    %1483 = vmatprep.subr.mxu0 0.0
    %1484 = vmatpush1.msra.mxu0 0.0
    %1485 = vmatprep.subr.mxu0 0.0
    %1486 = vmatpush1.msra.mxu0 0.0
    %1487 = vmatprep.subr.mxu0 0.0
    %1488 = vmatpush1.msra.mxu0 0.0
    %1489 = vmatprep.subr.mxu0 0.0
    %1490 = vmatpush1.msra.mxu0 0.0
    %1491 = vmatprep.subr.mxu0 0.0
    %1492 = vmatpush1.msra.mxu0 0.0
    %1493 = vmatprep.subr.mxu0 0.0
    %1494 = vmatpush1.msra.mxu0 0.0
    %1495 = vmatprep.subr.mxu0 0.0
    %1496 = vmatpush1.msra.mxu0 0.0
    %1497 = vmatprep.subr.mxu0 0.0
    %1498 = vmatpush1.msra.mxu0 0.0
    %1499 = vmatprep.subr.mxu0 0.0
    %1500 = vmatpush1.msra.mxu0 0.0
    %1501 = vmatprep.subr.mxu0 0.0
    %1502 = vmatpush1.msra.mxu0 0.0
    %1503 = vmatprep.subr.mxu0 0.0
    %1504 = vmatpush1.msra.mxu0 0.0
    %1505 = vmatprep.subr.mxu0 0.0
    %1506 = vmatpush1.msra.mxu0 0.0
    %1507 = vmatprep.subr.mxu0 0.0
    %1508 = vmatpush1.msra.mxu0 0.0
    %1509 = vmatprep.subr.mxu0 0.0
    %1510 = vmatpush1.msra.mxu0 0.0
    %1511 = vmatprep.subr.mxu0 0.0
    %1512 = vmatpush1.msra.mxu0 0.0
    %1513 = vmatprep.subr.mxu0 0.0
    %1514 = vmatpush1.msra.mxu0 0.0
    %1515 = vmatprep.subr.mxu0 0.0
    %1516 = vmatpush1.msra.mxu0 0.0
    %1517 = vmatprep.subr.mxu0 0.0
    %1518 = vmatpush1.msra.mxu0 0.0
    %1519 = vmatprep.subr.mxu0 0.0
    %1520 = vmatpush1.msra.mxu0 0.0
    %1521 = vmatprep.mubr.f32.mxu0 0.0
    %1522 = vmatmul.mubr.f32.gmra.mrb[0].mxu0 %v1455
    %v1523 = vpop.f32.mrb[0].mxu0
    %v1524 = vadd.f32 0.0, %v1523
    %v1525 = vpop.f32.mrb[0].mxu0
    %1526 = vdwg.mxu0
    %1527 = vrot.lane.b32.xlu0 %v371, 64
    %v1528 = vpop.permute.xlu0 %1527
    %v1531 = vsel %vm376, %v1069, 0
    %1533 = vmatprep.subr.mxu0 0.0
    %1534 = vmatpush1.msra.mxu0 %v1528
    %1535 = vmatprep.subr.mxu0 0.0
    %1536 = vmatpush1.msra.mxu0 0.0
    %1537 = vmatprep.subr.mxu0 0.0
    %1538 = vmatpush1.msra.mxu0 0.0
    %1539 = vmatprep.subr.mxu0 0.0
    %1540 = vmatpush1.msra.mxu0 0.0
    %1541 = vmatprep.subr.mxu0 0.0
    %1542 = vmatpush1.msra.mxu0 0.0
    %1543 = vmatprep.subr.mxu0 0.0
    %1544 = vmatpush1.msra.mxu0 0.0
    %1545 = vmatprep.subr.mxu0 0.0
    %1546 = vmatpush1.msra.mxu0 0.0
    %1547 = vmatprep.subr.mxu0 0.0
    %1548 = vmatpush1.msra.mxu0 0.0
    %1549 = vmatprep.subr.mxu0 0.0
    %1550 = vmatpush1.msra.mxu0 0.0
    %1551 = vmatprep.subr.mxu0 0.0
    %1552 = vmatpush1.msra.mxu0 0.0
    %1553 = vmatprep.subr.mxu0 0.0
    %1554 = vmatpush1.msra.mxu0 0.0
    %1555 = vmatprep.subr.mxu0 0.0
    %1556 = vmatpush1.msra.mxu0 0.0
    %1557 = vmatprep.subr.mxu0 0.0
    %1558 = vmatpush1.msra.mxu0 0.0
    %1559 = vmatprep.subr.mxu0 0.0
    %1560 = vmatpush1.msra.mxu0 0.0
    %1561 = vmatprep.subr.mxu0 0.0
    %1562 = vmatpush1.msra.mxu0 0.0
    %1563 = vmatprep.subr.mxu0 0.0
    %1564 = vmatpush1.msra.mxu0 0.0
    %1565 = vmatprep.subr.mxu0 0.0
    %1566 = vmatpush1.msra.mxu0 0.0
    %1567 = vmatprep.subr.mxu0 0.0
    %1568 = vmatpush1.msra.mxu0 0.0
    %1569 = vmatprep.subr.mxu0 0.0
    %1570 = vmatpush1.msra.mxu0 0.0
    %1571 = vmatprep.subr.mxu0 0.0
    %1572 = vmatpush1.msra.mxu0 0.0
    %1573 = vmatprep.subr.mxu0 0.0
    %1574 = vmatpush1.msra.mxu0 0.0
    %1575 = vmatprep.subr.mxu0 0.0
    %1576 = vmatpush1.msra.mxu0 0.0
    %1577 = vmatprep.subr.mxu0 0.0
    %1578 = vmatpush1.msra.mxu0 0.0
    %1579 = vmatprep.subr.mxu0 0.0
    %1580 = vmatpush1.msra.mxu0 0.0
    %1581 = vmatprep.subr.mxu0 0.0
    %1582 = vmatpush1.msra.mxu0 0.0
    %1583 = vmatprep.subr.mxu0 0.0
    %1584 = vmatpush1.msra.mxu0 0.0
    %1585 = vmatprep.subr.mxu0 0.0
    %1586 = vmatpush1.msra.mxu0 0.0
    %1587 = vmatprep.subr.mxu0 0.0
    %1588 = vmatpush1.msra.mxu0 0.0
    %1589 = vmatprep.subr.mxu0 0.0
    %1590 = vmatpush1.msra.mxu0 0.0
    %1591 = vmatprep.subr.mxu0 0.0
    %1592 = vmatpush1.msra.mxu0 0.0
    %1593 = vmatprep.subr.mxu0 0.0
    %1594 = vmatpush1.msra.mxu0 0.0
    %1595 = vmatprep.subr.mxu0 0.0
    %1596 = vmatpush1.msra.mxu0 0.0
    %1597 = vmatprep.mubr.f32.mxu0 0.0
    %1598 = vmatmul.mubr.f32.gmra.mrb[0].mxu0 %v1531
    %v1599 = vpop.f32.mrb[0].mxu0
    %v1600 = vadd.f32 0.0, %v1599
    %v1601 = vpop.f32.mrb[0].mxu0
    %1602 = vdwg.mxu0
    %1603 = vrot.lane.b32.xlu0 %v373, 64
    %v1604 = vpop.permute.xlu0 %1603
    %v1607 = vsel %vm376, %v1070, 0
    %1609 = vmatprep.subr.mxu0 0.0
    %1610 = vmatpush1.msra.mxu0 %v1604
    %1611 = vmatprep.subr.mxu0 0.0
    %1612 = vmatpush1.msra.mxu0 0.0
    %1613 = vmatprep.subr.mxu0 0.0
    %1614 = vmatpush1.msra.mxu0 0.0
    %1615 = vmatprep.subr.mxu0 0.0
    %1616 = vmatpush1.msra.mxu0 0.0
    %1617 = vmatprep.subr.mxu0 0.0
    %1618 = vmatpush1.msra.mxu0 0.0
    %1619 = vmatprep.subr.mxu0 0.0
    %1620 = vmatpush1.msra.mxu0 0.0
    %1621 = vmatprep.subr.mxu0 0.0
    %1622 = vmatpush1.msra.mxu0 0.0
    %1623 = vmatprep.subr.mxu0 0.0
    %1624 = vmatpush1.msra.mxu0 0.0
    %1625 = vmatprep.subr.mxu0 0.0
    %1626 = vmatpush1.msra.mxu0 0.0
    %1627 = vmatprep.subr.mxu0 0.0
    %1628 = vmatpush1.msra.mxu0 0.0
    %1629 = vmatprep.subr.mxu0 0.0
    %1630 = vmatpush1.msra.mxu0 0.0
    %1631 = vmatprep.subr.mxu0 0.0
    %1632 = vmatpush1.msra.mxu0 0.0
    %1633 = vmatprep.subr.mxu0 0.0
    %1634 = vmatpush1.msra.mxu0 0.0
    %1635 = vmatprep.subr.mxu0 0.0
    %1636 = vmatpush1.msra.mxu0 0.0
    %1637 = vmatprep.subr.mxu0 0.0
    %1638 = vmatpush1.msra.mxu0 0.0
    %1639 = vmatprep.subr.mxu0 0.0
    %1640 = vmatpush1.msra.mxu0 0.0
    %1641 = vmatprep.subr.mxu0 0.0
    %1642 = vmatpush1.msra.mxu0 0.0
    %1643 = vmatprep.subr.mxu0 0.0
    %1644 = vmatpush1.msra.mxu0 0.0
    %1645 = vmatprep.subr.mxu0 0.0
    %1646 = vmatpush1.msra.mxu0 0.0
    %1647 = vmatprep.subr.mxu0 0.0
    %1648 = vmatpush1.msra.mxu0 0.0
    %1649 = vmatprep.subr.mxu0 0.0
    %1650 = vmatpush1.msra.mxu0 0.0
    %1651 = vmatprep.subr.mxu0 0.0
    %1652 = vmatpush1.msra.mxu0 0.0
    %1653 = vmatprep.subr.mxu0 0.0
    %1654 = vmatpush1.msra.mxu0 0.0
    %1655 = vmatprep.subr.mxu0 0.0
    %1656 = vmatpush1.msra.mxu0 0.0
    %1657 = vmatprep.subr.mxu0 0.0
    %1658 = vmatpush1.msra.mxu0 0.0
    %1659 = vmatprep.subr.mxu0 0.0
    %1660 = vmatpush1.msra.mxu0 0.0
    %1661 = vmatprep.subr.mxu0 0.0
    %1662 = vmatpush1.msra.mxu0 0.0
    %1663 = vmatprep.subr.mxu0 0.0
    %1664 = vmatpush1.msra.mxu0 0.0
    %1665 = vmatprep.subr.mxu0 0.0
    %1666 = vmatpush1.msra.mxu0 0.0
    %1667 = vmatprep.subr.mxu0 0.0
    %1668 = vmatpush1.msra.mxu0 0.0
    %1669 = vmatprep.subr.mxu0 0.0
    %1670 = vmatpush1.msra.mxu0 0.0
    %1671 = vmatprep.subr.mxu0 0.0
    %1672 = vmatpush1.msra.mxu0 0.0
    %1673 = vmatprep.mubr.f32.mxu0 0.0
    %1674 = vmatmul.mubr.f32.gmra.mrb[0].mxu0 %v1607
    %v1675 = vpop.f32.mrb[0].mxu0
    %v1676 = vadd.f32 0.0, %v1675
    %v1677 = vpop.f32.mrb[0].mxu0
    %1678 = vdwg.mxu0
    %1681 = vrot.lane.b32.xlu0 %v1296, 8
    %v1682 = vpop.permute.xlu0 %1681
    %1683 = vrot.lane.b32.xlu0 %v1372, 8
    %v1684 = vpop.permute.xlu0 %1683
    %1689 = vrot.lane.b32.xlu0 %v1448, 16
    %v1690 = vpop.permute.xlu0 %1689
    %1691 = vrot.lane.b32.xlu0 %v1524, 16
    %v1692 = vpop.permute.xlu0 %1691
    %1697 = vrot.lane.b32.xlu0 %v1600, 24
    %v1698 = vpop.permute.xlu0 %1697
    %1699 = vrot.lane.b32.xlu0 %v1676, 24
    %v1700 = vpop.permute.xlu0 %1699
    %v1703 = vsel %vm376, %v1144, %v1682
    %v1704 = vsel %vm376, %v1220, %v1684
    %vm1705 = vcmask 130048
    %v1706 = vsel %vm1705, %v1703, %v1690
    %v1707 = vsel %vm1705, %v1704, %v1692
    %vm1708 = vcmask 195584
    %v1709 = vsel %vm1708, %v1706, %v1698
    %v1710 = vsel %vm1708, %v1707, %v1700
    %v1712 = vlaneseq
    %v1713 = vshrl.u32 %v1712, 7
    %v1714 = vsub.s32 0, %v1713
    %v1715 = vrot.slane %v343, %v1714
    %v1718 = vsel %vm255, %v1709, 0
    %v1721 = vsel %vm255, %v1710, 0
    %1723 = vmatprep.subr.mxu0 0.0
    %1724 = vmatpush1.msra.mxu0 %v339
    %1725 = vmatprep.subr.mxu0 0.0
    %1726 = vmatpush1.msra.mxu0 %v340
    %1727 = vmatprep.subr.mxu0 0.0
    %1728 = vmatpush1.msra.mxu0 %v341
    %1729 = vmatprep.subr.mxu0 0.0
    %1730 = vmatpush1.msra.mxu0 %v342
    %1731 = vmatprep.subr.mxu0 0.0
    %1732 = vmatpush1.msra.mxu0 0.0
    %1733 = vmatprep.subr.mxu0 0.0
    %1734 = vmatpush1.msra.mxu0 0.0
    %1735 = vmatprep.subr.mxu0 0.0
    %1736 = vmatpush1.msra.mxu0 0.0
    %1737 = vmatprep.subr.mxu0 0.0
    %1738 = vmatpush1.msra.mxu0 0.0
    %1739 = vmatprep.subr.mxu0 0.0
    %1740 = vmatpush1.msra.mxu0 0.0
    %1741 = vmatprep.subr.mxu0 0.0
    %1742 = vmatpush1.msra.mxu0 0.0
    %1743 = vmatprep.subr.mxu0 0.0
    %1744 = vmatpush1.msra.mxu0 0.0
    %1745 = vmatprep.subr.mxu0 0.0
    %1746 = vmatpush1.msra.mxu0 0.0
    %1747 = vmatprep.subr.mxu0 0.0
    %1748 = vmatpush1.msra.mxu0 0.0
    %1749 = vmatprep.subr.mxu0 0.0
    %1750 = vmatpush1.msra.mxu0 0.0
    %1751 = vmatprep.subr.mxu0 0.0
    %1752 = vmatpush1.msra.mxu0 0.0
    %1753 = vmatprep.subr.mxu0 0.0
    %1754 = vmatpush1.msra.mxu0 0.0
    %1755 = vmatprep.subr.mxu0 0.0
    %1756 = vmatpush1.msra.mxu0 0.0
    %1757 = vmatprep.subr.mxu0 0.0
    %1758 = vmatpush1.msra.mxu0 0.0
    %1759 = vmatprep.subr.mxu0 0.0
    %1760 = vmatpush1.msra.mxu0 0.0
    %1761 = vmatprep.subr.mxu0 0.0
    %1762 = vmatpush1.msra.mxu0 0.0
    %1763 = vmatprep.subr.mxu0 0.0
    %1764 = vmatpush1.msra.mxu0 0.0
    %1765 = vmatprep.subr.mxu0 0.0
    %1766 = vmatpush1.msra.mxu0 0.0
    %1767 = vmatprep.subr.mxu0 0.0
    %1768 = vmatpush1.msra.mxu0 0.0
    %1769 = vmatprep.subr.mxu0 0.0
    %1770 = vmatpush1.msra.mxu0 0.0
    %1771 = vmatprep.subr.mxu0 0.0
    %1772 = vmatpush1.msra.mxu0 0.0
    %1773 = vmatprep.subr.mxu0 0.0
    %1774 = vmatpush1.msra.mxu0 0.0
    %1775 = vmatprep.subr.mxu0 0.0
    %1776 = vmatpush1.msra.mxu0 0.0
    %1777 = vmatprep.subr.mxu0 0.0
    %1778 = vmatpush1.msra.mxu0 0.0
    %1779 = vmatprep.subr.mxu0 0.0
    %1780 = vmatpush1.msra.mxu0 0.0
    %1781 = vmatprep.subr.mxu0 0.0
    %1782 = vmatpush1.msra.mxu0 0.0
    %1783 = vmatprep.subr.mxu0 0.0
    %1784 = vmatpush1.msra.mxu0 0.0
    %1785 = vmatprep.subr.mxu0 0.0
    %1786 = vmatpush1.msra.mxu0 0.0
    %1787 = vmatprep.mubr.f32.mxu0 0.0
    %1788 = vmatmul.mubr.f32.gmra.mrb[0].mxu0 %v1718
    %v1789 = vpop.f32.mrb[0].mxu0
    %v1790 = vadd.f32 %v1715, %v1789
    %v1791 = vpop.f32.mrb[0].mxu0
    %1792 = vmatprep.mubr.f32.mxu0 0.0
    %1793 = vmatmul.mubr.f32.gmra.mrb[0].mxu0 %v1721
    %v1794 = vpop.f32.mrb[0].mxu0
    %v1795 = vadd.f32 %v1715, %v1794
    %v1796 = vpop.f32.mrb[0].mxu0
    %1797 = vdwg.mxu0
    %v1798 = vadd.f32 %v240, %v1790
    %v1799 = vadd.f32 %v241, %v1795
    %v1800 = vld [vmem:[#allocation19] sm:$0x1]
    %v1801 = vld [vmem:[#allocation20] sm:$0x1]
    %v1802 = vsel %vm255, %v1798, 0.0
    %1803 = vadd.xlane.f32.xlu0 %v1802
    %v1804 = vpop.xlane.xlu0 %1803
    %v1805 = vsel %vm255, %v1799, 0.0
    %1806 = vadd.xlane.f32.xlu0 %v1805
    %v1807 = vpop.xlane.xlu0 %1806
    %v1808 = vrcp.pop 32.0
    %v1809 = vmul.f32 %v1804, %v1808
    %v1810 = vmul.f32 %v1807, %v1808
    %v1811 = vsub.f32 %v1798, %v1809
    %v1812 = vsub.f32 %v1799, %v1810
    %v1813 = vmul.f32 %v1811, %v1811
    %v1814 = vmul.f32 %v1812, %v1812
    %v1815 = vsel %vm255, %v1813, 0.0
    %1816 = vadd.xlane.f32.xlu0 %v1815
    %v1817 = vpop.xlane.xlu0 %1816
    %v1818 = vsel %vm255, %v1814, 0.0
    %1819 = vadd.xlane.f32.xlu0 %v1818
    %v1820 = vpop.xlane.xlu0 %1819
    %v1821 = vmul.f32 %v1817, %v1808
    %v1822 = vmul.f32 %v1820, %v1808
    %v1823 = vadd.f32 %v1821, 1e-06
    %v1824 = vadd.f32 %v1822, 1e-06
    %v1825 = vrsqrt.pop %v1823
    %v1826 = vrsqrt.pop %v1824
    %v1827 = vmul.f32 %v1811, %v1825
    %v1828 = vmul.f32 %v1812, %v1826
    %v1829 = vlaneseq
    %v1830 = vshrl.u32 %v1829, 7
    %v1831 = vsub.s32 0, %v1830
    %v1832 = vrot.slane %v1800, %v1831
    %v1833 = vmul.f32 %v1827, %v1832
    %v1834 = vmul.f32 %v1828, %v1832
    %v1835 = vlaneseq
    %v1836 = vshrl.u32 %v1835, 7
    %v1837 = vsub.s32 0, %v1836
    %v1838 = vrot.slane %v1801, %v1837
    %v1839 = vadd.f32 %v1833, %v1838
    %v1840 = vadd.f32 %v1834, %v1838
    %v1841 = vld [vmem:[%s8] sm:$0xff]
    %v1842 = vld [vmem:[%s8 + $0x8] sm:$0xff]
    %v1843 = vld [vmem:[%s8 + $0x10] sm:$0xff]
    %v1844 = vld [vmem:[%s8 + $0x18] sm:$0xff]
    %v1845 = vld [vmem:[#allocation13] sm:$0x1]
    %v1847 = vlaneseq
    %v1848 = vshrl.u32 %v1847, 7
    %v1849 = vsub.s32 0, %v1848
    %v1850 = vrot.slane %v1845, %v1849
    %v1853 = vsel %vm255, %v1839, 0
    %v1856 = vsel %vm255, %v1840, 0
    %1858 = vmatprep.subr.mxu0 0.0
    %1859 = vmatpush1.msra.mxu0 %v1841
    %1860 = vmatprep.subr.mxu0 0.0
    %1861 = vmatpush1.msra.mxu0 %v1842
    %1862 = vmatprep.subr.mxu0 0.0
    %1863 = vmatpush1.msra.mxu0 %v1843
    %1864 = vmatprep.subr.mxu0 0.0
    %1865 = vmatpush1.msra.mxu0 %v1844
    %1866 = vmatprep.subr.mxu0 0.0
    %1867 = vmatpush1.msra.mxu0 0.0
    %1868 = vmatprep.subr.mxu0 0.0
    %1869 = vmatpush1.msra.mxu0 0.0
    %1870 = vmatprep.subr.mxu0 0.0
    %1871 = vmatpush1.msra.mxu0 0.0
    %1872 = vmatprep.subr.mxu0 0.0
    %1873 = vmatpush1.msra.mxu0 0.0
    %1874 = vmatprep.subr.mxu0 0.0
    %1875 = vmatpush1.msra.mxu0 0.0
    %1876 = vmatprep.subr.mxu0 0.0
    %1877 = vmatpush1.msra.mxu0 0.0
    %1878 = vmatprep.subr.mxu0 0.0
    %1879 = vmatpush1.msra.mxu0 0.0
    %1880 = vmatprep.subr.mxu0 0.0
    %1881 = vmatpush1.msra.mxu0 0.0
    %1882 = vmatprep.subr.mxu0 0.0
    %1883 = vmatpush1.msra.mxu0 0.0
    %1884 = vmatprep.subr.mxu0 0.0
    %1885 = vmatpush1.msra.mxu0 0.0
    %1886 = vmatprep.subr.mxu0 0.0
    %1887 = vmatpush1.msra.mxu0 0.0
    %1888 = vmatprep.subr.mxu0 0.0
    %1889 = vmatpush1.msra.mxu0 0.0
    %1890 = vmatprep.subr.mxu0 0.0
    %1891 = vmatpush1.msra.mxu0 0.0
    %1892 = vmatprep.subr.mxu0 0.0
    %1893 = vmatpush1.msra.mxu0 0.0
    %1894 = vmatprep.subr.mxu0 0.0
    %1895 = vmatpush1.msra.mxu0 0.0
    %1896 = vmatprep.subr.mxu0 0.0
    %1897 = vmatpush1.msra.mxu0 0.0
    %1898 = vmatprep.subr.mxu0 0.0
    %1899 = vmatpush1.msra.mxu0 0.0
    %1900 = vmatprep.subr.mxu0 0.0
    %1901 = vmatpush1.msra.mxu0 0.0
    %1902 = vmatprep.subr.mxu0 0.0
    %1903 = vmatpush1.msra.mxu0 0.0
    %1904 = vmatprep.subr.mxu0 0.0
    %1905 = vmatpush1.msra.mxu0 0.0
    %1906 = vmatprep.subr.mxu0 0.0
    %1907 = vmatpush1.msra.mxu0 0.0
    %1908 = vmatprep.subr.mxu0 0.0
    %1909 = vmatpush1.msra.mxu0 0.0
    %1910 = vmatprep.subr.mxu0 0.0
    %1911 = vmatpush1.msra.mxu0 0.0
    %1912 = vmatprep.subr.mxu0 0.0
    %1913 = vmatpush1.msra.mxu0 0.0
    %1914 = vmatprep.subr.mxu0 0.0
    %1915 = vmatpush1.msra.mxu0 0.0
    %1916 = vmatprep.subr.mxu0 0.0
    %1917 = vmatpush1.msra.mxu0 0.0
    %1918 = vmatprep.subr.mxu0 0.0
    %1919 = vmatpush1.msra.mxu0 0.0
    %1920 = vmatprep.subr.mxu0 0.0
    %1921 = vmatpush1.msra.mxu0 0.0
    %1922 = vmatprep.mubr.f32.mxu0 0.0
    %1923 = vmatmul.mubr.f32.gmra.mrb[0].mxu0 %v1853
    %v1924 = vpop.f32.mrb[0].mxu0
    %v1925 = vadd.f32 %v1850, %v1924
    %v1926 = vpop.f32.mrb[0].mxu0
    %1927 = vmatprep.mubr.f32.mxu0 0.0
    %1928 = vmatmul.mubr.f32.gmra.mrb[0].mxu0 %v1856
    %v1929 = vpop.f32.mrb[0].mxu0
    %v1930 = vadd.f32 %v1850, %v1929
    %v1931 = vpop.f32.mrb[0].mxu0
    %1932 = vdwg.mxu0
    %v1933 = vld [vmem:[%s10] sm:$0xff]
    %v1934 = vld [vmem:[%s10 + $0x8] sm:$0xff]
    %v1935 = vld [vmem:[%s10 + $0x10] sm:$0xff]
    %v1936 = vld [vmem:[%s10 + $0x18] sm:$0xff]
    %v1937 = vld [vmem:[#allocation14] sm:$0x1]
    %v1939 = vlaneseq
    %v1940 = vshrl.u32 %v1939, 7
    %v1941 = vsub.s32 0, %v1940
    %v1942 = vrot.slane %v1937, %v1941
    %v1945 = vsel %vm255, %v242, 0
    %v1948 = vsel %vm255, %v243, 0
    %1950 = vmatprep.subr.mxu0 0.0
    %1951 = vmatpush1.msra.mxu0 %v1933
    %1952 = vmatprep.subr.mxu0 0.0
    %1953 = vmatpush1.msra.mxu0 %v1934
    %1954 = vmatprep.subr.mxu0 0.0
    %1955 = vmatpush1.msra.mxu0 %v1935
    %1956 = vmatprep.subr.mxu0 0.0
    %1957 = vmatpush1.msra.mxu0 %v1936
    %1958 = vmatprep.subr.mxu0 0.0
    %1959 = vmatpush1.msra.mxu0 0.0
    %1960 = vmatprep.subr.mxu0 0.0
    %1961 = vmatpush1.msra.mxu0 0.0
    %1962 = vmatprep.subr.mxu0 0.0
    %1963 = vmatpush1.msra.mxu0 0.0
    %1964 = vmatprep.subr.mxu0 0.0
    %1965 = vmatpush1.msra.mxu0 0.0
    %1966 = vmatprep.subr.mxu0 0.0
    %1967 = vmatpush1.msra.mxu0 0.0
    %1968 = vmatprep.subr.mxu0 0.0
    %1969 = vmatpush1.msra.mxu0 0.0
    %1970 = vmatprep.subr.mxu0 0.0
    %1971 = vmatpush1.msra.mxu0 0.0
    %1972 = vmatprep.subr.mxu0 0.0
    %1973 = vmatpush1.msra.mxu0 0.0
    %1974 = vmatprep.subr.mxu0 0.0
    %1975 = vmatpush1.msra.mxu0 0.0
    %1976 = vmatprep.subr.mxu0 0.0
    %1977 = vmatpush1.msra.mxu0 0.0
    %1978 = vmatprep.subr.mxu0 0.0
    %1979 = vmatpush1.msra.mxu0 0.0
    %1980 = vmatprep.subr.mxu0 0.0
    %1981 = vmatpush1.msra.mxu0 0.0
    %1982 = vmatprep.subr.mxu0 0.0
    %1983 = vmatpush1.msra.mxu0 0.0
    %1984 = vmatprep.subr.mxu0 0.0
    %1985 = vmatpush1.msra.mxu0 0.0
    %1986 = vmatprep.subr.mxu0 0.0
    %1987 = vmatpush1.msra.mxu0 0.0
    %1988 = vmatprep.subr.mxu0 0.0
    %1989 = vmatpush1.msra.mxu0 0.0
    %1990 = vmatprep.subr.mxu0 0.0
    %1991 = vmatpush1.msra.mxu0 0.0
    %1992 = vmatprep.subr.mxu0 0.0
    %1993 = vmatpush1.msra.mxu0 0.0
    %1994 = vmatprep.subr.mxu0 0.0
    %1995 = vmatpush1.msra.mxu0 0.0
    %1996 = vmatprep.subr.mxu0 0.0
    %1997 = vmatpush1.msra.mxu0 0.0
    %1998 = vmatprep.subr.mxu0 0.0
    %1999 = vmatpush1.msra.mxu0 0.0
    %2000 = vmatprep.subr.mxu0 0.0
    %2001 = vmatpush1.msra.mxu0 0.0
    %2002 = vmatprep.subr.mxu0 0.0
    %2003 = vmatpush1.msra.mxu0 0.0
    %2004 = vmatprep.subr.mxu0 0.0
    %2005 = vmatpush1.msra.mxu0 0.0
    %2006 = vmatprep.subr.mxu0 0.0
    %2007 = vmatpush1.msra.mxu0 0.0
    %2008 = vmatprep.subr.mxu0 0.0
    %2009 = vmatpush1.msra.mxu0 0.0
    %2010 = vmatprep.subr.mxu0 0.0
    %2011 = vmatpush1.msra.mxu0 0.0
    %2012 = vmatprep.subr.mxu0 0.0
    %2013 = vmatpush1.msra.mxu0 0.0
    %2014 = vmatprep.mubr.f32.mxu0 0.0
    %2015 = vmatmul.mubr.f32.gmra.mrb[0].mxu0 %v1945
    %v2016 = vpop.f32.mrb[0].mxu0
    %v2017 = vadd.f32 %v1942, %v2016
    %v2018 = vpop.f32.mrb[0].mxu0
    %2019 = vmatprep.mubr.f32.mxu0 0.0
    %2020 = vmatmul.mubr.f32.gmra.mrb[0].mxu0 %v1948
    %v2021 = vpop.f32.mrb[0].mxu0
    %v2022 = vadd.f32 %v1942, %v2021
    %v2023 = vpop.f32.mrb[0].mxu0
    %2024 = vdwg.mxu0
    %v2025 = vld [vmem:[#allocation7] sm:$0xff]
    %v2026 = vld [vmem:[#allocation7 + $0x8] sm:$0xff]
    %v2027 = vld [vmem:[#allocation16] sm:$0xff]
    %v2028 = vld [vmem:[#allocation16 + $0x8] sm:$0xff]
    %v2029 = vld [vmem:[#allocation16 + $0x10] sm:$0xff]
    %v2030 = vld [vmem:[#allocation16 + $0x18] sm:$0xff]
    %v2031 = vld [vmem:[#allocation17] sm:$0x1]
    %v2032 = vmul.f32 %v1925, 0.35355338
    %v2033 = vmul.f32 %v1930, 0.35355338
    %2036 = vrot.lane.b32.xlu0 %v2032, 120
    %v2037 = vpop.permute.xlu0 %2036
    %2038 = vrot.lane.b32.xlu0 %v2033, 120
    %v2039 = vpop.permute.xlu0 %2038
    %2040 = vrot.lane.b32.xlu0 %v2032, 112
    %v2041 = vpop.permute.xlu0 %2040
    %2042 = vrot.lane.b32.xlu0 %v2033, 112
    %v2043 = vpop.permute.xlu0 %2042
    %2044 = vrot.lane.b32.xlu0 %v2032, 104
    %v2045 = vpop.permute.xlu0 %2044
    %2046 = vrot.lane.b32.xlu0 %v2033, 104
    %v2047 = vpop.permute.xlu0 %2046
    %2050 = vrot.lane.b32.xlu0 %v2017, 120
    %v2051 = vpop.permute.xlu0 %2050
    %2052 = vrot.lane.b32.xlu0 %v2022, 120
    %v2053 = vpop.permute.xlu0 %2052
    %2054 = vrot.lane.b32.xlu0 %v2017, 112
    %v2055 = vpop.permute.xlu0 %2054
    %2056 = vrot.lane.b32.xlu0 %v2022, 112
    %v2057 = vpop.permute.xlu0 %2056
    %2058 = vrot.lane.b32.xlu0 %v2017, 104
    %v2059 = vpop.permute.xlu0 %2058
    %2060 = vrot.lane.b32.xlu0 %v2022, 104
    %v2061 = vpop.permute.xlu0 %2060
    %v2062 = vsel %vm376, %v2032, 0
    %v2064 = vsel %vm376, %v2017, 0
    %2066 = vmatprep.subr.mxu0 0.0
    %2067 = vmatpush1.xpose.msra.mxu0 %v2064
    %2068 = vmatprep.subr.mxu0 0.0
    %2069 = vmatpush1.xpose.msra.mxu0 0.0
    %2070 = vmatprep.subr.mxu0 0.0
    %2071 = vmatpush1.xpose.msra.mxu0 0.0
    %2072 = vmatprep.subr.mxu0 0.0
    %2073 = vmatpush1.xpose.msra.mxu0 0.0
    %2074 = vmatprep.subr.mxu0 0.0
    %2075 = vmatpush1.xpose.msra.mxu0 0.0
    %2076 = vmatprep.subr.mxu0 0.0
    %2077 = vmatpush1.xpose.msra.mxu0 0.0
    %2078 = vmatprep.subr.mxu0 0.0
    %2079 = vmatpush1.xpose.msra.mxu0 0.0
    %2080 = vmatprep.subr.mxu0 0.0
    %2081 = vmatpush1.xpose.msra.mxu0 0.0
    %2082 = vmatprep.subr.mxu0 0.0
    %2083 = vmatpush1.xpose.msra.mxu0 0.0
    %2084 = vmatprep.subr.mxu0 0.0
    %2085 = vmatpush1.xpose.msra.mxu0 0.0
    %2086 = vmatprep.subr.mxu0 0.0
    %2087 = vmatpush1.xpose.msra.mxu0 0.0
    %2088 = vmatprep.subr.mxu0 0.0
    %2089 = vmatpush1.xpose.msra.mxu0 0.0
    %2090 = vmatprep.subr.mxu0 0.0
    %2091 = vmatpush1.xpose.msra.mxu0 0.0
    %2092 = vmatprep.subr.mxu0 0.0
    %2093 = vmatpush1.xpose.msra.mxu0 0.0
    %2094 = vmatprep.subr.mxu0 0.0
    %2095 = vmatpush1.xpose.msra.mxu0 0.0
    %2096 = vmatprep.subr.mxu0 0.0
    %2097 = vmatpush1.xpose.msra.mxu0 0.0
    %2098 = vmatprep.subr.mxu0 0.0
    %2099 = vmatpush1.xpose.msra.mxu0 0.0
    %2100 = vmatprep.subr.mxu0 0.0
    %2101 = vmatpush1.xpose.msra.mxu0 0.0
    %2102 = vmatprep.subr.mxu0 0.0
    %2103 = vmatpush1.xpose.msra.mxu0 0.0
    %2104 = vmatprep.subr.mxu0 0.0
    %2105 = vmatpush1.xpose.msra.mxu0 0.0
    %2106 = vmatprep.subr.mxu0 0.0
    %2107 = vmatpush1.xpose.msra.mxu0 0.0
    %2108 = vmatprep.subr.mxu0 0.0
    %2109 = vmatpush1.xpose.msra.mxu0 0.0
    %2110 = vmatprep.subr.mxu0 0.0
    %2111 = vmatpush1.xpose.msra.mxu0 0.0
    %2112 = vmatprep.subr.mxu0 0.0
    %2113 = vmatpush1.xpose.msra.mxu0 0.0
    %2114 = vmatprep.subr.mxu0 0.0
    %2115 = vmatpush1.xpose.msra.mxu0 0.0
    %2116 = vmatprep.subr.mxu0 0.0
    %2117 = vmatpush1.xpose.msra.mxu0 0.0
    %2118 = vmatprep.subr.mxu0 0.0
    %2119 = vmatpush1.xpose.msra.mxu0 0.0
    %2120 = vmatprep.subr.mxu0 0.0
    %2121 = vmatpush1.xpose.msra.mxu0 0.0
    %2122 = vmatprep.subr.mxu0 0.0
    %2123 = vmatpush1.xpose.msra.mxu0 0.0
    %2124 = vmatprep.subr.mxu0 0.0
    %2125 = vmatpush1.xpose.msra.mxu0 0.0
    %2126 = vmatprep.subr.mxu0 0.0
    %2127 = vmatpush1.xpose.msra.mxu0 0.0
    %2128 = vmatprep.subr.mxu0 0.0
    %2129 = vmatpush1.xpose.msra.mxu0 0.0
    %2130 = vmatprep.mubr.f32.mxu0 0.0
    %2131 = vmatmul.mubr.f32.gmra.mrb[0].mxu0 %v2062
    %v2132 = vpop.f32.mrb[0].mxu0
    %v2133 = vadd.f32 %v2025, %v2132
    %v2134 = vpop.f32.mrb[0].mxu0
    %2135 = vdwg.mxu0
    %v2136 = vsel %vm376, %v2033, 0
    %v2138 = vsel %vm376, %v2022, 0
    %2140 = vmatprep.subr.mxu0 0.0
    %2141 = vmatpush1.xpose.msra.mxu0 %v2138
    %2142 = vmatprep.subr.mxu0 0.0
    %2143 = vmatpush1.xpose.msra.mxu0 0.0
    %2144 = vmatprep.subr.mxu0 0.0
    %2145 = vmatpush1.xpose.msra.mxu0 0.0
    %2146 = vmatprep.subr.mxu0 0.0
    %2147 = vmatpush1.xpose.msra.mxu0 0.0
    %2148 = vmatprep.subr.mxu0 0.0
    %2149 = vmatpush1.xpose.msra.mxu0 0.0
    %2150 = vmatprep.subr.mxu0 0.0
    %2151 = vmatpush1.xpose.msra.mxu0 0.0
    %2152 = vmatprep.subr.mxu0 0.0
    %2153 = vmatpush1.xpose.msra.mxu0 0.0
    %2154 = vmatprep.subr.mxu0 0.0
    %2155 = vmatpush1.xpose.msra.mxu0 0.0
    %2156 = vmatprep.subr.mxu0 0.0
    %2157 = vmatpush1.xpose.msra.mxu0 0.0
    %2158 = vmatprep.subr.mxu0 0.0
    %2159 = vmatpush1.xpose.msra.mxu0 0.0
    %2160 = vmatprep.subr.mxu0 0.0
    %2161 = vmatpush1.xpose.msra.mxu0 0.0
    %2162 = vmatprep.subr.mxu0 0.0
    %2163 = vmatpush1.xpose.msra.mxu0 0.0
    %2164 = vmatprep.subr.mxu0 0.0
    %2165 = vmatpush1.xpose.msra.mxu0 0.0
    %2166 = vmatprep.subr.mxu0 0.0
    %2167 = vmatpush1.xpose.msra.mxu0 0.0
    %2168 = vmatprep.subr.mxu0 0.0
    %2169 = vmatpush1.xpose.msra.mxu0 0.0
    %2170 = vmatprep.subr.mxu0 0.0
    %2171 = vmatpush1.xpose.msra.mxu0 0.0
    %2172 = vmatprep.subr.mxu0 0.0
    %2173 = vmatpush1.xpose.msra.mxu0 0.0
    %2174 = vmatprep.subr.mxu0 0.0
    %2175 = vmatpush1.xpose.msra.mxu0 0.0
    %2176 = vmatprep.subr.mxu0 0.0
    %2177 = vmatpush1.xpose.msra.mxu0 0.0
    %2178 = vmatprep.subr.mxu0 0.0
    %2179 = vmatpush1.xpose.msra.mxu0 0.0
    %2180 = vmatprep.subr.mxu0 0.0
    %2181 = vmatpush1.xpose.msra.mxu0 0.0
    %2182 = vmatprep.subr.mxu0 0.0
    %2183 = vmatpush1.xpose.msra.mxu0 0.0
    %2184 = vmatprep.subr.mxu0 0.0
    %2185 = vmatpush1.xpose.msra.mxu0 0.0
    %2186 = vmatprep.subr.mxu0 0.0
    %2187 = vmatpush1.xpose.msra.mxu0 0.0
    %2188 = vmatprep.subr.mxu0 0.0
    %2189 = vmatpush1.xpose.msra.mxu0 0.0
    %2190 = vmatprep.subr.mxu0 0.0
    %2191 = vmatpush1.xpose.msra.mxu0 0.0
    %2192 = vmatprep.subr.mxu0 0.0
    %2193 = vmatpush1.xpose.msra.mxu0 0.0
    %2194 = vmatprep.subr.mxu0 0.0
    %2195 = vmatpush1.xpose.msra.mxu0 0.0
    %2196 = vmatprep.subr.mxu0 0.0
    %2197 = vmatpush1.xpose.msra.mxu0 0.0
    %2198 = vmatprep.subr.mxu0 0.0
    %2199 = vmatpush1.xpose.msra.mxu0 0.0
    %2200 = vmatprep.subr.mxu0 0.0
    %2201 = vmatpush1.xpose.msra.mxu0 0.0
    %2202 = vmatprep.subr.mxu0 0.0
    %2203 = vmatpush1.xpose.msra.mxu0 0.0
    %2204 = vmatprep.mubr.f32.mxu0 0.0
    %2205 = vmatmul.mubr.f32.gmra.mrb[0].mxu0 %v2136
    %v2206 = vpop.f32.mrb[0].mxu0
    %v2207 = vadd.f32 %v2026, %v2206
    %v2208 = vpop.f32.mrb[0].mxu0
    %2209 = vdwg.mxu0
    %v2210 = vsel %vm376, %v2037, 0
    %v2212 = vsel %vm376, %v2051, 0
    %2214 = vmatprep.subr.mxu0 0.0
    %2215 = vmatpush1.xpose.msra.mxu0 %v2212
    %2216 = vmatprep.subr.mxu0 0.0
    %2217 = vmatpush1.xpose.msra.mxu0 0.0
    %2218 = vmatprep.subr.mxu0 0.0
    %2219 = vmatpush1.xpose.msra.mxu0 0.0
    %2220 = vmatprep.subr.mxu0 0.0
    %2221 = vmatpush1.xpose.msra.mxu0 0.0
    %2222 = vmatprep.subr.mxu0 0.0
    %2223 = vmatpush1.xpose.msra.mxu0 0.0
    %2224 = vmatprep.subr.mxu0 0.0
    %2225 = vmatpush1.xpose.msra.mxu0 0.0
    %2226 = vmatprep.subr.mxu0 0.0
    %2227 = vmatpush1.xpose.msra.mxu0 0.0
    %2228 = vmatprep.subr.mxu0 0.0
    %2229 = vmatpush1.xpose.msra.mxu0 0.0
    %2230 = vmatprep.subr.mxu0 0.0
    %2231 = vmatpush1.xpose.msra.mxu0 0.0
    %2232 = vmatprep.subr.mxu0 0.0
    %2233 = vmatpush1.xpose.msra.mxu0 0.0
    %2234 = vmatprep.subr.mxu0 0.0
    %2235 = vmatpush1.xpose.msra.mxu0 0.0
    %2236 = vmatprep.subr.mxu0 0.0
    %2237 = vmatpush1.xpose.msra.mxu0 0.0
    %2238 = vmatprep.subr.mxu0 0.0
    %2239 = vmatpush1.xpose.msra.mxu0 0.0
    %2240 = vmatprep.subr.mxu0 0.0
    %2241 = vmatpush1.xpose.msra.mxu0 0.0
    %2242 = vmatprep.subr.mxu0 0.0
    %2243 = vmatpush1.xpose.msra.mxu0 0.0
    %2244 = vmatprep.subr.mxu0 0.0
    %2245 = vmatpush1.xpose.msra.mxu0 0.0
    %2246 = vmatprep.subr.mxu0 0.0
    %2247 = vmatpush1.xpose.msra.mxu0 0.0
    %2248 = vmatprep.subr.mxu0 0.0
    %2249 = vmatpush1.xpose.msra.mxu0 0.0
    %2250 = vmatprep.subr.mxu0 0.0
    %2251 = vmatpush1.xpose.msra.mxu0 0.0
    %2252 = vmatprep.subr.mxu0 0.0
    %2253 = vmatpush1.xpose.msra.mxu0 0.0
    %2254 = vmatprep.subr.mxu0 0.0
    %2255 = vmatpush1.xpose.msra.mxu0 0.0
    %2256 = vmatprep.subr.mxu0 0.0
    %2257 = vmatpush1.xpose.msra.mxu0 0.0
    %2258 = vmatprep.subr.mxu0 0.0
    %2259 = vmatpush1.xpose.msra.mxu0 0.0
    %2260 = vmatprep.subr.mxu0 0.0
    %2261 = vmatpush1.xpose.msra.mxu0 0.0
    %2262 = vmatprep.subr.mxu0 0.0
    %2263 = vmatpush1.xpose.msra.mxu0 0.0
    %2264 = vmatprep.subr.mxu0 0.0
    %2265 = vmatpush1.xpose.msra.mxu0 0.0
    %2266 = vmatprep.subr.mxu0 0.0
    %2267 = vmatpush1.xpose.msra.mxu0 0.0
    %2268 = vmatprep.subr.mxu0 0.0
    %2269 = vmatpush1.xpose.msra.mxu0 0.0
    %2270 = vmatprep.subr.mxu0 0.0
    %2271 = vmatpush1.xpose.msra.mxu0 0.0
    %2272 = vmatprep.subr.mxu0 0.0
    %2273 = vmatpush1.xpose.msra.mxu0 0.0
    %2274 = vmatprep.subr.mxu0 0.0
    %2275 = vmatpush1.xpose.msra.mxu0 0.0
    %2276 = vmatprep.subr.mxu0 0.0
    %2277 = vmatpush1.xpose.msra.mxu0 0.0
    %2278 = vmatprep.mubr.f32.mxu0 0.0
    %2279 = vmatmul.mubr.f32.gmra.mrb[0].mxu0 %v2210
    %v2280 = vpop.f32.mrb[0].mxu0
    %v2281 = vadd.f32 %v2025, %v2280
    %v2282 = vpop.f32.mrb[0].mxu0
    %2283 = vdwg.mxu0
    %v2284 = vsel %vm376, %v2039, 0
    %v2286 = vsel %vm376, %v2053, 0
    %2288 = vmatprep.subr.mxu0 0.0
    %2289 = vmatpush1.xpose.msra.mxu0 %v2286
    %2290 = vmatprep.subr.mxu0 0.0
    %2291 = vmatpush1.xpose.msra.mxu0 0.0
    %2292 = vmatprep.subr.mxu0 0.0
    %2293 = vmatpush1.xpose.msra.mxu0 0.0
    %2294 = vmatprep.subr.mxu0 0.0
    %2295 = vmatpush1.xpose.msra.mxu0 0.0
    %2296 = vmatprep.subr.mxu0 0.0
    %2297 = vmatpush1.xpose.msra.mxu0 0.0
    %2298 = vmatprep.subr.mxu0 0.0
    %2299 = vmatpush1.xpose.msra.mxu0 0.0
    %2300 = vmatprep.subr.mxu0 0.0
    %2301 = vmatpush1.xpose.msra.mxu0 0.0
    %2302 = vmatprep.subr.mxu0 0.0
    %2303 = vmatpush1.xpose.msra.mxu0 0.0
    %2304 = vmatprep.subr.mxu0 0.0
    %2305 = vmatpush1.xpose.msra.mxu0 0.0
    %2306 = vmatprep.subr.mxu0 0.0
    %2307 = vmatpush1.xpose.msra.mxu0 0.0
    %2308 = vmatprep.subr.mxu0 0.0
    %2309 = vmatpush1.xpose.msra.mxu0 0.0
    %2310 = vmatprep.subr.mxu0 0.0
    %2311 = vmatpush1.xpose.msra.mxu0 0.0
    %2312 = vmatprep.subr.mxu0 0.0
    %2313 = vmatpush1.xpose.msra.mxu0 0.0
    %2314 = vmatprep.subr.mxu0 0.0
    %2315 = vmatpush1.xpose.msra.mxu0 0.0
    %2316 = vmatprep.subr.mxu0 0.0
    %2317 = vmatpush1.xpose.msra.mxu0 0.0
    %2318 = vmatprep.subr.mxu0 0.0
    %2319 = vmatpush1.xpose.msra.mxu0 0.0
    %2320 = vmatprep.subr.mxu0 0.0
    %2321 = vmatpush1.xpose.msra.mxu0 0.0
    %2322 = vmatprep.subr.mxu0 0.0
    %2323 = vmatpush1.xpose.msra.mxu0 0.0
    %2324 = vmatprep.subr.mxu0 0.0
    %2325 = vmatpush1.xpose.msra.mxu0 0.0
    %2326 = vmatprep.subr.mxu0 0.0
    %2327 = vmatpush1.xpose.msra.mxu0 0.0
    %2328 = vmatprep.subr.mxu0 0.0
    %2329 = vmatpush1.xpose.msra.mxu0 0.0
    %2330 = vmatprep.subr.mxu0 0.0
    %2331 = vmatpush1.xpose.msra.mxu0 0.0
    %2332 = vmatprep.subr.mxu0 0.0
    %2333 = vmatpush1.xpose.msra.mxu0 0.0
    %2334 = vmatprep.subr.mxu0 0.0
    %2335 = vmatpush1.xpose.msra.mxu0 0.0
    %2336 = vmatprep.subr.mxu0 0.0
    %2337 = vmatpush1.xpose.msra.mxu0 0.0
    %2338 = vmatprep.subr.mxu0 0.0
    %2339 = vmatpush1.xpose.msra.mxu0 0.0
    %2340 = vmatprep.subr.mxu0 0.0
    %2341 = vmatpush1.xpose.msra.mxu0 0.0
    %2342 = vmatprep.subr.mxu0 0.0
    %2343 = vmatpush1.xpose.msra.mxu0 0.0
    %2344 = vmatprep.subr.mxu0 0.0
    %2345 = vmatpush1.xpose.msra.mxu0 0.0
    %2346 = vmatprep.subr.mxu0 0.0
    %2347 = vmatpush1.xpose.msra.mxu0 0.0
    %2348 = vmatprep.subr.mxu0 0.0
    %2349 = vmatpush1.xpose.msra.mxu0 0.0
    %2350 = vmatprep.subr.mxu0 0.0
    %2351 = vmatpush1.xpose.msra.mxu0 0.0
    %2352 = vmatprep.mubr.f32.mxu0 0.0
    %2353 = vmatmul.mubr.f32.gmra.mrb[0].mxu0 %v2284
    %v2354 = vpop.f32.mrb[0].mxu0
    %v2355 = vadd.f32 %v2026, %v2354
    %v2356 = vpop.f32.mrb[0].mxu0
    %2357 = vdwg.mxu0
    %v2358 = vsel %vm376, %v2041, 0
    %v2360 = vsel %vm376, %v2055, 0
    %2362 = vmatprep.subr.mxu0 0.0
    %2363 = vmatpush1.xpose.msra.mxu0 %v2360
    %2364 = vmatprep.subr.mxu0 0.0
    %2365 = vmatpush1.xpose.msra.mxu0 0.0
    %2366 = vmatprep.subr.mxu0 0.0
    %2367 = vmatpush1.xpose.msra.mxu0 0.0
    %2368 = vmatprep.subr.mxu0 0.0
    %2369 = vmatpush1.xpose.msra.mxu0 0.0
    %2370 = vmatprep.subr.mxu0 0.0
    %2371 = vmatpush1.xpose.msra.mxu0 0.0
    %2372 = vmatprep.subr.mxu0 0.0
    %2373 = vmatpush1.xpose.msra.mxu0 0.0
    %2374 = vmatprep.subr.mxu0 0.0
    %2375 = vmatpush1.xpose.msra.mxu0 0.0
    %2376 = vmatprep.subr.mxu0 0.0
    %2377 = vmatpush1.xpose.msra.mxu0 0.0
    %2378 = vmatprep.subr.mxu0 0.0
    %2379 = vmatpush1.xpose.msra.mxu0 0.0
    %2380 = vmatprep.subr.mxu0 0.0
    %2381 = vmatpush1.xpose.msra.mxu0 0.0
    %2382 = vmatprep.subr.mxu0 0.0
    %2383 = vmatpush1.xpose.msra.mxu0 0.0
    %2384 = vmatprep.subr.mxu0 0.0
    %2385 = vmatpush1.xpose.msra.mxu0 0.0
    %2386 = vmatprep.subr.mxu0 0.0
    %2387 = vmatpush1.xpose.msra.mxu0 0.0
    %2388 = vmatprep.subr.mxu0 0.0
    %2389 = vmatpush1.xpose.msra.mxu0 0.0
    %2390 = vmatprep.subr.mxu0 0.0
    %2391 = vmatpush1.xpose.msra.mxu0 0.0
    %2392 = vmatprep.subr.mxu0 0.0
    %2393 = vmatpush1.xpose.msra.mxu0 0.0
    %2394 = vmatprep.subr.mxu0 0.0
    %2395 = vmatpush1.xpose.msra.mxu0 0.0
    %2396 = vmatprep.subr.mxu0 0.0
    %2397 = vmatpush1.xpose.msra.mxu0 0.0
    %2398 = vmatprep.subr.mxu0 0.0
    %2399 = vmatpush1.xpose.msra.mxu0 0.0
    %2400 = vmatprep.subr.mxu0 0.0
    %2401 = vmatpush1.xpose.msra.mxu0 0.0
    %2402 = vmatprep.subr.mxu0 0.0
    %2403 = vmatpush1.xpose.msra.mxu0 0.0
    %2404 = vmatprep.subr.mxu0 0.0
    %2405 = vmatpush1.xpose.msra.mxu0 0.0
    %2406 = vmatprep.subr.mxu0 0.0
    %2407 = vmatpush1.xpose.msra.mxu0 0.0
    %2408 = vmatprep.subr.mxu0 0.0
    %2409 = vmatpush1.xpose.msra.mxu0 0.0
    %2410 = vmatprep.subr.mxu0 0.0
    %2411 = vmatpush1.xpose.msra.mxu0 0.0
    %2412 = vmatprep.subr.mxu0 0.0
    %2413 = vmatpush1.xpose.msra.mxu0 0.0
    %2414 = vmatprep.subr.mxu0 0.0
    %2415 = vmatpush1.xpose.msra.mxu0 0.0
    %2416 = vmatprep.subr.mxu0 0.0
    %2417 = vmatpush1.xpose.msra.mxu0 0.0
    %2418 = vmatprep.subr.mxu0 0.0
    %2419 = vmatpush1.xpose.msra.mxu0 0.0
    %2420 = vmatprep.subr.mxu0 0.0
    %2421 = vmatpush1.xpose.msra.mxu0 0.0
    %2422 = vmatprep.subr.mxu0 0.0
    %2423 = vmatpush1.xpose.msra.mxu0 0.0
    %2424 = vmatprep.subr.mxu0 0.0
    %2425 = vmatpush1.xpose.msra.mxu0 0.0
    %2426 = vmatprep.mubr.f32.mxu0 0.0
    %2427 = vmatmul.mubr.f32.gmra.mrb[0].mxu0 %v2358
    %v2428 = vpop.f32.mrb[0].mxu0
    %v2429 = vadd.f32 %v2025, %v2428
    %v2430 = vpop.f32.mrb[0].mxu0
    %2431 = vdwg.mxu0
    %v2432 = vsel %vm376, %v2043, 0
    %v2434 = vsel %vm376, %v2057, 0
    %2436 = vmatprep.subr.mxu0 0.0
    %2437 = vmatpush1.xpose.msra.mxu0 %v2434
    %2438 = vmatprep.subr.mxu0 0.0
    %2439 = vmatpush1.xpose.msra.mxu0 0.0
    %2440 = vmatprep.subr.mxu0 0.0
    %2441 = vmatpush1.xpose.msra.mxu0 0.0
    %2442 = vmatprep.subr.mxu0 0.0
    %2443 = vmatpush1.xpose.msra.mxu0 0.0
    %2444 = vmatprep.subr.mxu0 0.0
    %2445 = vmatpush1.xpose.msra.mxu0 0.0
    %2446 = vmatprep.subr.mxu0 0.0
    %2447 = vmatpush1.xpose.msra.mxu0 0.0
    %2448 = vmatprep.subr.mxu0 0.0
    %2449 = vmatpush1.xpose.msra.mxu0 0.0
    %2450 = vmatprep.subr.mxu0 0.0
    %2451 = vmatpush1.xpose.msra.mxu0 0.0
    %2452 = vmatprep.subr.mxu0 0.0
    %2453 = vmatpush1.xpose.msra.mxu0 0.0
    %2454 = vmatprep.subr.mxu0 0.0
    %2455 = vmatpush1.xpose.msra.mxu0 0.0
    %2456 = vmatprep.subr.mxu0 0.0
    %2457 = vmatpush1.xpose.msra.mxu0 0.0
    %2458 = vmatprep.subr.mxu0 0.0
    %2459 = vmatpush1.xpose.msra.mxu0 0.0
    %2460 = vmatprep.subr.mxu0 0.0
    %2461 = vmatpush1.xpose.msra.mxu0 0.0
    %2462 = vmatprep.subr.mxu0 0.0
    %2463 = vmatpush1.xpose.msra.mxu0 0.0
    %2464 = vmatprep.subr.mxu0 0.0
    %2465 = vmatpush1.xpose.msra.mxu0 0.0
    %2466 = vmatprep.subr.mxu0 0.0
    %2467 = vmatpush1.xpose.msra.mxu0 0.0
    %2468 = vmatprep.subr.mxu0 0.0
    %2469 = vmatpush1.xpose.msra.mxu0 0.0
    %2470 = vmatprep.subr.mxu0 0.0
    %2471 = vmatpush1.xpose.msra.mxu0 0.0
    %2472 = vmatprep.subr.mxu0 0.0
    %2473 = vmatpush1.xpose.msra.mxu0 0.0
    %2474 = vmatprep.subr.mxu0 0.0
    %2475 = vmatpush1.xpose.msra.mxu0 0.0
    %2476 = vmatprep.subr.mxu0 0.0
    %2477 = vmatpush1.xpose.msra.mxu0 0.0
    %2478 = vmatprep.subr.mxu0 0.0
    %2479 = vmatpush1.xpose.msra.mxu0 0.0
    %2480 = vmatprep.subr.mxu0 0.0
    %2481 = vmatpush1.xpose.msra.mxu0 0.0
    %2482 = vmatprep.subr.mxu0 0.0
    %2483 = vmatpush1.xpose.msra.mxu0 0.0
    %2484 = vmatprep.subr.mxu0 0.0
    %2485 = vmatpush1.xpose.msra.mxu0 0.0
    %2486 = vmatprep.subr.mxu0 0.0
    %2487 = vmatpush1.xpose.msra.mxu0 0.0
    %2488 = vmatprep.subr.mxu0 0.0
    %2489 = vmatpush1.xpose.msra.mxu0 0.0
    %2490 = vmatprep.subr.mxu0 0.0
    %2491 = vmatpush1.xpose.msra.mxu0 0.0
    %2492 = vmatprep.subr.mxu0 0.0
    %2493 = vmatpush1.xpose.msra.mxu0 0.0
    %2494 = vmatprep.subr.mxu0 0.0
    %2495 = vmatpush1.xpose.msra.mxu0 0.0
    %2496 = vmatprep.subr.mxu0 0.0
    %2497 = vmatpush1.xpose.msra.mxu0 0.0
    %2498 = vmatprep.subr.mxu0 0.0
    %2499 = vmatpush1.xpose.msra.mxu0 0.0
    %2500 = vmatprep.mubr.f32.mxu0 0.0
    %2501 = vmatmul.mubr.f32.gmra.mrb[0].mxu0 %v2432
    %v2502 = vpop.f32.mrb[0].mxu0
    %v2503 = vadd.f32 %v2026, %v2502
    %v2504 = vpop.f32.mrb[0].mxu0
    %2505 = vdwg.mxu0
    %v2506 = vsel %vm376, %v2045, 0
    %v2508 = vsel %vm376, %v2059, 0
    %2510 = vmatprep.subr.mxu0 0.0
    %2511 = vmatpush1.xpose.msra.mxu0 %v2508
    %2512 = vmatprep.subr.mxu0 0.0
    %2513 = vmatpush1.xpose.msra.mxu0 0.0
    %2514 = vmatprep.subr.mxu0 0.0
    %2515 = vmatpush1.xpose.msra.mxu0 0.0
    %2516 = vmatprep.subr.mxu0 0.0
    %2517 = vmatpush1.xpose.msra.mxu0 0.0
    %2518 = vmatprep.subr.mxu0 0.0
    %2519 = vmatpush1.xpose.msra.mxu0 0.0
    %2520 = vmatprep.subr.mxu0 0.0
    %2521 = vmatpush1.xpose.msra.mxu0 0.0
    %2522 = vmatprep.subr.mxu0 0.0
    %2523 = vmatpush1.xpose.msra.mxu0 0.0
    %2524 = vmatprep.subr.mxu0 0.0
    %2525 = vmatpush1.xpose.msra.mxu0 0.0
    %2526 = vmatprep.subr.mxu0 0.0
    %2527 = vmatpush1.xpose.msra.mxu0 0.0
    %2528 = vmatprep.subr.mxu0 0.0
    %2529 = vmatpush1.xpose.msra.mxu0 0.0
    %2530 = vmatprep.subr.mxu0 0.0
    %2531 = vmatpush1.xpose.msra.mxu0 0.0
    %2532 = vmatprep.subr.mxu0 0.0
    %2533 = vmatpush1.xpose.msra.mxu0 0.0
    %2534 = vmatprep.subr.mxu0 0.0
    %2535 = vmatpush1.xpose.msra.mxu0 0.0
    %2536 = vmatprep.subr.mxu0 0.0
    %2537 = vmatpush1.xpose.msra.mxu0 0.0
    %2538 = vmatprep.subr.mxu0 0.0
    %2539 = vmatpush1.xpose.msra.mxu0 0.0
    %2540 = vmatprep.subr.mxu0 0.0
    %2541 = vmatpush1.xpose.msra.mxu0 0.0
    %2542 = vmatprep.subr.mxu0 0.0
    %2543 = vmatpush1.xpose.msra.mxu0 0.0
    %2544 = vmatprep.subr.mxu0 0.0
    %2545 = vmatpush1.xpose.msra.mxu0 0.0
    %2546 = vmatprep.subr.mxu0 0.0
    %2547 = vmatpush1.xpose.msra.mxu0 0.0
    %2548 = vmatprep.subr.mxu0 0.0
    %2549 = vmatpush1.xpose.msra.mxu0 0.0
    %2550 = vmatprep.subr.mxu0 0.0
    %2551 = vmatpush1.xpose.msra.mxu0 0.0
    %2552 = vmatprep.subr.mxu0 0.0
    %2553 = vmatpush1.xpose.msra.mxu0 0.0
    %2554 = vmatprep.subr.mxu0 0.0
    %2555 = vmatpush1.xpose.msra.mxu0 0.0
    %2556 = vmatprep.subr.mxu0 0.0
    %2557 = vmatpush1.xpose.msra.mxu0 0.0
    %2558 = vmatprep.subr.mxu0 0.0
    %2559 = vmatpush1.xpose.msra.mxu0 0.0
    %2560 = vmatprep.subr.mxu0 0.0
    %2561 = vmatpush1.xpose.msra.mxu0 0.0
    %2562 = vmatprep.subr.mxu0 0.0
    %2563 = vmatpush1.xpose.msra.mxu0 0.0
    %2564 = vmatprep.subr.mxu0 0.0
    %2565 = vmatpush1.xpose.msra.mxu0 0.0
    %2566 = vmatprep.subr.mxu0 0.0
    %2567 = vmatpush1.xpose.msra.mxu0 0.0
    %2568 = vmatprep.subr.mxu0 0.0
    %2569 = vmatpush1.xpose.msra.mxu0 0.0
    %2570 = vmatprep.subr.mxu0 0.0
    %2571 = vmatpush1.xpose.msra.mxu0 0.0
    %2572 = vmatprep.subr.mxu0 0.0
    %2573 = vmatpush1.xpose.msra.mxu0 0.0
    %2574 = vmatprep.mubr.f32.mxu0 0.0
    %2575 = vmatmul.mubr.f32.gmra.mrb[0].mxu0 %v2506
    %v2576 = vpop.f32.mrb[0].mxu0
    %v2577 = vadd.f32 %v2025, %v2576
    %v2578 = vpop.f32.mrb[0].mxu0
    %2579 = vdwg.mxu0
    %v2580 = vsel %vm376, %v2047, 0
    %v2582 = vsel %vm376, %v2061, 0
    %2584 = vmatprep.subr.mxu0 0.0
    %2585 = vmatpush1.xpose.msra.mxu0 %v2582
    %2586 = vmatprep.subr.mxu0 0.0
    %2587 = vmatpush1.xpose.msra.mxu0 0.0
    %2588 = vmatprep.subr.mxu0 0.0
    %2589 = vmatpush1.xpose.msra.mxu0 0.0
    %2590 = vmatprep.subr.mxu0 0.0
    %2591 = vmatpush1.xpose.msra.mxu0 0.0
    %2592 = vmatprep.subr.mxu0 0.0
    %2593 = vmatpush1.xpose.msra.mxu0 0.0
    %2594 = vmatprep.subr.mxu0 0.0
    %2595 = vmatpush1.xpose.msra.mxu0 0.0
    %2596 = vmatprep.subr.mxu0 0.0
    %2597 = vmatpush1.xpose.msra.mxu0 0.0
    %2598 = vmatprep.subr.mxu0 0.0
    %2599 = vmatpush1.xpose.msra.mxu0 0.0
    %2600 = vmatprep.subr.mxu0 0.0
    %2601 = vmatpush1.xpose.msra.mxu0 0.0
    %2602 = vmatprep.subr.mxu0 0.0
    %2603 = vmatpush1.xpose.msra.mxu0 0.0
    %2604 = vmatprep.subr.mxu0 0.0
    %2605 = vmatpush1.xpose.msra.mxu0 0.0
    %2606 = vmatprep.subr.mxu0 0.0
    %2607 = vmatpush1.xpose.msra.mxu0 0.0
    %2608 = vmatprep.subr.mxu0 0.0
    %2609 = vmatpush1.xpose.msra.mxu0 0.0
    %2610 = vmatprep.subr.mxu0 0.0
    %2611 = vmatpush1.xpose.msra.mxu0 0.0
    %2612 = vmatprep.subr.mxu0 0.0
    %2613 = vmatpush1.xpose.msra.mxu0 0.0
    %2614 = vmatprep.subr.mxu0 0.0
    %2615 = vmatpush1.xpose.msra.mxu0 0.0
    %2616 = vmatprep.subr.mxu0 0.0
    %2617 = vmatpush1.xpose.msra.mxu0 0.0
    %2618 = vmatprep.subr.mxu0 0.0
    %2619 = vmatpush1.xpose.msra.mxu0 0.0
    %2620 = vmatprep.subr.mxu0 0.0
    %2621 = vmatpush1.xpose.msra.mxu0 0.0
    %2622 = vmatprep.subr.mxu0 0.0
    %2623 = vmatpush1.xpose.msra.mxu0 0.0
    %2624 = vmatprep.subr.mxu0 0.0
    %2625 = vmatpush1.xpose.msra.mxu0 0.0
    %2626 = vmatprep.subr.mxu0 0.0
    %2627 = vmatpush1.xpose.msra.mxu0 0.0
    %2628 = vmatprep.subr.mxu0 0.0
    %2629 = vmatpush1.xpose.msra.mxu0 0.0
    %2630 = vmatprep.subr.mxu0 0.0
    %2631 = vmatpush1.xpose.msra.mxu0 0.0
    %2632 = vmatprep.subr.mxu0 0.0
    %2633 = vmatpush1.xpose.msra.mxu0 0.0
    %2634 = vmatprep.subr.mxu0 0.0
    %2635 = vmatpush1.xpose.msra.mxu0 0.0
    %2636 = vmatprep.subr.mxu0 0.0
    %2637 = vmatpush1.xpose.msra.mxu0 0.0
    %2638 = vmatprep.subr.mxu0 0.0
    %2639 = vmatpush1.xpose.msra.mxu0 0.0
    %2640 = vmatprep.subr.mxu0 0.0
    %2641 = vmatpush1.xpose.msra.mxu0 0.0
    %2642 = vmatprep.subr.mxu0 0.0
    %2643 = vmatpush1.xpose.msra.mxu0 0.0
    %2644 = vmatprep.subr.mxu0 0.0
    %2645 = vmatpush1.xpose.msra.mxu0 0.0
    %2646 = vmatprep.subr.mxu0 0.0
    %2647 = vmatpush1.xpose.msra.mxu0 0.0
    %2648 = vmatprep.mubr.f32.mxu0 0.0
    %2649 = vmatmul.mubr.f32.gmra.mrb[0].mxu0 %v2580
    %v2650 = vpop.f32.mrb[0].mxu0
    %v2651 = vadd.f32 %v2026, %v2650
    %v2652 = vpop.f32.mrb[0].mxu0
    %2653 = vdwg.mxu0
    %v2654 = vsel %vm376, %v2133, -inf
    %2655 = vmax.xlane.f32.xlu0 %v2654
    %v2656 = vpop.xlane.xlu0 %2655
    %v2657 = vsel %vm376, %v2207, -inf
    %2658 = vmax.xlane.f32.xlu0 %v2657
    %v2659 = vpop.xlane.xlu0 %2658
    %v2660 = vsel %vm376, %v2281, -inf
    %2661 = vmax.xlane.f32.xlu0 %v2660
    %v2662 = vpop.xlane.xlu0 %2661
    %v2663 = vsel %vm376, %v2355, -inf
    %2664 = vmax.xlane.f32.xlu0 %v2663
    %v2665 = vpop.xlane.xlu0 %2664
    %v2666 = vsel %vm376, %v2429, -inf
    %2667 = vmax.xlane.f32.xlu0 %v2666
    %v2668 = vpop.xlane.xlu0 %2667
    %v2669 = vsel %vm376, %v2503, -inf
    %2670 = vmax.xlane.f32.xlu0 %v2669
    %v2671 = vpop.xlane.xlu0 %2670
    %v2672 = vsel %vm376, %v2577, -inf
    %2673 = vmax.xlane.f32.xlu0 %v2672
    %v2674 = vpop.xlane.xlu0 %2673
    %v2675 = vsel %vm376, %v2651, -inf
    %2676 = vmax.xlane.f32.xlu0 %v2675
    %v2677 = vpop.xlane.xlu0 %2676
    %v2678 = vsub.f32 %v2133, %v2656
    %v2679 = vsub.f32 %v2207, %v2659
    %v2680 = vsub.f32 %v2281, %v2662
    %v2681 = vsub.f32 %v2355, %v2665
    %v2682 = vsub.f32 %v2429, %v2668
    %v2683 = vsub.f32 %v2503, %v2671
    %v2684 = vsub.f32 %v2577, %v2674
    %v2685 = vsub.f32 %v2651, %v2677
    %v2686 = vmul.f32 %v2678, 1.442695
    %v2687 = vpow.pop %v2686
    %v2688 = vmul.f32 %v2679, 1.442695
    %v2689 = vpow.pop %v2688
    %v2690 = vmul.f32 %v2680, 1.442695
    %v2691 = vpow.pop %v2690
    %v2692 = vmul.f32 %v2681, 1.442695
    %v2693 = vpow.pop %v2692
    %v2694 = vmul.f32 %v2682, 1.442695
    %v2695 = vpow.pop %v2694
    %v2696 = vmul.f32 %v2683, 1.442695
    %v2697 = vpow.pop %v2696
    %v2698 = vmul.f32 %v2684, 1.442695
    %v2699 = vpow.pop %v2698
    %v2700 = vmul.f32 %v2685, 1.442695
    %v2701 = vpow.pop %v2700
    %v2702 = vsel %vm376, %v2687, 0.0
    %2703 = vadd.xlane.f32.xlu0 %v2702
    %v2704 = vpop.xlane.xlu0 %2703
    %v2705 = vsel %vm376, %v2689, 0.0
    %2706 = vadd.xlane.f32.xlu0 %v2705
    %v2707 = vpop.xlane.xlu0 %2706
    %v2708 = vsel %vm376, %v2691, 0.0
    %2709 = vadd.xlane.f32.xlu0 %v2708
    %v2710 = vpop.xlane.xlu0 %2709
    %v2711 = vsel %vm376, %v2693, 0.0
    %2712 = vadd.xlane.f32.xlu0 %v2711
    %v2713 = vpop.xlane.xlu0 %2712
    %v2714 = vsel %vm376, %v2695, 0.0
    %2715 = vadd.xlane.f32.xlu0 %v2714
    %v2716 = vpop.xlane.xlu0 %2715
    %v2717 = vsel %vm376, %v2697, 0.0
    %2718 = vadd.xlane.f32.xlu0 %v2717
    %v2719 = vpop.xlane.xlu0 %2718
    %v2720 = vsel %vm376, %v2699, 0.0
    %2721 = vadd.xlane.f32.xlu0 %v2720
    %v2722 = vpop.xlane.xlu0 %2721
    %v2723 = vsel %vm376, %v2701, 0.0
    %2724 = vadd.xlane.f32.xlu0 %v2723
    %v2725 = vpop.xlane.xlu0 %2724
    %v2726 = vrcp.pop %v2704
    %v2727 = vrcp.pop %v2707
    %v2728 = vrcp.pop %v2710
    %v2729 = vrcp.pop %v2713
    %v2730 = vrcp.pop %v2716
    %v2731 = vrcp.pop %v2719
    %v2732 = vrcp.pop %v2722
    %v2733 = vrcp.pop %v2725
    %v2734 = vmul.f32 %v2687, %v2726
    %v2735 = vmul.f32 %v2689, %v2727
    %v2736 = vmul.f32 %v2691, %v2728
    %v2737 = vmul.f32 %v2693, %v2729
    %v2738 = vmul.f32 %v2695, %v2730
    %v2739 = vmul.f32 %v2697, %v2731
    %v2740 = vmul.f32 %v2699, %v2732
    %v2741 = vmul.f32 %v2701, %v2733
    %2742 = vrot.lane.b32.xlu0 %v2017, 96
    %v2743 = vpop.permute.xlu0 %2742
    %v2746 = vsel %vm376, %v2734, 0
    %2748 = vmatprep.subr.mxu0 0.0
    %2749 = vmatpush1.msra.mxu0 %v2743
    %2750 = vmatprep.subr.mxu0 0.0
    %2751 = vmatpush1.msra.mxu0 0.0
    %2752 = vmatprep.subr.mxu0 0.0
    %2753 = vmatpush1.msra.mxu0 0.0
    %2754 = vmatprep.subr.mxu0 0.0
    %2755 = vmatpush1.msra.mxu0 0.0
    %2756 = vmatprep.subr.mxu0 0.0
    %2757 = vmatpush1.msra.mxu0 0.0
    %2758 = vmatprep.subr.mxu0 0.0
    %2759 = vmatpush1.msra.mxu0 0.0
    %2760 = vmatprep.subr.mxu0 0.0
    %2761 = vmatpush1.msra.mxu0 0.0
    %2762 = vmatprep.subr.mxu0 0.0
    %2763 = vmatpush1.msra.mxu0 0.0
    %2764 = vmatprep.subr.mxu0 0.0
    %2765 = vmatpush1.msra.mxu0 0.0
    %2766 = vmatprep.subr.mxu0 0.0
    %2767 = vmatpush1.msra.mxu0 0.0
    %2768 = vmatprep.subr.mxu0 0.0
    %2769 = vmatpush1.msra.mxu0 0.0
    %2770 = vmatprep.subr.mxu0 0.0
    %2771 = vmatpush1.msra.mxu0 0.0
    %2772 = vmatprep.subr.mxu0 0.0
    %2773 = vmatpush1.msra.mxu0 0.0
    %2774 = vmatprep.subr.mxu0 0.0
    %2775 = vmatpush1.msra.mxu0 0.0
    %2776 = vmatprep.subr.mxu0 0.0
    %2777 = vmatpush1.msra.mxu0 0.0
    %2778 = vmatprep.subr.mxu0 0.0
    %2779 = vmatpush1.msra.mxu0 0.0
    %2780 = vmatprep.subr.mxu0 0.0
    %2781 = vmatpush1.msra.mxu0 0.0
    %2782 = vmatprep.subr.mxu0 0.0
    %2783 = vmatpush1.msra.mxu0 0.0
    %2784 = vmatprep.subr.mxu0 0.0
    %2785 = vmatpush1.msra.mxu0 0.0
    %2786 = vmatprep.subr.mxu0 0.0
    %2787 = vmatpush1.msra.mxu0 0.0
    %2788 = vmatprep.subr.mxu0 0.0
    %2789 = vmatpush1.msra.mxu0 0.0
    %2790 = vmatprep.subr.mxu0 0.0
    %2791 = vmatpush1.msra.mxu0 0.0
    %2792 = vmatprep.subr.mxu0 0.0
    %2793 = vmatpush1.msra.mxu0 0.0
    %2794 = vmatprep.subr.mxu0 0.0
    %2795 = vmatpush1.msra.mxu0 0.0
    %2796 = vmatprep.subr.mxu0 0.0
    %2797 = vmatpush1.msra.mxu0 0.0
    %2798 = vmatprep.subr.mxu0 0.0
    %2799 = vmatpush1.msra.mxu0 0.0
    %2800 = vmatprep.subr.mxu0 0.0
    %2801 = vmatpush1.msra.mxu0 0.0
    %2802 = vmatprep.subr.mxu0 0.0
    %2803 = vmatpush1.msra.mxu0 0.0
    %2804 = vmatprep.subr.mxu0 0.0
    %2805 = vmatpush1.msra.mxu0 0.0
    %2806 = vmatprep.subr.mxu0 0.0
    %2807 = vmatpush1.msra.mxu0 0.0
    %2808 = vmatprep.subr.mxu0 0.0
    %2809 = vmatpush1.msra.mxu0 0.0
    %2810 = vmatprep.subr.mxu0 0.0
    %2811 = vmatpush1.msra.mxu0 0.0
    %2812 = vmatprep.mubr.f32.mxu0 0.0
    %2813 = vmatmul.mubr.f32.gmra.mrb[0].mxu0 %v2746
    %v2814 = vpop.f32.mrb[0].mxu0
    %v2815 = vadd.f32 0.0, %v2814
    %v2816 = vpop.f32.mrb[0].mxu0
    %2817 = vdwg.mxu0
    %2818 = vrot.lane.b32.xlu0 %v2022, 96
    %v2819 = vpop.permute.xlu0 %2818
    %v2822 = vsel %vm376, %v2735, 0
    %2824 = vmatprep.subr.mxu0 0.0
    %2825 = vmatpush1.msra.mxu0 %v2819
    %2826 = vmatprep.subr.mxu0 0.0
    %2827 = vmatpush1.msra.mxu0 0.0
    %2828 = vmatprep.subr.mxu0 0.0
    %2829 = vmatpush1.msra.mxu0 0.0
    %2830 = vmatprep.subr.mxu0 0.0
    %2831 = vmatpush1.msra.mxu0 0.0
    %2832 = vmatprep.subr.mxu0 0.0
    %2833 = vmatpush1.msra.mxu0 0.0
    %2834 = vmatprep.subr.mxu0 0.0
    %2835 = vmatpush1.msra.mxu0 0.0
    %2836 = vmatprep.subr.mxu0 0.0
    %2837 = vmatpush1.msra.mxu0 0.0
    %2838 = vmatprep.subr.mxu0 0.0
    %2839 = vmatpush1.msra.mxu0 0.0
    %2840 = vmatprep.subr.mxu0 0.0
    %2841 = vmatpush1.msra.mxu0 0.0
    %2842 = vmatprep.subr.mxu0 0.0
    %2843 = vmatpush1.msra.mxu0 0.0
    %2844 = vmatprep.subr.mxu0 0.0
    %2845 = vmatpush1.msra.mxu0 0.0
    %2846 = vmatprep.subr.mxu0 0.0
    %2847 = vmatpush1.msra.mxu0 0.0
    %2848 = vmatprep.subr.mxu0 0.0
    %2849 = vmatpush1.msra.mxu0 0.0
    %2850 = vmatprep.subr.mxu0 0.0
    %2851 = vmatpush1.msra.mxu0 0.0
    %2852 = vmatprep.subr.mxu0 0.0
    %2853 = vmatpush1.msra.mxu0 0.0
    %2854 = vmatprep.subr.mxu0 0.0
    %2855 = vmatpush1.msra.mxu0 0.0
    %2856 = vmatprep.subr.mxu0 0.0
    %2857 = vmatpush1.msra.mxu0 0.0
    %2858 = vmatprep.subr.mxu0 0.0
    %2859 = vmatpush1.msra.mxu0 0.0
    %2860 = vmatprep.subr.mxu0 0.0
    %2861 = vmatpush1.msra.mxu0 0.0
    %2862 = vmatprep.subr.mxu0 0.0
    %2863 = vmatpush1.msra.mxu0 0.0
    %2864 = vmatprep.subr.mxu0 0.0
    %2865 = vmatpush1.msra.mxu0 0.0
    %2866 = vmatprep.subr.mxu0 0.0
    %2867 = vmatpush1.msra.mxu0 0.0
    %2868 = vmatprep.subr.mxu0 0.0
    %2869 = vmatpush1.msra.mxu0 0.0
    %2870 = vmatprep.subr.mxu0 0.0
    %2871 = vmatpush1.msra.mxu0 0.0
    %2872 = vmatprep.subr.mxu0 0.0
    %2873 = vmatpush1.msra.mxu0 0.0
    %2874 = vmatprep.subr.mxu0 0.0
    %2875 = vmatpush1.msra.mxu0 0.0
    %2876 = vmatprep.subr.mxu0 0.0
    %2877 = vmatpush1.msra.mxu0 0.0
    %2878 = vmatprep.subr.mxu0 0.0
    %2879 = vmatpush1.msra.mxu0 0.0
    %2880 = vmatprep.subr.mxu0 0.0
    %2881 = vmatpush1.msra.mxu0 0.0
    %2882 = vmatprep.subr.mxu0 0.0
    %2883 = vmatpush1.msra.mxu0 0.0
    %2884 = vmatprep.subr.mxu0 0.0
    %2885 = vmatpush1.msra.mxu0 0.0
    %2886 = vmatprep.subr.mxu0 0.0
    %2887 = vmatpush1.msra.mxu0 0.0
    %2888 = vmatprep.mubr.f32.mxu0 0.0
    %2889 = vmatmul.mubr.f32.gmra.mrb[0].mxu0 %v2822
    %v2890 = vpop.f32.mrb[0].mxu0
    %v2891 = vadd.f32 0.0, %v2890
    %v2892 = vpop.f32.mrb[0].mxu0
    %2893 = vdwg.mxu0
    %2894 = vrot.lane.b32.xlu0 %v2051, 96
    %v2895 = vpop.permute.xlu0 %2894
    %v2898 = vsel %vm376, %v2736, 0
    %2900 = vmatprep.subr.mxu0 0.0
    %2901 = vmatpush1.msra.mxu0 %v2895
    %2902 = vmatprep.subr.mxu0 0.0
    %2903 = vmatpush1.msra.mxu0 0.0
    %2904 = vmatprep.subr.mxu0 0.0
    %2905 = vmatpush1.msra.mxu0 0.0
    %2906 = vmatprep.subr.mxu0 0.0
    %2907 = vmatpush1.msra.mxu0 0.0
    %2908 = vmatprep.subr.mxu0 0.0
    %2909 = vmatpush1.msra.mxu0 0.0
    %2910 = vmatprep.subr.mxu0 0.0
    %2911 = vmatpush1.msra.mxu0 0.0
    %2912 = vmatprep.subr.mxu0 0.0
    %2913 = vmatpush1.msra.mxu0 0.0
    %2914 = vmatprep.subr.mxu0 0.0
    %2915 = vmatpush1.msra.mxu0 0.0
    %2916 = vmatprep.subr.mxu0 0.0
    %2917 = vmatpush1.msra.mxu0 0.0
    %2918 = vmatprep.subr.mxu0 0.0
    %2919 = vmatpush1.msra.mxu0 0.0
    %2920 = vmatprep.subr.mxu0 0.0
    %2921 = vmatpush1.msra.mxu0 0.0
    %2922 = vmatprep.subr.mxu0 0.0
    %2923 = vmatpush1.msra.mxu0 0.0
    %2924 = vmatprep.subr.mxu0 0.0
    %2925 = vmatpush1.msra.mxu0 0.0
    %2926 = vmatprep.subr.mxu0 0.0
    %2927 = vmatpush1.msra.mxu0 0.0
    %2928 = vmatprep.subr.mxu0 0.0
    %2929 = vmatpush1.msra.mxu0 0.0
    %2930 = vmatprep.subr.mxu0 0.0
    %2931 = vmatpush1.msra.mxu0 0.0
    %2932 = vmatprep.subr.mxu0 0.0
    %2933 = vmatpush1.msra.mxu0 0.0
    %2934 = vmatprep.subr.mxu0 0.0
    %2935 = vmatpush1.msra.mxu0 0.0
    %2936 = vmatprep.subr.mxu0 0.0
    %2937 = vmatpush1.msra.mxu0 0.0
    %2938 = vmatprep.subr.mxu0 0.0
    %2939 = vmatpush1.msra.mxu0 0.0
    %2940 = vmatprep.subr.mxu0 0.0
    %2941 = vmatpush1.msra.mxu0 0.0
    %2942 = vmatprep.subr.mxu0 0.0
    %2943 = vmatpush1.msra.mxu0 0.0
    %2944 = vmatprep.subr.mxu0 0.0
    %2945 = vmatpush1.msra.mxu0 0.0
    %2946 = vmatprep.subr.mxu0 0.0
    %2947 = vmatpush1.msra.mxu0 0.0
    %2948 = vmatprep.subr.mxu0 0.0
    %2949 = vmatpush1.msra.mxu0 0.0
    %2950 = vmatprep.subr.mxu0 0.0
    %2951 = vmatpush1.msra.mxu0 0.0
    %2952 = vmatprep.subr.mxu0 0.0
    %2953 = vmatpush1.msra.mxu0 0.0
    %2954 = vmatprep.subr.mxu0 0.0
    %2955 = vmatpush1.msra.mxu0 0.0
    %2956 = vmatprep.subr.mxu0 0.0
    %2957 = vmatpush1.msra.mxu0 0.0
    %2958 = vmatprep.subr.mxu0 0.0
    %2959 = vmatpush1.msra.mxu0 0.0
    %2960 = vmatprep.subr.mxu0 0.0
    %2961 = vmatpush1.msra.mxu0 0.0
    %2962 = vmatprep.subr.mxu0 0.0
    %2963 = vmatpush1.msra.mxu0 0.0
    %2964 = vmatprep.mubr.f32.mxu0 0.0
    %2965 = vmatmul.mubr.f32.gmra.mrb[0].mxu0 %v2898
    %v2966 = vpop.f32.mrb[0].mxu0
    %v2967 = vadd.f32 0.0, %v2966
    %v2968 = vpop.f32.mrb[0].mxu0
    %2969 = vdwg.mxu0
    %2970 = vrot.lane.b32.xlu0 %v2053, 96
    %v2971 = vpop.permute.xlu0 %2970
    %v2974 = vsel %vm376, %v2737, 0
    %2976 = vmatprep.subr.mxu0 0.0
    %2977 = vmatpush1.msra.mxu0 %v2971
    %2978 = vmatprep.subr.mxu0 0.0
    %2979 = vmatpush1.msra.mxu0 0.0
    %2980 = vmatprep.subr.mxu0 0.0
    %2981 = vmatpush1.msra.mxu0 0.0
    %2982 = vmatprep.subr.mxu0 0.0
    %2983 = vmatpush1.msra.mxu0 0.0
    %2984 = vmatprep.subr.mxu0 0.0
    %2985 = vmatpush1.msra.mxu0 0.0
    %2986 = vmatprep.subr.mxu0 0.0
    %2987 = vmatpush1.msra.mxu0 0.0
    %2988 = vmatprep.subr.mxu0 0.0
    %2989 = vmatpush1.msra.mxu0 0.0
    %2990 = vmatprep.subr.mxu0 0.0
    %2991 = vmatpush1.msra.mxu0 0.0
    %2992 = vmatprep.subr.mxu0 0.0
    %2993 = vmatpush1.msra.mxu0 0.0
    %2994 = vmatprep.subr.mxu0 0.0
    %2995 = vmatpush1.msra.mxu0 0.0
    %2996 = vmatprep.subr.mxu0 0.0
    %2997 = vmatpush1.msra.mxu0 0.0
    %2998 = vmatprep.subr.mxu0 0.0
    %2999 = vmatpush1.msra.mxu0 0.0
    %3000 = vmatprep.subr.mxu0 0.0
    %3001 = vmatpush1.msra.mxu0 0.0
    %3002 = vmatprep.subr.mxu0 0.0
    %3003 = vmatpush1.msra.mxu0 0.0
    %3004 = vmatprep.subr.mxu0 0.0
    %3005 = vmatpush1.msra.mxu0 0.0
    %3006 = vmatprep.subr.mxu0 0.0
    %3007 = vmatpush1.msra.mxu0 0.0
    %3008 = vmatprep.subr.mxu0 0.0
    %3009 = vmatpush1.msra.mxu0 0.0
    %3010 = vmatprep.subr.mxu0 0.0
    %3011 = vmatpush1.msra.mxu0 0.0
    %3012 = vmatprep.subr.mxu0 0.0
    %3013 = vmatpush1.msra.mxu0 0.0
    %3014 = vmatprep.subr.mxu0 0.0
    %3015 = vmatpush1.msra.mxu0 0.0
    %3016 = vmatprep.subr.mxu0 0.0
    %3017 = vmatpush1.msra.mxu0 0.0
    %3018 = vmatprep.subr.mxu0 0.0
    %3019 = vmatpush1.msra.mxu0 0.0
    %3020 = vmatprep.subr.mxu0 0.0
    %3021 = vmatpush1.msra.mxu0 0.0
    %3022 = vmatprep.subr.mxu0 0.0
    %3023 = vmatpush1.msra.mxu0 0.0
    %3024 = vmatprep.subr.mxu0 0.0
    %3025 = vmatpush1.msra.mxu0 0.0
    %3026 = vmatprep.subr.mxu0 0.0
    %3027 = vmatpush1.msra.mxu0 0.0
    %3028 = vmatprep.subr.mxu0 0.0
    %3029 = vmatpush1.msra.mxu0 0.0
    %3030 = vmatprep.subr.mxu0 0.0
    %3031 = vmatpush1.msra.mxu0 0.0
    %3032 = vmatprep.subr.mxu0 0.0
    %3033 = vmatpush1.msra.mxu0 0.0
    %3034 = vmatprep.subr.mxu0 0.0
    %3035 = vmatpush1.msra.mxu0 0.0
    %3036 = vmatprep.subr.mxu0 0.0
    %3037 = vmatpush1.msra.mxu0 0.0
    %3038 = vmatprep.subr.mxu0 0.0
    %3039 = vmatpush1.msra.mxu0 0.0
    %3040 = vmatprep.mubr.f32.mxu0 0.0
    %3041 = vmatmul.mubr.f32.gmra.mrb[0].mxu0 %v2974
    %v3042 = vpop.f32.mrb[0].mxu0
    %v3043 = vadd.f32 0.0, %v3042
    %v3044 = vpop.f32.mrb[0].mxu0
    %3045 = vdwg.mxu0
    %3046 = vrot.lane.b32.xlu0 %v2055, 96
    %v3047 = vpop.permute.xlu0 %3046
    %v3050 = vsel %vm376, %v2738, 0
    %3052 = vmatprep.subr.mxu0 0.0
    %3053 = vmatpush1.msra.mxu0 %v3047
    %3054 = vmatprep.subr.mxu0 0.0
    %3055 = vmatpush1.msra.mxu0 0.0
    %3056 = vmatprep.subr.mxu0 0.0
    %3057 = vmatpush1.msra.mxu0 0.0
    %3058 = vmatprep.subr.mxu0 0.0
    %3059 = vmatpush1.msra.mxu0 0.0
    %3060 = vmatprep.subr.mxu0 0.0
    %3061 = vmatpush1.msra.mxu0 0.0
    %3062 = vmatprep.subr.mxu0 0.0
    %3063 = vmatpush1.msra.mxu0 0.0
    %3064 = vmatprep.subr.mxu0 0.0
    %3065 = vmatpush1.msra.mxu0 0.0
    %3066 = vmatprep.subr.mxu0 0.0
    %3067 = vmatpush1.msra.mxu0 0.0
    %3068 = vmatprep.subr.mxu0 0.0
    %3069 = vmatpush1.msra.mxu0 0.0
    %3070 = vmatprep.subr.mxu0 0.0
    %3071 = vmatpush1.msra.mxu0 0.0
    %3072 = vmatprep.subr.mxu0 0.0
    %3073 = vmatpush1.msra.mxu0 0.0
    %3074 = vmatprep.subr.mxu0 0.0
    %3075 = vmatpush1.msra.mxu0 0.0
    %3076 = vmatprep.subr.mxu0 0.0
    %3077 = vmatpush1.msra.mxu0 0.0
    %3078 = vmatprep.subr.mxu0 0.0
    %3079 = vmatpush1.msra.mxu0 0.0
    %3080 = vmatprep.subr.mxu0 0.0
    %3081 = vmatpush1.msra.mxu0 0.0
    %3082 = vmatprep.subr.mxu0 0.0
    %3083 = vmatpush1.msra.mxu0 0.0
    %3084 = vmatprep.subr.mxu0 0.0
    %3085 = vmatpush1.msra.mxu0 0.0
    %3086 = vmatprep.subr.mxu0 0.0
    %3087 = vmatpush1.msra.mxu0 0.0
    %3088 = vmatprep.subr.mxu0 0.0
    %3089 = vmatpush1.msra.mxu0 0.0
    %3090 = vmatprep.subr.mxu0 0.0
    %3091 = vmatpush1.msra.mxu0 0.0
    %3092 = vmatprep.subr.mxu0 0.0
    %3093 = vmatpush1.msra.mxu0 0.0
    %3094 = vmatprep.subr.mxu0 0.0
    %3095 = vmatpush1.msra.mxu0 0.0
    %3096 = vmatprep.subr.mxu0 0.0
    %3097 = vmatpush1.msra.mxu0 0.0
    %3098 = vmatprep.subr.mxu0 0.0
    %3099 = vmatpush1.msra.mxu0 0.0
    %3100 = vmatprep.subr.mxu0 0.0
    %3101 = vmatpush1.msra.mxu0 0.0
    %3102 = vmatprep.subr.mxu0 0.0
    %3103 = vmatpush1.msra.mxu0 0.0
    %3104 = vmatprep.subr.mxu0 0.0
    %3105 = vmatpush1.msra.mxu0 0.0
    %3106 = vmatprep.subr.mxu0 0.0
    %3107 = vmatpush1.msra.mxu0 0.0
    %3108 = vmatprep.subr.mxu0 0.0
    %3109 = vmatpush1.msra.mxu0 0.0
    %3110 = vmatprep.subr.mxu0 0.0
    %3111 = vmatpush1.msra.mxu0 0.0
    %3112 = vmatprep.subr.mxu0 0.0
    %3113 = vmatpush1.msra.mxu0 0.0
    %3114 = vmatprep.subr.mxu0 0.0
    %3115 = vmatpush1.msra.mxu0 0.0
    %3116 = vmatprep.mubr.f32.mxu0 0.0
    %3117 = vmatmul.mubr.f32.gmra.mrb[0].mxu0 %v3050
    %v3118 = vpop.f32.mrb[0].mxu0
    %v3119 = vadd.f32 0.0, %v3118
    %v3120 = vpop.f32.mrb[0].mxu0
    %3121 = vdwg.mxu0
    %3122 = vrot.lane.b32.xlu0 %v2057, 96
    %v3123 = vpop.permute.xlu0 %3122
    %v3126 = vsel %vm376, %v2739, 0
    %3128 = vmatprep.subr.mxu0 0.0
    %3129 = vmatpush1.msra.mxu0 %v3123
    %3130 = vmatprep.subr.mxu0 0.0
    %3131 = vmatpush1.msra.mxu0 0.0
    %3132 = vmatprep.subr.mxu0 0.0
    %3133 = vmatpush1.msra.mxu0 0.0
    %3134 = vmatprep.subr.mxu0 0.0
    %3135 = vmatpush1.msra.mxu0 0.0
    %3136 = vmatprep.subr.mxu0 0.0
    %3137 = vmatpush1.msra.mxu0 0.0
    %3138 = vmatprep.subr.mxu0 0.0
    %3139 = vmatpush1.msra.mxu0 0.0
    %3140 = vmatprep.subr.mxu0 0.0
    %3141 = vmatpush1.msra.mxu0 0.0
    %3142 = vmatprep.subr.mxu0 0.0
    %3143 = vmatpush1.msra.mxu0 0.0
    %3144 = vmatprep.subr.mxu0 0.0
    %3145 = vmatpush1.msra.mxu0 0.0
    %3146 = vmatprep.subr.mxu0 0.0
    %3147 = vmatpush1.msra.mxu0 0.0
    %3148 = vmatprep.subr.mxu0 0.0
    %3149 = vmatpush1.msra.mxu0 0.0
    %3150 = vmatprep.subr.mxu0 0.0
    %3151 = vmatpush1.msra.mxu0 0.0
    %3152 = vmatprep.subr.mxu0 0.0
    %3153 = vmatpush1.msra.mxu0 0.0
    %3154 = vmatprep.subr.mxu0 0.0
    %3155 = vmatpush1.msra.mxu0 0.0
    %3156 = vmatprep.subr.mxu0 0.0
    %3157 = vmatpush1.msra.mxu0 0.0
    %3158 = vmatprep.subr.mxu0 0.0
    %3159 = vmatpush1.msra.mxu0 0.0
    %3160 = vmatprep.subr.mxu0 0.0
    %3161 = vmatpush1.msra.mxu0 0.0
    %3162 = vmatprep.subr.mxu0 0.0
    %3163 = vmatpush1.msra.mxu0 0.0
    %3164 = vmatprep.subr.mxu0 0.0
    %3165 = vmatpush1.msra.mxu0 0.0
    %3166 = vmatprep.subr.mxu0 0.0
    %3167 = vmatpush1.msra.mxu0 0.0
    %3168 = vmatprep.subr.mxu0 0.0
    %3169 = vmatpush1.msra.mxu0 0.0
    %3170 = vmatprep.subr.mxu0 0.0
    %3171 = vmatpush1.msra.mxu0 0.0
    %3172 = vmatprep.subr.mxu0 0.0
    %3173 = vmatpush1.msra.mxu0 0.0
    %3174 = vmatprep.subr.mxu0 0.0
    %3175 = vmatpush1.msra.mxu0 0.0
    %3176 = vmatprep.subr.mxu0 0.0
    %3177 = vmatpush1.msra.mxu0 0.0
    %3178 = vmatprep.subr.mxu0 0.0
    %3179 = vmatpush1.msra.mxu0 0.0
    %3180 = vmatprep.subr.mxu0 0.0
    %3181 = vmatpush1.msra.mxu0 0.0
    %3182 = vmatprep.subr.mxu0 0.0
    %3183 = vmatpush1.msra.mxu0 0.0
    %3184 = vmatprep.subr.mxu0 0.0
    %3185 = vmatpush1.msra.mxu0 0.0
    %3186 = vmatprep.subr.mxu0 0.0
    %3187 = vmatpush1.msra.mxu0 0.0
    %3188 = vmatprep.subr.mxu0 0.0
    %3189 = vmatpush1.msra.mxu0 0.0
    %3190 = vmatprep.subr.mxu0 0.0
    %3191 = vmatpush1.msra.mxu0 0.0
    %3192 = vmatprep.mubr.f32.mxu0 0.0
    %3193 = vmatmul.mubr.f32.gmra.mrb[0].mxu0 %v3126
    %v3194 = vpop.f32.mrb[0].mxu0
    %v3195 = vadd.f32 0.0, %v3194
    %v3196 = vpop.f32.mrb[0].mxu0
    %3197 = vdwg.mxu0
    %3198 = vrot.lane.b32.xlu0 %v2059, 96
    %v3199 = vpop.permute.xlu0 %3198
    %v3202 = vsel %vm376, %v2740, 0
    %3204 = vmatprep.subr.mxu0 0.0
    %3205 = vmatpush1.msra.mxu0 %v3199
    %3206 = vmatprep.subr.mxu0 0.0
    %3207 = vmatpush1.msra.mxu0 0.0
    %3208 = vmatprep.subr.mxu0 0.0
    %3209 = vmatpush1.msra.mxu0 0.0
    %3210 = vmatprep.subr.mxu0 0.0
    %3211 = vmatpush1.msra.mxu0 0.0
    %3212 = vmatprep.subr.mxu0 0.0
    %3213 = vmatpush1.msra.mxu0 0.0
    %3214 = vmatprep.subr.mxu0 0.0
    %3215 = vmatpush1.msra.mxu0 0.0
    %3216 = vmatprep.subr.mxu0 0.0
    %3217 = vmatpush1.msra.mxu0 0.0
    %3218 = vmatprep.subr.mxu0 0.0
    %3219 = vmatpush1.msra.mxu0 0.0
    %3220 = vmatprep.subr.mxu0 0.0
    %3221 = vmatpush1.msra.mxu0 0.0
    %3222 = vmatprep.subr.mxu0 0.0
    %3223 = vmatpush1.msra.mxu0 0.0
    %3224 = vmatprep.subr.mxu0 0.0
    %3225 = vmatpush1.msra.mxu0 0.0
    %3226 = vmatprep.subr.mxu0 0.0
    %3227 = vmatpush1.msra.mxu0 0.0
    %3228 = vmatprep.subr.mxu0 0.0
    %3229 = vmatpush1.msra.mxu0 0.0
    %3230 = vmatprep.subr.mxu0 0.0
    %3231 = vmatpush1.msra.mxu0 0.0
    %3232 = vmatprep.subr.mxu0 0.0
    %3233 = vmatpush1.msra.mxu0 0.0
    %3234 = vmatprep.subr.mxu0 0.0
    %3235 = vmatpush1.msra.mxu0 0.0
    %3236 = vmatprep.subr.mxu0 0.0
    %3237 = vmatpush1.msra.mxu0 0.0
    %3238 = vmatprep.subr.mxu0 0.0
    %3239 = vmatpush1.msra.mxu0 0.0
    %3240 = vmatprep.subr.mxu0 0.0
    %3241 = vmatpush1.msra.mxu0 0.0
    %3242 = vmatprep.subr.mxu0 0.0
    %3243 = vmatpush1.msra.mxu0 0.0
    %3244 = vmatprep.subr.mxu0 0.0
    %3245 = vmatpush1.msra.mxu0 0.0
    %3246 = vmatprep.subr.mxu0 0.0
    %3247 = vmatpush1.msra.mxu0 0.0
    %3248 = vmatprep.subr.mxu0 0.0
    %3249 = vmatpush1.msra.mxu0 0.0
    %3250 = vmatprep.subr.mxu0 0.0
    %3251 = vmatpush1.msra.mxu0 0.0
    %3252 = vmatprep.subr.mxu0 0.0
    %3253 = vmatpush1.msra.mxu0 0.0
    %3254 = vmatprep.subr.mxu0 0.0
    %3255 = vmatpush1.msra.mxu0 0.0
    %3256 = vmatprep.subr.mxu0 0.0
    %3257 = vmatpush1.msra.mxu0 0.0
    %3258 = vmatprep.subr.mxu0 0.0
    %3259 = vmatpush1.msra.mxu0 0.0
    %3260 = vmatprep.subr.mxu0 0.0
    %3261 = vmatpush1.msra.mxu0 0.0
    %3262 = vmatprep.subr.mxu0 0.0
    %3263 = vmatpush1.msra.mxu0 0.0
    %3264 = vmatprep.subr.mxu0 0.0
    %3265 = vmatpush1.msra.mxu0 0.0
    %3266 = vmatprep.subr.mxu0 0.0
    %3267 = vmatpush1.msra.mxu0 0.0
    %3268 = vmatprep.mubr.f32.mxu0 0.0
    %3269 = vmatmul.mubr.f32.gmra.mrb[0].mxu0 %v3202
    %v3270 = vpop.f32.mrb[0].mxu0
    %v3271 = vadd.f32 0.0, %v3270
    %v3272 = vpop.f32.mrb[0].mxu0
    %3273 = vdwg.mxu0
    %3274 = vrot.lane.b32.xlu0 %v2061, 96
    %v3275 = vpop.permute.xlu0 %3274
    %v3278 = vsel %vm376, %v2741, 0
    %3280 = vmatprep.subr.mxu0 0.0
    %3281 = vmatpush1.msra.mxu0 %v3275
    %3282 = vmatprep.subr.mxu0 0.0
    %3283 = vmatpush1.msra.mxu0 0.0
    %3284 = vmatprep.subr.mxu0 0.0
    %3285 = vmatpush1.msra.mxu0 0.0
    %3286 = vmatprep.subr.mxu0 0.0
    %3287 = vmatpush1.msra.mxu0 0.0
    %3288 = vmatprep.subr.mxu0 0.0
    %3289 = vmatpush1.msra.mxu0 0.0
    %3290 = vmatprep.subr.mxu0 0.0
    %3291 = vmatpush1.msra.mxu0 0.0
    %3292 = vmatprep.subr.mxu0 0.0
    %3293 = vmatpush1.msra.mxu0 0.0
    %3294 = vmatprep.subr.mxu0 0.0
    %3295 = vmatpush1.msra.mxu0 0.0
    %3296 = vmatprep.subr.mxu0 0.0
    %3297 = vmatpush1.msra.mxu0 0.0
    %3298 = vmatprep.subr.mxu0 0.0
    %3299 = vmatpush1.msra.mxu0 0.0
    %3300 = vmatprep.subr.mxu0 0.0
    %3301 = vmatpush1.msra.mxu0 0.0
    %3302 = vmatprep.subr.mxu0 0.0
    %3303 = vmatpush1.msra.mxu0 0.0
    %3304 = vmatprep.subr.mxu0 0.0
    %3305 = vmatpush1.msra.mxu0 0.0
    %3306 = vmatprep.subr.mxu0 0.0
    %3307 = vmatpush1.msra.mxu0 0.0
    %3308 = vmatprep.subr.mxu0 0.0
    %3309 = vmatpush1.msra.mxu0 0.0
    %3310 = vmatprep.subr.mxu0 0.0
    %3311 = vmatpush1.msra.mxu0 0.0
    %3312 = vmatprep.subr.mxu0 0.0
    %3313 = vmatpush1.msra.mxu0 0.0
    %3314 = vmatprep.subr.mxu0 0.0
    %3315 = vmatpush1.msra.mxu0 0.0
    %3316 = vmatprep.subr.mxu0 0.0
    %3317 = vmatpush1.msra.mxu0 0.0
    %3318 = vmatprep.subr.mxu0 0.0
    %3319 = vmatpush1.msra.mxu0 0.0
    %3320 = vmatprep.subr.mxu0 0.0
    %3321 = vmatpush1.msra.mxu0 0.0
    %3322 = vmatprep.subr.mxu0 0.0
    %3323 = vmatpush1.msra.mxu0 0.0
    %3324 = vmatprep.subr.mxu0 0.0
    %3325 = vmatpush1.msra.mxu0 0.0
    %3326 = vmatprep.subr.mxu0 0.0
    %3327 = vmatpush1.msra.mxu0 0.0
    %3328 = vmatprep.subr.mxu0 0.0
    %3329 = vmatpush1.msra.mxu0 0.0
    %3330 = vmatprep.subr.mxu0 0.0
    %3331 = vmatpush1.msra.mxu0 0.0
    %3332 = vmatprep.subr.mxu0 0.0
    %3333 = vmatpush1.msra.mxu0 0.0
    %3334 = vmatprep.subr.mxu0 0.0
    %3335 = vmatpush1.msra.mxu0 0.0
    %3336 = vmatprep.subr.mxu0 0.0
    %3337 = vmatpush1.msra.mxu0 0.0
    %3338 = vmatprep.subr.mxu0 0.0
    %3339 = vmatpush1.msra.mxu0 0.0
    %3340 = vmatprep.subr.mxu0 0.0
    %3341 = vmatpush1.msra.mxu0 0.0
    %3342 = vmatprep.subr.mxu0 0.0
    %3343 = vmatpush1.msra.mxu0 0.0
    %3344 = vmatprep.mubr.f32.mxu0 0.0
    %3345 = vmatmul.mubr.f32.gmra.mrb[0].mxu0 %v3278
    %v3346 = vpop.f32.mrb[0].mxu0
    %v3347 = vadd.f32 0.0, %v3346
    %v3348 = vpop.f32.mrb[0].mxu0
    %3349 = vdwg.mxu0
    %3352 = vrot.lane.b32.xlu0 %v2967, 8
    %v3353 = vpop.permute.xlu0 %3352
    %3354 = vrot.lane.b32.xlu0 %v3043, 8
    %v3355 = vpop.permute.xlu0 %3354
    %3360 = vrot.lane.b32.xlu0 %v3119, 16
    %v3361 = vpop.permute.xlu0 %3360
    %3362 = vrot.lane.b32.xlu0 %v3195, 16
    %v3363 = vpop.permute.xlu0 %3362
    %3368 = vrot.lane.b32.xlu0 %v3271, 24
    %v3369 = vpop.permute.xlu0 %3368
    %3370 = vrot.lane.b32.xlu0 %v3347, 24
    %v3371 = vpop.permute.xlu0 %3370
    %v3374 = vsel %vm376, %v2815, %v3353
    %v3375 = vsel %vm376, %v2891, %v3355
    %v3376 = vsel %vm1705, %v3374, %v3361
    %v3377 = vsel %vm1705, %v3375, %v3363
    %v3378 = vsel %vm1708, %v3376, %v3369
    %v3379 = vsel %vm1708, %v3377, %v3371
    %v3381 = vlaneseq
    %v3382 = vshrl.u32 %v3381, 7
    %v3383 = vsub.s32 0, %v3382
    %v3384 = vrot.slane %v2031, %v3383
    %v3387 = vsel %vm255, %v3378, 0
    %v3390 = vsel %vm255, %v3379, 0
    %3392 = vmatprep.subr.mxu0 0.0
    %3393 = vmatpush1.msra.mxu0 %v2027
    %3394 = vmatprep.subr.mxu0 0.0
    %3395 = vmatpush1.msra.mxu0 %v2028
    %3396 = vmatprep.subr.mxu0 0.0
    %3397 = vmatpush1.msra.mxu0 %v2029
    %3398 = vmatprep.subr.mxu0 0.0
    %3399 = vmatpush1.msra.mxu0 %v2030
    %3400 = vmatprep.subr.mxu0 0.0
    %3401 = vmatpush1.msra.mxu0 0.0
    %3402 = vmatprep.subr.mxu0 0.0
    %3403 = vmatpush1.msra.mxu0 0.0
    %3404 = vmatprep.subr.mxu0 0.0
    %3405 = vmatpush1.msra.mxu0 0.0
    %3406 = vmatprep.subr.mxu0 0.0
    %3407 = vmatpush1.msra.mxu0 0.0
    %3408 = vmatprep.subr.mxu0 0.0
    %3409 = vmatpush1.msra.mxu0 0.0
    %3410 = vmatprep.subr.mxu0 0.0
    %3411 = vmatpush1.msra.mxu0 0.0
    %3412 = vmatprep.subr.mxu0 0.0
    %3413 = vmatpush1.msra.mxu0 0.0
    %3414 = vmatprep.subr.mxu0 0.0
    %3415 = vmatpush1.msra.mxu0 0.0
    %3416 = vmatprep.subr.mxu0 0.0
    %3417 = vmatpush1.msra.mxu0 0.0
    %3418 = vmatprep.subr.mxu0 0.0
    %3419 = vmatpush1.msra.mxu0 0.0
    %3420 = vmatprep.subr.mxu0 0.0
    %3421 = vmatpush1.msra.mxu0 0.0
    %3422 = vmatprep.subr.mxu0 0.0
    %3423 = vmatpush1.msra.mxu0 0.0
    %3424 = vmatprep.subr.mxu0 0.0
    %3425 = vmatpush1.msra.mxu0 0.0
    %3426 = vmatprep.subr.mxu0 0.0
    %3427 = vmatpush1.msra.mxu0 0.0
    %3428 = vmatprep.subr.mxu0 0.0
    %3429 = vmatpush1.msra.mxu0 0.0
    %3430 = vmatprep.subr.mxu0 0.0
    %3431 = vmatpush1.msra.mxu0 0.0
    %3432 = vmatprep.subr.mxu0 0.0
    %3433 = vmatpush1.msra.mxu0 0.0
    %3434 = vmatprep.subr.mxu0 0.0
    %3435 = vmatpush1.msra.mxu0 0.0
    %3436 = vmatprep.subr.mxu0 0.0
    %3437 = vmatpush1.msra.mxu0 0.0
    %3438 = vmatprep.subr.mxu0 0.0
    %3439 = vmatpush1.msra.mxu0 0.0
    %3440 = vmatprep.subr.mxu0 0.0
    %3441 = vmatpush1.msra.mxu0 0.0
    %3442 = vmatprep.subr.mxu0 0.0
    %3443 = vmatpush1.msra.mxu0 0.0
    %3444 = vmatprep.subr.mxu0 0.0
    %3445 = vmatpush1.msra.mxu0 0.0
    %3446 = vmatprep.subr.mxu0 0.0
    %3447 = vmatpush1.msra.mxu0 0.0
    %3448 = vmatprep.subr.mxu0 0.0
    %3449 = vmatpush1.msra.mxu0 0.0
    %3450 = vmatprep.subr.mxu0 0.0
    %3451 = vmatpush1.msra.mxu0 0.0
    %3452 = vmatprep.subr.mxu0 0.0
    %3453 = vmatpush1.msra.mxu0 0.0
    %3454 = vmatprep.subr.mxu0 0.0
    %3455 = vmatpush1.msra.mxu0 0.0
    %3456 = vmatprep.mubr.f32.mxu0 0.0
    %3457 = vmatmul.mubr.f32.gmra.mrb[0].mxu0 %v3387
    %v3458 = vpop.f32.mrb[0].mxu0
    %v3459 = vadd.f32 %v3384, %v3458
    %v3460 = vpop.f32.mrb[0].mxu0
    %3461 = vmatprep.mubr.f32.mxu0 0.0
    %3462 = vmatmul.mubr.f32.gmra.mrb[0].mxu0 %v3390
    %v3463 = vpop.f32.mrb[0].mxu0
    %v3464 = vadd.f32 %v3384, %v3463
    %v3465 = vpop.f32.mrb[0].mxu0
    %3466 = vdwg.mxu0
    %v3467 = vadd.f32 %v1839, %v3459
    %v3468 = vadd.f32 %v1840, %v3464
    %v3469 = vld [vmem:[#allocation19 + $0x1] sm:$0x1]
    %v3470 = vld [vmem:[#allocation20 + $0x1] sm:$0x1]
    %v3471 = vsel %vm255, %v3467, 0.0
    %3472 = vadd.xlane.f32.xlu0 %v3471
    %v3473 = vpop.xlane.xlu0 %3472
    %v3474 = vsel %vm255, %v3468, 0.0
    %3475 = vadd.xlane.f32.xlu0 %v3474
    %v3476 = vpop.xlane.xlu0 %3475
    %v3477 = vmul.f32 %v3473, %v1808
    %v3478 = vmul.f32 %v3476, %v1808
    %v3479 = vsub.f32 %v3467, %v3477
    %v3480 = vsub.f32 %v3468, %v3478
    %v3481 = vmul.f32 %v3479, %v3479
    %v3482 = vmul.f32 %v3480, %v3480
    %v3483 = vsel %vm255, %v3481, 0.0
    %3484 = vadd.xlane.f32.xlu0 %v3483
    %v3485 = vpop.xlane.xlu0 %3484
    %v3486 = vsel %vm255, %v3482, 0.0
    %3487 = vadd.xlane.f32.xlu0 %v3486
    %v3488 = vpop.xlane.xlu0 %3487
    %v3489 = vmul.f32 %v3485, %v1808
    %v3490 = vmul.f32 %v3488, %v1808
    %v3491 = vadd.f32 %v3489, 1e-06
    %v3492 = vadd.f32 %v3490, 1e-06
    %v3493 = vrsqrt.pop %v3491
    %v3494 = vrsqrt.pop %v3492
    %v3495 = vmul.f32 %v3479, %v3493
    %v3496 = vmul.f32 %v3480, %v3494
    %v3497 = vlaneseq
    %v3498 = vshrl.u32 %v3497, 7
    %v3499 = vsub.s32 0, %v3498
    %v3500 = vrot.slane %v3469, %v3499
    %v3501 = vmul.f32 %v3495, %v3500
    %v3502 = vmul.f32 %v3496, %v3500
    %v3503 = vlaneseq
    %v3504 = vshrl.u32 %v3503, 7
    %v3505 = vsub.s32 0, %v3504
    %v3506 = vrot.slane %v3470, %v3505
    %v3507 = vadd.f32 %v3501, %v3506
    %v3508 = vadd.f32 %v3502, %v3506
    %v3509 = vld [vmem:[#allocation22] sm:$0xff]
    %v3510 = vld [vmem:[#allocation22 + $0x8] sm:$0xff]
    %v3511 = vld [vmem:[#allocation22 + $0x10] sm:$0xff]
    %v3512 = vld [vmem:[#allocation22 + $0x18] sm:$0xff]
    %v3513 = vld [vmem:[#allocation23] sm:$0x1]
    %v3515 = vlaneseq
    %v3516 = vshrl.u32 %v3515, 7
    %v3517 = vsub.s32 0, %v3516
    %v3518 = vrot.slane %v3513, %v3517
    %v3521 = vsel %vm255, %v3507, 0
    %v3524 = vsel %vm255, %v3508, 0
    %3526 = vmatprep.subr.mxu0 0.0
    %3527 = vmatpush1.msra.mxu0 %v3509
    %3528 = vmatprep.subr.mxu0 0.0
    %3529 = vmatpush1.msra.mxu0 %v3510
    %3530 = vmatprep.subr.mxu0 0.0
    %3531 = vmatpush1.msra.mxu0 %v3511
    %3532 = vmatprep.subr.mxu0 0.0
    %3533 = vmatpush1.msra.mxu0 %v3512
    %3534 = vmatprep.subr.mxu0 0.0
    %3535 = vmatpush1.msra.mxu0 0.0
    %3536 = vmatprep.subr.mxu0 0.0
    %3537 = vmatpush1.msra.mxu0 0.0
    %3538 = vmatprep.subr.mxu0 0.0
    %3539 = vmatpush1.msra.mxu0 0.0
    %3540 = vmatprep.subr.mxu0 0.0
    %3541 = vmatpush1.msra.mxu0 0.0
    %3542 = vmatprep.subr.mxu0 0.0
    %3543 = vmatpush1.msra.mxu0 0.0
    %3544 = vmatprep.subr.mxu0 0.0
    %3545 = vmatpush1.msra.mxu0 0.0
    %3546 = vmatprep.subr.mxu0 0.0
    %3547 = vmatpush1.msra.mxu0 0.0
    %3548 = vmatprep.subr.mxu0 0.0
    %3549 = vmatpush1.msra.mxu0 0.0
    %3550 = vmatprep.subr.mxu0 0.0
    %3551 = vmatpush1.msra.mxu0 0.0
    %3552 = vmatprep.subr.mxu0 0.0
    %3553 = vmatpush1.msra.mxu0 0.0
    %3554 = vmatprep.subr.mxu0 0.0
    %3555 = vmatpush1.msra.mxu0 0.0
    %3556 = vmatprep.subr.mxu0 0.0
    %3557 = vmatpush1.msra.mxu0 0.0
    %3558 = vmatprep.subr.mxu0 0.0
    %3559 = vmatpush1.msra.mxu0 0.0
    %3560 = vmatprep.subr.mxu0 0.0
    %3561 = vmatpush1.msra.mxu0 0.0
    %3562 = vmatprep.subr.mxu0 0.0
    %3563 = vmatpush1.msra.mxu0 0.0
    %3564 = vmatprep.subr.mxu0 0.0
    %3565 = vmatpush1.msra.mxu0 0.0
    %3566 = vmatprep.subr.mxu0 0.0
    %3567 = vmatpush1.msra.mxu0 0.0
    %3568 = vmatprep.subr.mxu0 0.0
    %3569 = vmatpush1.msra.mxu0 0.0
    %3570 = vmatprep.subr.mxu0 0.0
    %3571 = vmatpush1.msra.mxu0 0.0
    %3572 = vmatprep.subr.mxu0 0.0
    %3573 = vmatpush1.msra.mxu0 0.0
    %3574 = vmatprep.subr.mxu0 0.0
    %3575 = vmatpush1.msra.mxu0 0.0
    %3576 = vmatprep.subr.mxu0 0.0
    %3577 = vmatpush1.msra.mxu0 0.0
    %3578 = vmatprep.subr.mxu0 0.0
    %3579 = vmatpush1.msra.mxu0 0.0
    %3580 = vmatprep.subr.mxu0 0.0
    %3581 = vmatpush1.msra.mxu0 0.0
    %3582 = vmatprep.subr.mxu0 0.0
    %3583 = vmatpush1.msra.mxu0 0.0
    %3584 = vmatprep.subr.mxu0 0.0
    %3585 = vmatpush1.msra.mxu0 0.0
    %3586 = vmatprep.subr.mxu0 0.0
    %3587 = vmatpush1.msra.mxu0 0.0
    %3588 = vmatprep.subr.mxu0 0.0
    %3589 = vmatpush1.msra.mxu0 0.0
    %3590 = vmatprep.mubr.f32.mxu0 0.0
    %3591 = vmatmul.mubr.f32.gmra.mrb[0].mxu0 %v3521
    %v3592 = vpop.f32.mrb[0].mxu0
    %v3593 = vadd.f32 %v3518, %v3592
    %v3594 = vpop.f32.mrb[0].mxu0
    %3595 = vmatprep.mubr.f32.mxu0 0.0
    %3596 = vmatmul.mubr.f32.gmra.mrb[0].mxu0 %v3524
    %v3597 = vpop.f32.mrb[0].mxu0
    %v3598 = vadd.f32 %v3518, %v3597
    %v3599 = vpop.f32.mrb[0].mxu0
    %3600 = vdwg.mxu0
    %v3601 = vmax.f32 %v3593, 0.0
    %v3602 = vmax.f32 %v3598, 0.0
    %v3603 = vld [vmem:[%s18] sm:$0xff]
    %v3604 = vld [vmem:[%s18 + $0x8] sm:$0xff]
    %v3605 = vld [vmem:[%s18 + $0x10] sm:$0xff]
    %v3606 = vld [vmem:[%s18 + $0x18] sm:$0xff]
    %v3607 = vld [vmem:[%s18 + $0x20] sm:$0xff]
    %v3608 = vld [vmem:[%s18 + $0x28] sm:$0xff]
    %v3609 = vld [vmem:[%s18 + $0x30] sm:$0xff]
    %v3610 = vld [vmem:[%s18 + $0x38] sm:$0xff]
    %v3611 = vld [vmem:[%s19] sm:$0x1]
    %v3613 = vlaneseq
    %v3614 = vshrl.u32 %v3613, 7
    %v3615 = vsub.s32 0, %v3614
    %v3616 = vrot.slane %v3611, %v3615
    %vm3618 = vcmask 523264
    %v3620 = vsel %vm3618, %v3601, 0
    %v3623 = vsel %vm3618, %v3602, 0
    %3625 = vmatprep.subr.mxu0 0.0
    %3626 = vmatpush1.msra.mxu0 %v3603
    %3627 = vmatprep.subr.mxu0 0.0
    %3628 = vmatpush1.msra.mxu0 %v3604
    %3629 = vmatprep.subr.mxu0 0.0
    %3630 = vmatpush1.msra.mxu0 %v3605
    %3631 = vmatprep.subr.mxu0 0.0
    %3632 = vmatpush1.msra.mxu0 %v3606
    %3633 = vmatprep.subr.mxu0 0.0
    %3634 = vmatpush1.msra.mxu0 %v3607
    %3635 = vmatprep.subr.mxu0 0.0
    %3636 = vmatpush1.msra.mxu0 %v3608
    %3637 = vmatprep.subr.mxu0 0.0
    %3638 = vmatpush1.msra.mxu0 %v3609
    %3639 = vmatprep.subr.mxu0 0.0
    %3640 = vmatpush1.msra.mxu0 %v3610
    %3641 = vmatprep.subr.mxu0 0.0
    %3642 = vmatpush1.msra.mxu0 0.0
    %3643 = vmatprep.subr.mxu0 0.0
    %3644 = vmatpush1.msra.mxu0 0.0
    %3645 = vmatprep.subr.mxu0 0.0
    %3646 = vmatpush1.msra.mxu0 0.0
    %3647 = vmatprep.subr.mxu0 0.0
    %3648 = vmatpush1.msra.mxu0 0.0
    %3649 = vmatprep.subr.mxu0 0.0
    %3650 = vmatpush1.msra.mxu0 0.0
    %3651 = vmatprep.subr.mxu0 0.0
    %3652 = vmatpush1.msra.mxu0 0.0
    %3653 = vmatprep.subr.mxu0 0.0
    %3654 = vmatpush1.msra.mxu0 0.0
    %3655 = vmatprep.subr.mxu0 0.0
    %3656 = vmatpush1.msra.mxu0 0.0
    %3657 = vmatprep.subr.mxu0 0.0
    %3658 = vmatpush1.msra.mxu0 0.0
    %3659 = vmatprep.subr.mxu0 0.0
    %3660 = vmatpush1.msra.mxu0 0.0
    %3661 = vmatprep.subr.mxu0 0.0
    %3662 = vmatpush1.msra.mxu0 0.0
    %3663 = vmatprep.subr.mxu0 0.0
    %3664 = vmatpush1.msra.mxu0 0.0
    %3665 = vmatprep.subr.mxu0 0.0
    %3666 = vmatpush1.msra.mxu0 0.0
    %3667 = vmatprep.subr.mxu0 0.0
    %3668 = vmatpush1.msra.mxu0 0.0
    %3669 = vmatprep.subr.mxu0 0.0
    %3670 = vmatpush1.msra.mxu0 0.0
    %3671 = vmatprep.subr.mxu0 0.0
    %3672 = vmatpush1.msra.mxu0 0.0
    %3673 = vmatprep.subr.mxu0 0.0
    %3674 = vmatpush1.msra.mxu0 0.0
    %3675 = vmatprep.subr.mxu0 0.0
    %3676 = vmatpush1.msra.mxu0 0.0
    %3677 = vmatprep.subr.mxu0 0.0
    %3678 = vmatpush1.msra.mxu0 0.0
    %3679 = vmatprep.subr.mxu0 0.0
    %3680 = vmatpush1.msra.mxu0 0.0
    %3681 = vmatprep.subr.mxu0 0.0
    %3682 = vmatpush1.msra.mxu0 0.0
    %3683 = vmatprep.subr.mxu0 0.0
    %3684 = vmatpush1.msra.mxu0 0.0
    %3685 = vmatprep.subr.mxu0 0.0
    %3686 = vmatpush1.msra.mxu0 0.0
    %3687 = vmatprep.subr.mxu0 0.0
    %3688 = vmatpush1.msra.mxu0 0.0
    %3689 = vmatprep.mubr.f32.mxu0 0.0
    %3690 = vmatmul.mubr.f32.gmra.mrb[0].mxu0 %v3620
    %v3691 = vpop.f32.mrb[0].mxu0
    %v3692 = vadd.f32 %v3616, %v3691
    %v3693 = vpop.f32.mrb[0].mxu0
    %3694 = vmatprep.mubr.f32.mxu0 0.0
    %3695 = vmatmul.mubr.f32.gmra.mrb[0].mxu0 %v3623
    %v3696 = vpop.f32.mrb[0].mxu0
    %v3697 = vadd.f32 %v3616, %v3696
    %v3698 = vpop.f32.mrb[0].mxu0
    %3699 = vdwg.mxu0
    %v3700 = vadd.f32 %v3507, %v3692
    %v3701 = vadd.f32 %v3508, %v3697
    %v3702 = vld [vmem:[#allocation19 + $0x2] sm:$0x1]
    %v3703 = vld [vmem:[#allocation20 + $0x2] sm:$0x1]
    %v3704 = vsel %vm255, %v3700, 0.0
    %3705 = vadd.xlane.f32.xlu0 %v3704
    %v3706 = vpop.xlane.xlu0 %3705
    %v3707 = vsel %vm255, %v3701, 0.0
    %3708 = vadd.xlane.f32.xlu0 %v3707
    %v3709 = vpop.xlane.xlu0 %3708
    %v3710 = vmul.f32 %v3706, %v1808
    %v3711 = vmul.f32 %v3709, %v1808
    %v3712 = vsub.f32 %v3700, %v3710
    %v3713 = vsub.f32 %v3701, %v3711
    %v3714 = vmul.f32 %v3712, %v3712
    %v3715 = vmul.f32 %v3713, %v3713
    %v3716 = vsel %vm255, %v3714, 0.0
    %3717 = vadd.xlane.f32.xlu0 %v3716
    %v3718 = vpop.xlane.xlu0 %3717
    %v3719 = vsel %vm255, %v3715, 0.0
    %3720 = vadd.xlane.f32.xlu0 %v3719
    %v3721 = vpop.xlane.xlu0 %3720
    %v3722 = vmul.f32 %v3718, %v1808
    %v3723 = vmul.f32 %v3721, %v1808
    %v3724 = vadd.f32 %v3722, 1e-06
    %v3725 = vadd.f32 %v3723, 1e-06
    %v3726 = vrsqrt.pop %v3724
    %v3727 = vrsqrt.pop %v3725
    %v3728 = vmul.f32 %v3712, %v3726
    %v3729 = vmul.f32 %v3713, %v3727
    %v3730 = vlaneseq
    %v3731 = vshrl.u32 %v3730, 7
    %v3732 = vsub.s32 0, %v3731
    %v3733 = vrot.slane %v3702, %v3732
    %v3734 = vmul.f32 %v3728, %v3733
    %v3735 = vmul.f32 %v3729, %v3733
    %v3736 = vlaneseq
    %v3737 = vshrl.u32 %v3736, 7
    %v3738 = vsub.s32 0, %v3737
    %v3739 = vrot.slane %v3703, %v3738
    %v3740 = vadd.f32 %v3734, %v3739
    %v3741 = vadd.f32 %v3735, %v3739
    %3742 = vst.msk [vmem:[#allocation25] sm:$0xff] %vm255, %v3740
    %3743 = vst.msk [vmem:[#allocation25 + $0x8] sm:$0xff] %vm255, %v3741
    // Predicated region
    $region138: #{tpu_custom_call.1} parent=1 // pred_check
      _
    $region139: #{tpu_custom_call.1} parent=1 // pred_check_branch
      %3745 = sbr.rel (0) target = $region141
    $region140: #{tpu_custom_call.1} parent=1 // pred_region
      %s3747 = ssub.s32 256, 256
      %3748 = vsyncadd [#allocation4], %s3747
      %s3749 = sshll.u32 [#allocation25], 4
      %s3750 = int_to_ptr.vmem [resolvable:$true] %s3749
      %3755 = dma.vmem_to_hbm [thread:$0]  %s3750, 256, %s20, [#allocation4], 128, 128, 8
    $region141: #{tpu_custom_call.1} parent=1 // pred_fallthru
      _
    // Predicated region
    $region142: #{tpu_custom_call.1} parent=1 // pred_check
      _
    $region143: #{tpu_custom_call.1} parent=1 // pred_check_branch
      %3757 = sbr.rel (0) target = $region145
    $region144: #{tpu_custom_call.1} parent=1 // pred_region
      %3758 = dma.done [#allocation4], 256
    $region145: #{tpu_custom_call.1} parent=1 // pred_fallthru
      _
    %3759 = vsyncpa [#allocation3], 1
    %3760 = vsyncpa [#allocation6], 1
    %3761 = vsyncpa [#allocation9], 1
    %3762 = vsyncpa [#allocation12], 1
    %3763 = vsyncpa [#allocation15], 1
    %3764 = vsyncpa [#allocation18], 1
    %3765 = vsyncpa [#allocation21], 1
    %3766 = vsyncpa [#allocation24], 1
    %3767 = vsyncpa [#allocation4], 1

</llo_original>
